<compile_context>
chip_gen: v6e
topology: v6e:2x2x1
jax: 0.10.0
libtpu: 0.0.40
codegen_flags: <defaults>
</compile_context>

<pallas_src>
import functools

import jax
import jax.numpy as jnp
from jax import lax
from jax.experimental import pallas as pl
from jax.experimental.pallas import tpu as pltpu


def _round_up(x, m):
    return (x + m - 1) // m * m


def _assemble_halo(xin_ref, body_ref, top_ref, bot_ref, *, th, W, Cin):
    """Assemble the (th+2, W+2, Cin) halo tile from the three pipelined input blocks.

    The body rows land in the interior; the top/bottom halo rows come from the (clamped)
    neighbour-row blocks and are zeroed at the image border; the two W-padding columns are
    zeroed every step (conv padding=1 semantics).
    """
    i = pl.program_id(1)
    n_tiles = pl.num_programs(1)
    dt = xin_ref.dtype

    # Body rows -> interior.
    xin_ref[1:th + 1, 1:W + 1, :] = body_ref[0]

    # Halo rows: neighbour row, or zeros at the image border (index_map clamped the fetch).
    top_mask = (i > 0).astype(dt)
    bot_mask = (i < n_tiles - 1).astype(dt)
    xin_ref[0:1, 1:W + 1, :] = top_ref[0] * top_mask
    xin_ref[th + 1:th + 2, 1:W + 1, :] = bot_ref[0] * bot_mask

    # W-padding columns.
    zcol = jnp.zeros((th + 2, 1, Cin), dt)
    xin_ref[:, 0:1, :] = zcol
    xin_ref[:, W + 1:W + 2, :] = zcol


def _conv_tile(xin_ref, w_ref, *, th, W, Cin):
    """3x3 conv on one halo tile: 9 shifted matmuls accumulated in f32 -> (th*W, Cout_pad).

    No im2col buffer: each tap's lhs is a static slice of the halo scratch fed straight to
    the MXU with f32 accumulation (bf16 operands).
    """
    m = th * W
    acc = None
    for dy in range(3):
        for dx in range(3):
            lhs = xin_ref[dy:dy + th, dx:dx + W, :].reshape(m, Cin)
            part = jnp.dot(lhs, w_ref[dy * 3 + dx],
                           preferred_element_type=jnp.float32)
            acc = part if acc is None else acc + part
    return acc


def _conv_stats_kernel(body_ref, top_ref, bot_ref, w_ref, stats_ref, xin_ref,
                       *, th, W, Cin):
    """Pass 1: conv per tile -> per-channel sum / sum-of-squares accumulated per image."""
    i = pl.program_id(1)
    _assemble_halo(xin_ref, body_ref, top_ref, bot_ref, th=th, W=W, Cin=Cin)
    acc = _conv_tile(xin_ref, w_ref, th=th, W=W, Cin=Cin)

    s = jnp.sum(acc, axis=0, keepdims=True)             # (1, Cout_pad)
    ss = jnp.sum(acc * acc, axis=0, keepdims=True)      # (1, Cout_pad)

    # Output block (1, 2, Cout_pad) is resident across the i ("arbitrary") axis: init at the
    # first tile of the image, accumulate, written back to HBM once per image.
    @pl.when(i == 0)
    def _():
        stats_ref[...] = jnp.zeros_like(stats_ref)

    stats_ref[:, 0:1, :] = stats_ref[:, 0:1, :] + s[None]
    stats_ref[:, 1:2, :] = stats_ref[:, 1:2, :] + ss[None]


def _conv_bn_relu_kernel(body_ref, top_ref, bot_ref, w_ref, scale_ref, shift_ref,
                         out_ref, xin_ref, *, th, W, Cin):
    """Pass 2: recompute conv per tile, fused BN scale/shift (from the wrapper) + ReLU."""
    _assemble_halo(xin_ref, body_ref, top_ref, bot_ref, th=th, W=W, Cin=Cin)
    acc = _conv_tile(xin_ref, w_ref, th=th, W=W, Cin=Cin)          # (m, Cout_pad) f32
    y = jnp.maximum(acc * scale_ref[...] + shift_ref[...], 0.0)    # BN + ReLU
    out_ref[...] = y.astype(out_ref.dtype).reshape(1, th, W, y.shape[-1])


def _vmem_limit_bytes():
    """Generation-aware scoped-VMEM limit: ~75% of physical VMEM, capped at 96 MiB.

    v5e/v6e (128 MiB) -> 96 MiB; v7x (64 MiB per TensorCore) -> 48 MiB.
    """
    try:
        cap = int(pltpu.get_tpu_info().vmem_capacity_bytes)
    except Exception:
        cap = 64 * 1024 * 1024        # conservative fallback if the query is unavailable
    return min((cap * 3) // 4, 96 * 1024 * 1024)


def _pick_block_h(H, W, Cin, Cout_pad, out_itemsize, N, vmem_budget):
    """Largest divisor of H whose per-step VMEM footprint fits `vmem_budget`.

    Footprint ~ double-buffered input/output pipeline blocks + halo scratch + resident
    weights + f32 accumulator, with channel dims padded to the 128-lane vreg width.
    """
    cin_lanes = _round_up(Cin, 128)
    best = 1
    for th in (d for d in range(1, H + 1) if H % d == 0):
        body = 2 * th * _round_up(W, 8) * cin_lanes * 2            # bf16 body block, 2 bufs
        halo = 2 * 2 * _round_up(W, 8) * cin_lanes * 2             # top+bottom halo rows
        wgt = 2 * 9 * _round_up(Cin, 16) * Cout_pad * 2            # resident weights
        outb = 2 * th * _round_up(W, 8) * Cout_pad * out_itemsize  # output block, 2 bufs
        scr = (th + 2) * _round_up(W + 2, 16) * cin_lanes * 2      # halo scratch
        accb = th * W * Cout_pad * 4                               # f32 accumulator
        if body + halo + wgt + outb + scr + accb <= vmem_budget and th > best:
            best = th
    # v7x has two TensorCores sharing the ("parallel", ...) grid: keep >= 2 grid steps so
    # both cores get work (single-core v5e/v6e are unaffected).
    while N * (H // best) < 2:
        smaller = [d for d in range(1, best) if H % d == 0]
        if not smaller:
            break
        best = max(smaller)
    return best


@functools.partial(jax.jit, static_argnames=("block_h",))
def conv3x3_bn_relu(x_nchw, weight, bias, gamma, beta, *, block_h=None):
    """x_nchw: (N, Cin, H, W); weight: (Cout, Cin, 3, 3) (PyTorch layouts). Returns NCHW."""
    del bias  # exactly cancelled by the training-mode BN batch-mean subtraction
    N, Cin, H, W = x_nchw.shape
    Cout = weight.shape[0]
    Cout_pad = _round_up(Cout, 128)           # lane-dense stores + full MXU N dim
    out_dtype = x_nchw.dtype                  # activation dtype (bf16 input -> bf16 writeback)

    vmem_limit = _vmem_limit_bytes()
    if block_h is None:
        block_h = _pick_block_h(H, W, Cin, Cout_pad,
                                jnp.dtype(out_dtype).itemsize, N, vmem_limit // 2)
    th = block_h
    assert H % th == 0
    n_tiles = H // th

    # NCHW -> NHWC (channels on lanes), bf16 operands for the MXU (f32 accumulate in-kernel).
    # NOTE: this is a deliberate precision choice; the test pre-rounds x/weight to bf16.
    x_nhwc = jnp.transpose(x_nchw, (0, 2, 3, 1)).astype(jnp.bfloat16)
    # (Cout, Cin, 3, 3) -> (3, 3, Cin, Cout) -> (9, Cin, Cout), N dim padded to Cout_pad.
    w9 = jnp.transpose(weight, (2, 3, 1, 0)).reshape(9, Cin, Cout).astype(jnp.bfloat16)
    w9 = jnp.pad(w9, ((0, 0), (0, 0), (0, Cout_pad - Cout)))

    grid = (N, n_tiles)
    # All input bytes flow through the BlockSpec pipeline (auto double-buffered):
    #   body block = th rows of the image; top/bot = one neighbour row each, border-clamped
    #   in the index_map and zeroed in-kernel at the image border.
    body_spec = pl.BlockSpec((1, th, W, Cin), lambda n, i: (n, i, 0, 0))
    top_spec = pl.BlockSpec((1, 1, W, Cin),
                            lambda n, i: (n, jnp.maximum(i * th - 1, 0), 0, 0))
    bot_spec = pl.BlockSpec((1, 1, W, Cin),
                            lambda n, i: (n, jnp.minimum(i * th + th, H - 1), 0, 0))
    w_spec = pl.BlockSpec((9, Cin, Cout_pad), lambda n, i: (0, 0, 0))
    scratch = [pltpu.VMEM((th + 2, W + 2, Cin), jnp.bfloat16)]      # halo assembly tile

    # ---- Pass 1: conv per tile -> per-image per-channel sum / sum-of-squares ----
    stats = pl.pallas_call(
        functools.partial(_conv_stats_kernel, th=th, W=W, Cin=Cin),
        out_shape=jax.ShapeDtypeStruct((N, 2, Cout_pad), jnp.float32),
        grid_spec=pltpu.PrefetchScalarGridSpec(
            num_scalar_prefetch=0, grid=grid,
            in_specs=[body_spec, top_spec, bot_spec, w_spec],
            out_specs=pl.BlockSpec((1, 2, Cout_pad), lambda n, i: (n, 0, 0)),
            scratch_shapes=scratch),
        compiler_params=pltpu.CompilerParams(
            dimension_semantics=("parallel", "arbitrary"),   # stats accumulate across i
            vmem_limit_bytes=vmem_limit),
    )(x_nhwc, x_nhwc, x_nhwc, w9)

    # Global batch statistics (biased variance, as BatchNorm2d training mode), in f32.
    count = jnp.float32(N * H * W)
    ch_sum = jnp.sum(stats[:, 0, :Cout], axis=0)
    ch_sumsq = jnp.sum(stats[:, 1, :Cout], axis=0)
    mean = ch_sum / count
    var = jnp.maximum(ch_sumsq / count - mean * mean, 0.0)
    scale_c = gamma.astype(jnp.float32) * lax.rsqrt(var + 1e-5)
    shift_c = beta.astype(jnp.float32) - mean * scale_c
    scale = jnp.zeros((1, Cout_pad), jnp.float32).at[0, :Cout].set(scale_c)
    shift = jnp.zeros((1, Cout_pad), jnp.float32).at[0, :Cout].set(shift_c)

    # ---- Pass 2: recompute conv per tile, fused (x - mean)/std * gamma + beta, ReLU ----
    out = pl.pallas_call(
        functools.partial(_conv_bn_relu_kernel, th=th, W=W, Cin=Cin),
        out_shape=jax.ShapeDtypeStruct((N, H, W, Cout_pad), out_dtype),
        grid_spec=pltpu.PrefetchScalarGridSpec(
            num_scalar_prefetch=0, grid=grid,
            in_specs=[body_spec, top_spec, bot_spec, w_spec,
                      pl.BlockSpec((1, Cout_pad), lambda n, i: (0, 0)),
                      pl.BlockSpec((1, Cout_pad), lambda n, i: (0, 0))],
            out_specs=pl.BlockSpec((1, th, W, Cout_pad), lambda n, i: (n, i, 0, 0)),
            scratch_shapes=scratch),
        compiler_params=pltpu.CompilerParams(
            dimension_semantics=("parallel", "parallel"),    # every tile is independent
            vmem_limit_bytes=vmem_limit),
    )(x_nhwc, x_nhwc, x_nhwc, w9, scale, shift)

    # Slice off the Cout padding; NHWC -> NCHW (PyTorch interface).
    out = out[..., :Cout]
    return jnp.transpose(out, (0, 3, 1, 2)).astype(x_nchw.dtype)


def reference(x_nchw, weight, bias, gamma, beta):
    """Plain-JAX reference: conv2d(pad=1, +bias) + training-mode BN + ReLU, all f32."""
    y = lax.conv_general_dilated(
        x_nchw, weight, window_strides=(1, 1), padding=((1, 1), (1, 1)),
        dimension_numbers=("NCHW", "OIHW", "NCHW"),
        precision=lax.Precision.HIGHEST,
    ) + bias[None, :, None, None]
    mean = jnp.mean(y, axis=(0, 2, 3), keepdims=True)
    var = jnp.mean((y - mean) ** 2, axis=(0, 2, 3), keepdims=True)
    y = (y - mean) * lax.rsqrt(var + 1e-5)
    y = y * gamma[None, :, None, None] + beta[None, :, None, None]
    return jnp.maximum(y, 0.0)


if __name__ == "__main__":
    key = jax.random.PRNGKey(0)
    N, Cin, Cout, H, W = 2, 4, 8, 16, 16
    kx, kw, kb, kg, kbe = jax.random.split(key, 5)

    # Round x / weight through bf16 so the f32 reference and the bf16-operand kernel (which
    # accumulates in f32 on the MXU) see identical operands.
    x = jax.random.normal(kx, (N, Cin, H, W), jnp.float32)
    x = x.astype(jnp.bfloat16).astype(jnp.float32)

    # Kaiming-normal(mode='fan_out', relu): std = sqrt(2 / fan_out).
    fan_out = Cout * 3 * 3
    weight = jax.random.normal(kw, (Cout, Cin, 3, 3), jnp.float32) * jnp.sqrt(2.0 / fan_out)
    weight = weight.astype(jnp.bfloat16).astype(jnp.float32)

    # Non-zero conv bias: training-mode BN cancels it exactly, so the kernel (which drops it)
    # must still match the reference (which applies it).  Non-trivial gamma/beta as well.
    bias = jax.random.normal(kb, (Cout,), jnp.float32) * 0.1
    gamma = 1.0 + 0.1 * jax.random.normal(kg, (Cout,), jnp.float32)
    beta = 0.1 * jax.random.normal(kbe, (Cout,), jnp.float32)

    ref = reference(x, weight, bias, gamma, beta)

    # block_h=8 -> 2 row tiles per image (exercises the cross-tile halo-row path);
    # block_h=None -> auto (VMEM-budget) tile, 1 tile per image here.
    for bh in (8, None):
        out = jax.block_until_ready(
            conv3x3_bn_relu(x, weight, bias, gamma, beta, block_h=bh))
        assert out.shape == (N, Cout, H, W)
        err = float(jnp.max(jnp.abs(out - ref)))
        assert jnp.allclose(out, ref, atol=1e-3, rtol=1e-3), f"max abs err {err} (block_h={bh})"

    print("KERNEL_OK")
</pallas_src>

<mosaic_0001>
module attributes {stable_mosaic.version = 11 : i64} {
  func.func @_conv_stats_kernel(%arg0: i32, %arg1: i32, %arg2: memref<1x8x16x4xbf16, #tpu.memory_space<vmem>>, %arg3: memref<1x1x16x4xbf16, #tpu.memory_space<vmem>>, %arg4: memref<1x1x16x4xbf16, #tpu.memory_space<vmem>>, %arg5: memref<9x4x128xbf16, #tpu.memory_space<vmem>>, %arg6: memref<1x2x128xf32, #tpu.memory_space<vmem>>, %arg7: memref<10x18x4xbf16, #tpu.memory_space<vmem>>) attributes {dimension_semantics = [#tpu.dimension_semantics<parallel>, #tpu.dimension_semantics<arbitrary>], iteration_bounds = array<i64: 2, 2>, scalar_prefetch = 0 : i64, scratch_operands = 1 : i64, tpu.core_type = #tpu.core_type<tc>, window_params = [{transform_indices = @transform_0, window_bounds = array<i64: 1, 8, 16, 4>}, {transform_indices = @transform_1, window_bounds = array<i64: 1, 1, 16, 4>}, {transform_indices = @transform_2, window_bounds = array<i64: 1, 1, 16, 4>}, {pipeline_mode = #tpu.pipeline_mode<synchronous>, transform_indices = @transform_3, window_bounds = array<i64: 9, 4, 128>}, {transform_indices = @transform_4, window_bounds = array<i64: 1, 2, 128>}]} {
    %c0 = arith.constant 0 : index
    %c0_0 = arith.constant 0 : index
    %c0_1 = arith.constant 0 : index
    %c0_2 = arith.constant 0 : index
    %0 = vector.load %arg2[%c0, %c0_0, %c0_1, %c0_2] : memref<1x8x16x4xbf16, #tpu.memory_space<vmem>>, vector<1x8x16x4xbf16>
    %1 = vector.shape_cast %0 : vector<1x8x16x4xbf16> to vector<8x16x4xbf16>
    %c1 = arith.constant 1 : index
    %c1_3 = arith.constant 1 : index
    %c0_4 = arith.constant 0 : index
    %2 = vector.load %arg7[%c1, %c1_3, %c0_4] : memref<10x18x4xbf16, #tpu.memory_space<vmem>>, vector<8x16x4xbf16>
    tpu.vector_store %arg7[%c1, %c1_3, %c0_4], %1 {strides = array<i32>} : memref<10x18x4xbf16, #tpu.memory_space<vmem>>, vector<8x16x4xbf16>,
    %c0_i32 = arith.constant 0 : i32
    %3 = arith.cmpi sgt, %arg1, %c0_i32 : i32
    %4 = arith.extui %3 : i1 to i32
    %5 = arith.sitofp %4 : i32 to f32
    %6 = arith.truncf %5 : f32 to bf16
    %c1_i32 = arith.constant 1 : i32
    %7 = arith.cmpi slt, %arg1, %c1_i32 : i32
    %8 = arith.extui %7 : i1 to i32
    %9 = arith.sitofp %8 : i32 to f32
    %10 = arith.truncf %9 : f32 to bf16
    %c0_5 = arith.constant 0 : index
    %c0_6 = arith.constant 0 : index
    %c0_7 = arith.constant 0 : index
    %c0_8 = arith.constant 0 : index
    %11 = vector.load %arg3[%c0_5, %c0_6, %c0_7, %c0_8] : memref<1x1x16x4xbf16, #tpu.memory_space<vmem>>, vector<1x1x16x4xbf16>
    %12 = vector.shape_cast %11 : vector<1x1x16x4xbf16> to vector<1x16x4xbf16>
    %13 = vector.broadcast %6 : bf16 to vector<1x16x4xbf16>
    %14 = arith.mulf %12, %13 : vector<1x16x4xbf16>
    %c0_9 = arith.constant 0 : index
    %c1_10 = arith.constant 1 : index
    %c0_11 = arith.constant 0 : index
    %15 = vector.load %arg7[%c0_9, %c1_10, %c0_11] : memref<10x18x4xbf16, #tpu.memory_space<vmem>>, vector<1x16x4xbf16>
    tpu.vector_store %arg7[%c0_9, %c1_10, %c0_11], %14 {strides = array<i32>} : memref<10x18x4xbf16, #tpu.memory_space<vmem>>, vector<1x16x4xbf16>,
    %c0_12 = arith.constant 0 : index
    %c0_13 = arith.constant 0 : index
    %c0_14 = arith.constant 0 : index
    %c0_15 = arith.constant 0 : index
    %16 = vector.load %arg4[%c0_12, %c0_13, %c0_14, %c0_15] : memref<1x1x16x4xbf16, #tpu.memory_space<vmem>>, vector<1x1x16x4xbf16>
    %17 = vector.shape_cast %16 : vector<1x1x16x4xbf16> to vector<1x16x4xbf16>
    %18 = vector.broadcast %10 : bf16 to vector<1x16x4xbf16>
    %19 = arith.mulf %17, %18 : vector<1x16x4xbf16>
    %c9 = arith.constant 9 : index
    %c1_16 = arith.constant 1 : index
    %c0_17 = arith.constant 0 : index
    %20 = vector.load %arg7[%c9, %c1_16, %c0_17] : memref<10x18x4xbf16, #tpu.memory_space<vmem>>, vector<1x16x4xbf16>
    tpu.vector_store %arg7[%c9, %c1_16, %c0_17], %19 {strides = array<i32>} : memref<10x18x4xbf16, #tpu.memory_space<vmem>>, vector<1x16x4xbf16>,
    %cst = arith.constant 0.000000e+00 : bf16
    %21 = vector.broadcast %cst : bf16 to vector<10x1x4xbf16>
    %c0_18 = arith.constant 0 : index
    %c0_19 = arith.constant 0 : index
    %c0_20 = arith.constant 0 : index
    %22 = vector.load %arg7[%c0_18, %c0_19, %c0_20] : memref<10x18x4xbf16, #tpu.memory_space<vmem>>, vector<10x1x4xbf16>
    tpu.vector_store %arg7[%c0_18, %c0_19, %c0_20], %21 {strides = array<i32>} : memref<10x18x4xbf16, #tpu.memory_space<vmem>>, vector<10x1x4xbf16>,
    %c0_21 = arith.constant 0 : index
    %c17 = arith.constant 17 : index
    %c0_22 = arith.constant 0 : index
    %23 = vector.load %arg7[%c0_21, %c17, %c0_22] : memref<10x18x4xbf16, #tpu.memory_space<vmem>>, vector<10x1x4xbf16>
    tpu.vector_store %arg7[%c0_21, %c17, %c0_22], %21 {strides = array<i32>} : memref<10x18x4xbf16, #tpu.memory_space<vmem>>, vector<10x1x4xbf16>,
    %c0_23 = arith.constant 0 : index
    %c0_24 = arith.constant 0 : index
    %c0_25 = arith.constant 0 : index
    %24 = vector.load %arg7[%c0_23, %c0_24, %c0_25] : memref<10x18x4xbf16, #tpu.memory_space<vmem>>, vector<8x16x4xbf16>
    %25 = vector.shape_cast %24 : vector<8x16x4xbf16> to vector<128x4xbf16>
    %c0_26 = arith.constant 0 : index
    %c0_27 = arith.constant 0 : index
    %c0_28 = arith.constant 0 : index
    %26 = vector.load %arg5[%c0_26, %c0_27, %c0_28] : memref<9x4x128xbf16, #tpu.memory_space<vmem>>, vector<1x4x128xbf16>
    %27 = vector.shape_cast %26 : vector<1x4x128xbf16> to vector<4x128xbf16>
    %cst_29 = arith.constant dense<0.000000e+00> : vector<128x128xf32>
    %28 = tpu.matmul %25, %27, %cst_29 {dimension_numbers = #tpu.dot_dimension_numbers<[1], [0], [0], [1], [0, 0, 1, 1], [], []>} : vector<128x4xbf16>, vector<4x128xbf16>, vector<128x128xf32> -> vector<128x128xf32>
    %c0_30 = arith.constant 0 : index
    %c1_31 = arith.constant 1 : index
    %c0_32 = arith.constant 0 : index
    %29 = vector.load %arg7[%c0_30, %c1_31, %c0_32] : memref<10x18x4xbf16, #tpu.memory_space<vmem>>, vector<8x16x4xbf16>
    %30 = vector.shape_cast %29 : vector<8x16x4xbf16> to vector<128x4xbf16>
    %c1_33 = arith.constant 1 : index
    %c0_34 = arith.constant 0 : index
    %c0_35 = arith.constant 0 : index
    %31 = vector.load %arg5[%c1_33, %c0_34, %c0_35] : memref<9x4x128xbf16, #tpu.memory_space<vmem>>, vector<1x4x128xbf16>
    %32 = vector.shape_cast %31 : vector<1x4x128xbf16> to vector<4x128xbf16>
    %cst_36 = arith.constant dense<0.000000e+00> : vector<128x128xf32>
    %33 = tpu.matmul %30, %32, %cst_36 {dimension_numbers = #tpu.dot_dimension_numbers<[1], [0], [0], [1], [0, 0, 1, 1], [], []>} : vector<128x4xbf16>, vector<4x128xbf16>, vector<128x128xf32> -> vector<128x128xf32>
    %34 = arith.addf %28, %33 : vector<128x128xf32>
    %c0_37 = arith.constant 0 : index
    %c2 = arith.constant 2 : index
    %c0_38 = arith.constant 0 : index
    %35 = vector.load %arg7[%c0_37, %c2, %c0_38] : memref<10x18x4xbf16, #tpu.memory_space<vmem>>, vector<8x16x4xbf16>
    %36 = vector.shape_cast %35 : vector<8x16x4xbf16> to vector<128x4xbf16>
    %c2_39 = arith.constant 2 : index
    %c0_40 = arith.constant 0 : index
    %c0_41 = arith.constant 0 : index
    %37 = vector.load %arg5[%c2_39, %c0_40, %c0_41] : memref<9x4x128xbf16, #tpu.memory_space<vmem>>, vector<1x4x128xbf16>
    %38 = vector.shape_cast %37 : vector<1x4x128xbf16> to vector<4x128xbf16>
    %cst_42 = arith.constant dense<0.000000e+00> : vector<128x128xf32>
    %39 = tpu.matmul %36, %38, %cst_42 {dimension_numbers = #tpu.dot_dimension_numbers<[1], [0], [0], [1], [0, 0, 1, 1], [], []>} : vector<128x4xbf16>, vector<4x128xbf16>, vector<128x128xf32> -> vector<128x128xf32>
    %40 = arith.addf %34, %39 : vector<128x128xf32>
    %c1_43 = arith.constant 1 : index
    %c0_44 = arith.constant 0 : index
    %c0_45 = arith.constant 0 : index
    %41 = vector.load %arg7[%c1_43, %c0_44, %c0_45] : memref<10x18x4xbf16, #tpu.memory_space<vmem>>, vector<8x16x4xbf16>
    %42 = vector.shape_cast %41 : vector<8x16x4xbf16> to vector<128x4xbf16>
    %c3 = arith.constant 3 : index
    %c0_46 = arith.constant 0 : index
    %c0_47 = arith.constant 0 : index
    %43 = vector.load %arg5[%c3, %c0_46, %c0_47] : memref<9x4x128xbf16, #tpu.memory_space<vmem>>, vector<1x4x128xbf16>
    %44 = vector.shape_cast %43 : vector<1x4x128xbf16> to vector<4x128xbf16>
    %cst_48 = arith.constant dense<0.000000e+00> : vector<128x128xf32>
    %45 = tpu.matmul %42, %44, %cst_48 {dimension_numbers = #tpu.dot_dimension_numbers<[1], [0], [0], [1], [0, 0, 1, 1], [], []>} : vector<128x4xbf16>, vector<4x128xbf16>, vector<128x128xf32> -> vector<128x128xf32>
    %46 = arith.addf %40, %45 : vector<128x128xf32>
    %c1_49 = arith.constant 1 : index
    %c1_50 = arith.constant 1 : index
    %c0_51 = arith.constant 0 : index
    %47 = vector.load %arg7[%c1_49, %c1_50, %c0_51] : memref<10x18x4xbf16, #tpu.memory_space<vmem>>, vector<8x16x4xbf16>
    %48 = vector.shape_cast %47 : vector<8x16x4xbf16> to vector<128x4xbf16>
    %c4 = arith.constant 4 : index
    %c0_52 = arith.constant 0 : index
    %c0_53 = arith.constant 0 : index
    %49 = vector.load %arg5[%c4, %c0_52, %c0_53] : memref<9x4x128xbf16, #tpu.memory_space<vmem>>, vector<1x4x128xbf16>
    %50 = vector.shape_cast %49 : vector<1x4x128xbf16> to vector<4x128xbf16>
    %cst_54 = arith.constant dense<0.000000e+00> : vector<128x128xf32>
    %51 = tpu.matmul %48, %50, %cst_54 {dimension_numbers = #tpu.dot_dimension_numbers<[1], [0], [0], [1], [0, 0, 1, 1], [], []>} : vector<128x4xbf16>, vector<4x128xbf16>, vector<128x128xf32> -> vector<128x128xf32>
    %52 = arith.addf %46, %51 : vector<128x128xf32>
    %c1_55 = arith.constant 1 : index
    %c2_56 = arith.constant 2 : index
    %c0_57 = arith.constant 0 : index
    %53 = vector.load %arg7[%c1_55, %c2_56, %c0_57] : memref<10x18x4xbf16, #tpu.memory_space<vmem>>, vector<8x16x4xbf16>
    %54 = vector.shape_cast %53 : vector<8x16x4xbf16> to vector<128x4xbf16>
    %c5 = arith.constant 5 : index
    %c0_58 = arith.constant 0 : index
    %c0_59 = arith.constant 0 : index
    %55 = vector.load %arg5[%c5, %c0_58, %c0_59] : memref<9x4x128xbf16, #tpu.memory_space<vmem>>, vector<1x4x128xbf16>
    %56 = vector.shape_cast %55 : vector<1x4x128xbf16> to vector<4x128xbf16>
    %cst_60 = arith.constant dense<0.000000e+00> : vector<128x128xf32>
    %57 = tpu.matmul %54, %56, %cst_60 {dimension_numbers = #tpu.dot_dimension_numbers<[1], [0], [0], [1], [0, 0, 1, 1], [], []>} : vector<128x4xbf16>, vector<4x128xbf16>, vector<128x128xf32> -> vector<128x128xf32>
    %58 = arith.addf %52, %57 : vector<128x128xf32>
    %c2_61 = arith.constant 2 : index
    %c0_62 = arith.constant 0 : index
    %c0_63 = arith.constant 0 : index
    %59 = vector.load %arg7[%c2_61, %c0_62, %c0_63] : memref<10x18x4xbf16, #tpu.memory_space<vmem>>, vector<8x16x4xbf16>
    %60 = vector.shape_cast %59 : vector<8x16x4xbf16> to vector<128x4xbf16>
    %c6 = arith.constant 6 : index
    %c0_64 = arith.constant 0 : index
    %c0_65 = arith.constant 0 : index
    %61 = vector.load %arg5[%c6, %c0_64, %c0_65] : memref<9x4x128xbf16, #tpu.memory_space<vmem>>, vector<1x4x128xbf16>
    %62 = vector.shape_cast %61 : vector<1x4x128xbf16> to vector<4x128xbf16>
    %cst_66 = arith.constant dense<0.000000e+00> : vector<128x128xf32>
    %63 = tpu.matmul %60, %62, %cst_66 {dimension_numbers = #tpu.dot_dimension_numbers<[1], [0], [0], [1], [0, 0, 1, 1], [], []>} : vector<128x4xbf16>, vector<4x128xbf16>, vector<128x128xf32> -> vector<128x128xf32>
    %64 = arith.addf %58, %63 : vector<128x128xf32>
    %c2_67 = arith.constant 2 : index
    %c1_68 = arith.constant 1 : index
    %c0_69 = arith.constant 0 : index
    %65 = vector.load %arg7[%c2_67, %c1_68, %c0_69] : memref<10x18x4xbf16, #tpu.memory_space<vmem>>, vector<8x16x4xbf16>
    %66 = vector.shape_cast %65 : vector<8x16x4xbf16> to vector<128x4xbf16>
    %c7 = arith.constant 7 : index
    %c0_70 = arith.constant 0 : index
    %c0_71 = arith.constant 0 : index
    %67 = vector.load %arg5[%c7, %c0_70, %c0_71] : memref<9x4x128xbf16, #tpu.memory_space<vmem>>, vector<1x4x128xbf16>
    %68 = vector.shape_cast %67 : vector<1x4x128xbf16> to vector<4x128xbf16>
    %cst_72 = arith.constant dense<0.000000e+00> : vector<128x128xf32>
    %69 = tpu.matmul %66, %68, %cst_72 {dimension_numbers = #tpu.dot_dimension_numbers<[1], [0], [0], [1], [0, 0, 1, 1], [], []>} : vector<128x4xbf16>, vector<4x128xbf16>, vector<128x128xf32> -> vector<128x128xf32>
    %70 = arith.addf %64, %69 : vector<128x128xf32>
    %c2_73 = arith.constant 2 : index
    %c2_74 = arith.constant 2 : index
    %c0_75 = arith.constant 0 : index
    %71 = vector.load %arg7[%c2_73, %c2_74, %c0_75] : memref<10x18x4xbf16, #tpu.memory_space<vmem>>, vector<8x16x4xbf16>
    %72 = vector.shape_cast %71 : vector<8x16x4xbf16> to vector<128x4xbf16>
    %c8 = arith.constant 8 : index
    %c0_76 = arith.constant 0 : index
    %c0_77 = arith.constant 0 : index
    %73 = vector.load %arg5[%c8, %c0_76, %c0_77] : memref<9x4x128xbf16, #tpu.memory_space<vmem>>, vector<1x4x128xbf16>
    %74 = vector.shape_cast %73 : vector<1x4x128xbf16> to vector<4x128xbf16>
    %cst_78 = arith.constant dense<0.000000e+00> : vector<128x128xf32>
    %75 = tpu.matmul %72, %74, %cst_78 {dimension_numbers = #tpu.dot_dimension_numbers<[1], [0], [0], [1], [0, 0, 1, 1], [], []>} : vector<128x4xbf16>, vector<4x128xbf16>, vector<128x128xf32> -> vector<128x128xf32>
    %76 = arith.addf %70, %75 : vector<128x128xf32>
    %cst_79 = arith.constant dense<0.000000e+00> : vector<128xf32>
    %77 = vector.multi_reduction <add>, %76, %cst_79 [0] : vector<128x128xf32> to vector<128xf32>
    %78 = vector.shape_cast %77 : vector<128xf32> to vector<1x128xf32>
    %79 = arith.mulf %76, %76 : vector<128x128xf32>
    %cst_80 = arith.constant dense<0.000000e+00> : vector<128xf32>
    %80 = vector.multi_reduction <add>, %79, %cst_80 [0] : vector<128x128xf32> to vector<128xf32>
    %81 = vector.shape_cast %80 : vector<128xf32> to vector<1x128xf32>
    %c0_i32_81 = arith.constant 0 : i32
    %82 = arith.cmpi eq, %arg1, %c0_i32_81 : i32
    %83 = arith.extui %82 : i1 to i32
    %c0_i32_82 = arith.constant 0 : i32
    %84 = arith.cmpi ne, %83, %c0_i32_82 : i32
    scf.if %84 {
      %cst_95 = arith.constant 0.000000e+00 : f32
      %93 = vector.broadcast %cst_95 : f32 to vector<1x2x128xf32>
      %c0_96 = arith.constant 0 : index
      %c0_97 = arith.constant 0 : index
      %c0_98 = arith.constant 0 : index
      %94 = vector.load %arg6[%c0_96, %c0_97, %c0_98] : memref<1x2x128xf32, #tpu.memory_space<vmem>>, vector<1x2x128xf32>
      tpu.vector_store %arg6[%c0_96, %c0_97, %c0_98], %93 {strides = array<i32>} : memref<1x2x128xf32, #tpu.memory_space<vmem>>, vector<1x2x128xf32>,
    } else {
    }
    %c0_83 = arith.constant 0 : index
    %c0_84 = arith.constant 0 : index
    %c0_85 = arith.constant 0 : index
    %85 = vector.load %arg6[%c0_83, %c0_84, %c0_85] : memref<1x2x128xf32, #tpu.memory_space<vmem>>, vector<1x1x128xf32>
    %86 = vector.shape_cast %78 : vector<1x128xf32> to vector<1x1x128xf32>
    %87 = arith.addf %85, %86 : vector<1x1x128xf32>
    %c0_86 = arith.constant 0 : index
    %c0_87 = arith.constant 0 : index
    %c0_88 = arith.constant 0 : index
    %88 = vector.load %arg6[%c0_86, %c0_87, %c0_88] : memref<1x2x128xf32, #tpu.memory_space<vmem>>, vector<1x1x128xf32>
    tpu.vector_store %arg6[%c0_86, %c0_87, %c0_88], %87 {strides = array<i32>} : memref<1x2x128xf32, #tpu.memory_space<vmem>>, vector<1x1x128xf32>,
    %c0_89 = arith.constant 0 : index
    %c1_90 = arith.constant 1 : index
    %c0_91 = arith.constant 0 : index
    %89 = vector.load %arg6[%c0_89, %c1_90, %c0_91] : memref<1x2x128xf32, #tpu.memory_space<vmem>>, vector<1x1x128xf32>
    %90 = vector.shape_cast %81 : vector<1x128xf32> to vector<1x1x128xf32>
    %91 = arith.addf %89, %90 : vector<1x1x128xf32>
    %c0_92 = arith.constant 0 : index
    %c1_93 = arith.constant 1 : index
    %c0_94 = arith.constant 0 : index
    %92 = vector.load %arg6[%c0_92, %c1_93, %c0_94] : memref<1x2x128xf32, #tpu.memory_space<vmem>>, vector<1x1x128xf32>
    tpu.vector_store %arg6[%c0_92, %c1_93, %c0_94], %91 {strides = array<i32>} : memref<1x2x128xf32, #tpu.memory_space<vmem>>, vector<1x1x128xf32>,
    return
  }
  func.func @transform_0(%arg0: i32, %arg1: i32) -> (i32, i32, i32, i32) {
    %c0_i32 = arith.constant 0 : i32
    %c0_i32_0 = arith.constant 0 : i32
    %c0_i32_1 = arith.constant 0 : i32
    return %arg0, %arg1, %c0_i32, %c0_i32_0 : i32, i32, i32, i32
  }
  func.func @transform_1(%arg0: i32, %arg1: i32) -> (i32, i32, i32, i32) {
    %c8_i32 = arith.constant 8 : i32
    %0 = arith.muli %arg1, %c8_i32 : i32
    %c1_i32 = arith.constant 1 : i32
    %1 = arith.subi %0, %c1_i32 : i32
    %c0_i32 = arith.constant 0 : i32
    %2 = arith.maxsi %1, %c0_i32 : i32
    %c0_i32_0 = arith.constant 0 : i32
    %c0_i32_1 = arith.constant 0 : i32
    %c0_i32_2 = arith.constant 0 : i32
    return %arg0, %2, %c0_i32_0, %c0_i32_1 : i32, i32, i32, i32
  }
  func.func @transform_2(%arg0: i32, %arg1: i32) -> (i32, i32, i32, i32) {
    %c8_i32 = arith.constant 8 : i32
    %0 = arith.muli %arg1, %c8_i32 : i32
    %c8_i32_0 = arith.constant 8 : i32
    %1 = arith.addi %0, %c8_i32_0 : i32
    %c15_i32 = arith.constant 15 : i32
    %2 = arith.minsi %1, %c15_i32 : i32
    %c0_i32 = arith.constant 0 : i32
    %c0_i32_1 = arith.constant 0 : i32
    %c0_i32_2 = arith.constant 0 : i32
    return %arg0, %2, %c0_i32, %c0_i32_1 : i32, i32, i32, i32
  }
  func.func @transform_3(%arg0: i32, %arg1: i32) -> (i32, i32, i32) {
    %c0_i32 = arith.constant 0 : i32
    %c0_i32_0 = arith.constant 0 : i32
    %c0_i32_1 = arith.constant 0 : i32
    %c0_i32_2 = arith.constant 0 : i32
    return %c0_i32, %c0_i32_0, %c0_i32_1 : i32, i32, i32
  }
  func.func @transform_4(%arg0: i32, %arg1: i32) -> (i32, i32, i32) {
    %c0_i32 = arith.constant 0 : i32
    %c0_i32_0 = arith.constant 0 : i32
    %c0_i32_1 = arith.constant 0 : i32
    return %arg0, %c0_i32, %c0_i32_0 : i32, i32, i32
  }
}

module attributes {stable_mosaic.version = 11 : i64} {
  func.func @_conv_bn_relu_kernel(%arg0: i32, %arg1: i32, %arg2: memref<1x8x16x4xbf16, #tpu.memory_space<vmem>>, %arg3: memref<1x1x16x4xbf16, #tpu.memory_space<vmem>>, %arg4: memref<1x1x16x4xbf16, #tpu.memory_space<vmem>>, %arg5: memref<9x4x128xbf16, #tpu.memory_space<vmem>>, %arg6: memref<1x128xf32, #tpu.memory_space<vmem>>, %arg7: memref<1x128xf32, #tpu.memory_space<vmem>>, %arg8: memref<1x8x16x128xf32, #tpu.memory_space<vmem>>, %arg9: memref<10x18x4xbf16, #tpu.memory_space<vmem>>) attributes {dimension_semantics = [#tpu.dimension_semantics<parallel>, #tpu.dimension_semantics<parallel>], iteration_bounds = array<i64: 2, 2>, scalar_prefetch = 0 : i64, scratch_operands = 1 : i64, tpu.core_type = #tpu.core_type<tc>, window_params = [{transform_indices = @transform_0, window_bounds = array<i64: 1, 8, 16, 4>}, {transform_indices = @transform_1, window_bounds = array<i64: 1, 1, 16, 4>}, {transform_indices = @transform_2, window_bounds = array<i64: 1, 1, 16, 4>}, {pipeline_mode = #tpu.pipeline_mode<synchronous>, transform_indices = @transform_3, window_bounds = array<i64: 9, 4, 128>}, {pipeline_mode = #tpu.pipeline_mode<synchronous>, transform_indices = @transform_4, window_bounds = array<i64: 1, 128>}, {pipeline_mode = #tpu.pipeline_mode<synchronous>, transform_indices = @transform_5, window_bounds = array<i64: 1, 128>}, {transform_indices = @transform_6, window_bounds = array<i64: 1, 8, 16, 128>}]} {
    %c0 = arith.constant 0 : index
    %c0_0 = arith.constant 0 : index
    %c0_1 = arith.constant 0 : index
    %c0_2 = arith.constant 0 : index
    %0 = vector.load %arg2[%c0, %c0_0, %c0_1, %c0_2] : memref<1x8x16x4xbf16, #tpu.memory_space<vmem>>, vector<1x8x16x4xbf16>
    %1 = vector.shape_cast %0 : vector<1x8x16x4xbf16> to vector<8x16x4xbf16>
    %c1 = arith.constant 1 : index
    %c1_3 = arith.constant 1 : index
    %c0_4 = arith.constant 0 : index
    %2 = vector.load %arg9[%c1, %c1_3, %c0_4] : memref<10x18x4xbf16, #tpu.memory_space<vmem>>, vector<8x16x4xbf16>
    tpu.vector_store %arg9[%c1, %c1_3, %c0_4], %1 {strides = array<i32>} : memref<10x18x4xbf16, #tpu.memory_space<vmem>>, vector<8x16x4xbf16>,
    %c0_i32 = arith.constant 0 : i32
    %3 = arith.cmpi sgt, %arg1, %c0_i32 : i32
    %4 = arith.extui %3 : i1 to i32
    %5 = arith.sitofp %4 : i32 to f32
    %6 = arith.truncf %5 : f32 to bf16
    %c1_i32 = arith.constant 1 : i32
    %7 = arith.cmpi slt, %arg1, %c1_i32 : i32
    %8 = arith.extui %7 : i1 to i32
    %9 = arith.sitofp %8 : i32 to f32
    %10 = arith.truncf %9 : f32 to bf16
    %c0_5 = arith.constant 0 : index
    %c0_6 = arith.constant 0 : index
    %c0_7 = arith.constant 0 : index
    %c0_8 = arith.constant 0 : index
    %11 = vector.load %arg3[%c0_5, %c0_6, %c0_7, %c0_8] : memref<1x1x16x4xbf16, #tpu.memory_space<vmem>>, vector<1x1x16x4xbf16>
    %12 = vector.shape_cast %11 : vector<1x1x16x4xbf16> to vector<1x16x4xbf16>
    %13 = vector.broadcast %6 : bf16 to vector<1x16x4xbf16>
    %14 = arith.mulf %12, %13 : vector<1x16x4xbf16>
    %c0_9 = arith.constant 0 : index
    %c1_10 = arith.constant 1 : index
    %c0_11 = arith.constant 0 : index
    %15 = vector.load %arg9[%c0_9, %c1_10, %c0_11] : memref<10x18x4xbf16, #tpu.memory_space<vmem>>, vector<1x16x4xbf16>
    tpu.vector_store %arg9[%c0_9, %c1_10, %c0_11], %14 {strides = array<i32>} : memref<10x18x4xbf16, #tpu.memory_space<vmem>>, vector<1x16x4xbf16>,
    %c0_12 = arith.constant 0 : index
    %c0_13 = arith.constant 0 : index
    %c0_14 = arith.constant 0 : index
    %c0_15 = arith.constant 0 : index
    %16 = vector.load %arg4[%c0_12, %c0_13, %c0_14, %c0_15] : memref<1x1x16x4xbf16, #tpu.memory_space<vmem>>, vector<1x1x16x4xbf16>
    %17 = vector.shape_cast %16 : vector<1x1x16x4xbf16> to vector<1x16x4xbf16>
    %18 = vector.broadcast %10 : bf16 to vector<1x16x4xbf16>
    %19 = arith.mulf %17, %18 : vector<1x16x4xbf16>
    %c9 = arith.constant 9 : index
    %c1_16 = arith.constant 1 : index
    %c0_17 = arith.constant 0 : index
    %20 = vector.load %arg9[%c9, %c1_16, %c0_17] : memref<10x18x4xbf16, #tpu.memory_space<vmem>>, vector<1x16x4xbf16>
    tpu.vector_store %arg9[%c9, %c1_16, %c0_17], %19 {strides = array<i32>} : memref<10x18x4xbf16, #tpu.memory_space<vmem>>, vector<1x16x4xbf16>,
    %cst = arith.constant 0.000000e+00 : bf16
    %21 = vector.broadcast %cst : bf16 to vector<10x1x4xbf16>
    %c0_18 = arith.constant 0 : index
    %c0_19 = arith.constant 0 : index
    %c0_20 = arith.constant 0 : index
    %22 = vector.load %arg9[%c0_18, %c0_19, %c0_20] : memref<10x18x4xbf16, #tpu.memory_space<vmem>>, vector<10x1x4xbf16>
    tpu.vector_store %arg9[%c0_18, %c0_19, %c0_20], %21 {strides = array<i32>} : memref<10x18x4xbf16, #tpu.memory_space<vmem>>, vector<10x1x4xbf16>,
    %c0_21 = arith.constant 0 : index
    %c17 = arith.constant 17 : index
    %c0_22 = arith.constant 0 : index
    %23 = vector.load %arg9[%c0_21, %c17, %c0_22] : memref<10x18x4xbf16, #tpu.memory_space<vmem>>, vector<10x1x4xbf16>
    tpu.vector_store %arg9[%c0_21, %c17, %c0_22], %21 {strides = array<i32>} : memref<10x18x4xbf16, #tpu.memory_space<vmem>>, vector<10x1x4xbf16>,
    %c0_23 = arith.constant 0 : index
    %c0_24 = arith.constant 0 : index
    %c0_25 = arith.constant 0 : index
    %24 = vector.load %arg9[%c0_23, %c0_24, %c0_25] : memref<10x18x4xbf16, #tpu.memory_space<vmem>>, vector<8x16x4xbf16>
    %25 = vector.shape_cast %24 : vector<8x16x4xbf16> to vector<128x4xbf16>
    %c0_26 = arith.constant 0 : index
    %c0_27 = arith.constant 0 : index
    %c0_28 = arith.constant 0 : index
    %26 = vector.load %arg5[%c0_26, %c0_27, %c0_28] : memref<9x4x128xbf16, #tpu.memory_space<vmem>>, vector<1x4x128xbf16>
    %27 = vector.shape_cast %26 : vector<1x4x128xbf16> to vector<4x128xbf16>
    %cst_29 = arith.constant dense<0.000000e+00> : vector<128x128xf32>
    %28 = tpu.matmul %25, %27, %cst_29 {dimension_numbers = #tpu.dot_dimension_numbers<[1], [0], [0], [1], [0, 0, 1, 1], [], []>} : vector<128x4xbf16>, vector<4x128xbf16>, vector<128x128xf32> -> vector<128x128xf32>
    %c0_30 = arith.constant 0 : index
    %c1_31 = arith.constant 1 : index
    %c0_32 = arith.constant 0 : index
    %29 = vector.load %arg9[%c0_30, %c1_31, %c0_32] : memref<10x18x4xbf16, #tpu.memory_space<vmem>>, vector<8x16x4xbf16>
    %30 = vector.shape_cast %29 : vector<8x16x4xbf16> to vector<128x4xbf16>
    %c1_33 = arith.constant 1 : index
    %c0_34 = arith.constant 0 : index
    %c0_35 = arith.constant 0 : index
    %31 = vector.load %arg5[%c1_33, %c0_34, %c0_35] : memref<9x4x128xbf16, #tpu.memory_space<vmem>>, vector<1x4x128xbf16>
    %32 = vector.shape_cast %31 : vector<1x4x128xbf16> to vector<4x128xbf16>
    %cst_36 = arith.constant dense<0.000000e+00> : vector<128x128xf32>
    %33 = tpu.matmul %30, %32, %cst_36 {dimension_numbers = #tpu.dot_dimension_numbers<[1], [0], [0], [1], [0, 0, 1, 1], [], []>} : vector<128x4xbf16>, vector<4x128xbf16>, vector<128x128xf32> -> vector<128x128xf32>
    %34 = arith.addf %28, %33 : vector<128x128xf32>
    %c0_37 = arith.constant 0 : index
    %c2 = arith.constant 2 : index
    %c0_38 = arith.constant 0 : index
    %35 = vector.load %arg9[%c0_37, %c2, %c0_38] : memref<10x18x4xbf16, #tpu.memory_space<vmem>>, vector<8x16x4xbf16>
    %36 = vector.shape_cast %35 : vector<8x16x4xbf16> to vector<128x4xbf16>
    %c2_39 = arith.constant 2 : index
    %c0_40 = arith.constant 0 : index
    %c0_41 = arith.constant 0 : index
    %37 = vector.load %arg5[%c2_39, %c0_40, %c0_41] : memref<9x4x128xbf16, #tpu.memory_space<vmem>>, vector<1x4x128xbf16>
    %38 = vector.shape_cast %37 : vector<1x4x128xbf16> to vector<4x128xbf16>
    %cst_42 = arith.constant dense<0.000000e+00> : vector<128x128xf32>
    %39 = tpu.matmul %36, %38, %cst_42 {dimension_numbers = #tpu.dot_dimension_numbers<[1], [0], [0], [1], [0, 0, 1, 1], [], []>} : vector<128x4xbf16>, vector<4x128xbf16>, vector<128x128xf32> -> vector<128x128xf32>
    %40 = arith.addf %34, %39 : vector<128x128xf32>
    %c1_43 = arith.constant 1 : index
    %c0_44 = arith.constant 0 : index
    %c0_45 = arith.constant 0 : index
    %41 = vector.load %arg9[%c1_43, %c0_44, %c0_45] : memref<10x18x4xbf16, #tpu.memory_space<vmem>>, vector<8x16x4xbf16>
    %42 = vector.shape_cast %41 : vector<8x16x4xbf16> to vector<128x4xbf16>
    %c3 = arith.constant 3 : index
    %c0_46 = arith.constant 0 : index
    %c0_47 = arith.constant 0 : index
    %43 = vector.load %arg5[%c3, %c0_46, %c0_47] : memref<9x4x128xbf16, #tpu.memory_space<vmem>>, vector<1x4x128xbf16>
    %44 = vector.shape_cast %43 : vector<1x4x128xbf16> to vector<4x128xbf16>
    %cst_48 = arith.constant dense<0.000000e+00> : vector<128x128xf32>
    %45 = tpu.matmul %42, %44, %cst_48 {dimension_numbers = #tpu.dot_dimension_numbers<[1], [0], [0], [1], [0, 0, 1, 1], [], []>} : vector<128x4xbf16>, vector<4x128xbf16>, vector<128x128xf32> -> vector<128x128xf32>
    %46 = arith.addf %40, %45 : vector<128x128xf32>
    %c1_49 = arith.constant 1 : index
    %c1_50 = arith.constant 1 : index
    %c0_51 = arith.constant 0 : index
    %47 = vector.load %arg9[%c1_49, %c1_50, %c0_51] : memref<10x18x4xbf16, #tpu.memory_space<vmem>>, vector<8x16x4xbf16>
    %48 = vector.shape_cast %47 : vector<8x16x4xbf16> to vector<128x4xbf16>
    %c4 = arith.constant 4 : index
    %c0_52 = arith.constant 0 : index
    %c0_53 = arith.constant 0 : index
    %49 = vector.load %arg5[%c4, %c0_52, %c0_53] : memref<9x4x128xbf16, #tpu.memory_space<vmem>>, vector<1x4x128xbf16>
    %50 = vector.shape_cast %49 : vector<1x4x128xbf16> to vector<4x128xbf16>
    %cst_54 = arith.constant dense<0.000000e+00> : vector<128x128xf32>
    %51 = tpu.matmul %48, %50, %cst_54 {dimension_numbers = #tpu.dot_dimension_numbers<[1], [0], [0], [1], [0, 0, 1, 1], [], []>} : vector<128x4xbf16>, vector<4x128xbf16>, vector<128x128xf32> -> vector<128x128xf32>
    %52 = arith.addf %46, %51 : vector<128x128xf32>
    %c1_55 = arith.constant 1 : index
    %c2_56 = arith.constant 2 : index
    %c0_57 = arith.constant 0 : index
    %53 = vector.load %arg9[%c1_55, %c2_56, %c0_57] : memref<10x18x4xbf16, #tpu.memory_space<vmem>>, vector<8x16x4xbf16>
    %54 = vector.shape_cast %53 : vector<8x16x4xbf16> to vector<128x4xbf16>
    %c5 = arith.constant 5 : index
    %c0_58 = arith.constant 0 : index
    %c0_59 = arith.constant 0 : index
    %55 = vector.load %arg5[%c5, %c0_58, %c0_59] : memref<9x4x128xbf16, #tpu.memory_space<vmem>>, vector<1x4x128xbf16>
    %56 = vector.shape_cast %55 : vector<1x4x128xbf16> to vector<4x128xbf16>
    %cst_60 = arith.constant dense<0.000000e+00> : vector<128x128xf32>
    %57 = tpu.matmul %54, %56, %cst_60 {dimension_numbers = #tpu.dot_dimension_numbers<[1], [0], [0], [1], [0, 0, 1, 1], [], []>} : vector<128x4xbf16>, vector<4x128xbf16>, vector<128x128xf32> -> vector<128x128xf32>
    %58 = arith.addf %52, %57 : vector<128x128xf32>
    %c2_61 = arith.constant 2 : index
    %c0_62 = arith.constant 0 : index
    %c0_63 = arith.constant 0 : index
    %59 = vector.load %arg9[%c2_61, %c0_62, %c0_63] : memref<10x18x4xbf16, #tpu.memory_space<vmem>>, vector<8x16x4xbf16>
    %60 = vector.shape_cast %59 : vector<8x16x4xbf16> to vector<128x4xbf16>
    %c6 = arith.constant 6 : index
    %c0_64 = arith.constant 0 : index
    %c0_65 = arith.constant 0 : index
    %61 = vector.load %arg5[%c6, %c0_64, %c0_65] : memref<9x4x128xbf16, #tpu.memory_space<vmem>>, vector<1x4x128xbf16>
    %62 = vector.shape_cast %61 : vector<1x4x128xbf16> to vector<4x128xbf16>
    %cst_66 = arith.constant dense<0.000000e+00> : vector<128x128xf32>
    %63 = tpu.matmul %60, %62, %cst_66 {dimension_numbers = #tpu.dot_dimension_numbers<[1], [0], [0], [1], [0, 0, 1, 1], [], []>} : vector<128x4xbf16>, vector<4x128xbf16>, vector<128x128xf32> -> vector<128x128xf32>
    %64 = arith.addf %58, %63 : vector<128x128xf32>
    %c2_67 = arith.constant 2 : index
    %c1_68 = arith.constant 1 : index
    %c0_69 = arith.constant 0 : index
    %65 = vector.load %arg9[%c2_67, %c1_68, %c0_69] : memref<10x18x4xbf16, #tpu.memory_space<vmem>>, vector<8x16x4xbf16>
    %66 = vector.shape_cast %65 : vector<8x16x4xbf16> to vector<128x4xbf16>
    %c7 = arith.constant 7 : index
    %c0_70 = arith.constant 0 : index
    %c0_71 = arith.constant 0 : index
    %67 = vector.load %arg5[%c7, %c0_70, %c0_71] : memref<9x4x128xbf16, #tpu.memory_space<vmem>>, vector<1x4x128xbf16>
    %68 = vector.shape_cast %67 : vector<1x4x128xbf16> to vector<4x128xbf16>
    %cst_72 = arith.constant dense<0.000000e+00> : vector<128x128xf32>
    %69 = tpu.matmul %66, %68, %cst_72 {dimension_numbers = #tpu.dot_dimension_numbers<[1], [0], [0], [1], [0, 0, 1, 1], [], []>} : vector<128x4xbf16>, vector<4x128xbf16>, vector<128x128xf32> -> vector<128x128xf32>
    %70 = arith.addf %64, %69 : vector<128x128xf32>
    %c2_73 = arith.constant 2 : index
    %c2_74 = arith.constant 2 : index
    %c0_75 = arith.constant 0 : index
    %71 = vector.load %arg9[%c2_73, %c2_74, %c0_75] : memref<10x18x4xbf16, #tpu.memory_space<vmem>>, vector<8x16x4xbf16>
    %72 = vector.shape_cast %71 : vector<8x16x4xbf16> to vector<128x4xbf16>
    %c8 = arith.constant 8 : index
    %c0_76 = arith.constant 0 : index
    %c0_77 = arith.constant 0 : index
    %73 = vector.load %arg5[%c8, %c0_76, %c0_77] : memref<9x4x128xbf16, #tpu.memory_space<vmem>>, vector<1x4x128xbf16>
    %74 = vector.shape_cast %73 : vector<1x4x128xbf16> to vector<4x128xbf16>
    %cst_78 = arith.constant dense<0.000000e+00> : vector<128x128xf32>
    %75 = tpu.matmul %72, %74, %cst_78 {dimension_numbers = #tpu.dot_dimension_numbers<[1], [0], [0], [1], [0, 0, 1, 1], [], []>} : vector<128x4xbf16>, vector<4x128xbf16>, vector<128x128xf32> -> vector<128x128xf32>
    %76 = arith.addf %70, %75 : vector<128x128xf32>
    %c0_79 = arith.constant 0 : index
    %c0_80 = arith.constant 0 : index
    %77 = vector.load %arg6[%c0_79, %c0_80] : memref<1x128xf32, #tpu.memory_space<vmem>>, vector<1x128xf32>
    %78 = vector.broadcast %77 : vector<1x128xf32> to vector<128x128xf32>
    %79 = arith.mulf %76, %78 : vector<128x128xf32>
    %c0_81 = arith.constant 0 : index
    %c0_82 = arith.constant 0 : index
    %80 = vector.load %arg7[%c0_81, %c0_82] : memref<1x128xf32, #tpu.memory_space<vmem>>, vector<1x128xf32>
    %81 = vector.broadcast %80 : vector<1x128xf32> to vector<128x128xf32>
    %82 = arith.addf %79, %81 : vector<128x128xf32>
    %cst_83 = arith.constant 0.000000e+00 : f32
    %83 = vector.broadcast %cst_83 : f32 to vector<128x128xf32>
    %84 = arith.maximumf %82, %83 : vector<128x128xf32>
    %85 = vector.shape_cast %84 : vector<128x128xf32> to vector<1x8x16x128xf32>
    %c0_84 = arith.constant 0 : index
    %c0_85 = arith.constant 0 : index
    %c0_86 = arith.constant 0 : index
    %c0_87 = arith.constant 0 : index
    %86 = vector.load %arg8[%c0_84, %c0_85, %c0_86, %c0_87] : memref<1x8x16x128xf32, #tpu.memory_space<vmem>>, vector<1x8x16x128xf32>
    tpu.vector_store %arg8[%c0_84, %c0_85, %c0_86, %c0_87], %85 {strides = array<i32>} : memref<1x8x16x128xf32, #tpu.memory_space<vmem>>, vector<1x8x16x128xf32>,
    return
  }
  func.func @transform_0(%arg0: i32, %arg1: i32) -> (i32, i32, i32, i32) {
    %c0_i32 = arith.constant 0 : i32
    %c0_i32_0 = arith.constant 0 : i32
    %c0_i32_1 = arith.constant 0 : i32
    return %arg0, %arg1, %c0_i32, %c0_i32_0 : i32, i32, i32, i32
  }
  func.func @transform_1(%arg0: i32, %arg1: i32) -> (i32, i32, i32, i32) {
    %c8_i32 = arith.constant 8 : i32
    %0 = arith.muli %arg1, %c8_i32 : i32
    %c1_i32 = arith.constant 1 : i32
    %1 = arith.subi %0, %c1_i32 : i32
    %c0_i32 = arith.constant 0 : i32
    %2 = arith.maxsi %1, %c0_i32 : i32
    %c0_i32_0 = arith.constant 0 : i32
    %c0_i32_1 = arith.constant 0 : i32
    %c0_i32_2 = arith.constant 0 : i32
    return %arg0, %2, %c0_i32_0, %c0_i32_1 : i32, i32, i32, i32
  }
  func.func @transform_2(%arg0: i32, %arg1: i32) -> (i32, i32, i32, i32) {
    %c8_i32 = arith.constant 8 : i32
    %0 = arith.muli %arg1, %c8_i32 : i32
    %c8_i32_0 = arith.constant 8 : i32
    %1 = arith.addi %0, %c8_i32_0 : i32
    %c15_i32 = arith.constant 15 : i32
    %2 = arith.minsi %1, %c15_i32 : i32
    %c0_i32 = arith.constant 0 : i32
    %c0_i32_1 = arith.constant 0 : i32
    %c0_i32_2 = arith.constant 0 : i32
    return %arg0, %2, %c0_i32, %c0_i32_1 : i32, i32, i32, i32
  }
  func.func @transform_3(%arg0: i32, %arg1: i32) -> (i32, i32, i32) {
    %c0_i32 = arith.constant 0 : i32
    %c0_i32_0 = arith.constant 0 : i32
    %c0_i32_1 = arith.constant 0 : i32
    %c0_i32_2 = arith.constant 0 : i32
    return %c0_i32, %c0_i32_0, %c0_i32_1 : i32, i32, i32
  }
  func.func @transform_4(%arg0: i32, %arg1: i32) -> (i32, i32) {
    %c0_i32 = arith.constant 0 : i32
    %c0_i32_0 = arith.constant 0 : i32
    %c0_i32_1 = arith.constant 0 : i32
    return %c0_i32, %c0_i32_0 : i32, i32
  }
  func.func @transform_5(%arg0: i32, %arg1: i32) -> (i32, i32) {
    %c0_i32 = arith.constant 0 : i32
    %c0_i32_0 = arith.constant 0 : i32
    %c0_i32_1 = arith.constant 0 : i32
    return %c0_i32, %c0_i32_0 : i32, i32
  }
  func.func @transform_6(%arg0: i32, %arg1: i32) -> (i32, i32, i32, i32) {
    %c0_i32 = arith.constant 0 : i32
    %c0_i32_0 = arith.constant 0 : i32
    %c0_i32_1 = arith.constant 0 : i32
    return %arg0, %arg1, %c0_i32, %c0_i32_0 : i32, i32, i32, i32
  }
}

</mosaic_0001>

<llo_original>
// kernel: conv3x3_bn_relu.3
$region0: #{conv3x3_bn_relu.3}
  #allocation0 [shape = 'u32[]', space=smem, size = 0x4, offset = 0x4, fixed_abs, tag = 'smem constant byte address 0x4 - core index']
  #allocation1 [shape = 'u32[144,128]{1,0:T(1,128)}', space=vmem, size = 0x12000, scoped, tag = 'internal scratch']
  #allocation2 [shape = 'bf16[10,18,4]{2,1,0:T(8,128)(2,1)}', space=vmem, size = 0xf000, scoped, tag = 'scratch operand']
  %s0 = inlined_call_operand.vmem [shape: bf16[2,16,16,4], index: 0, kind: input, shape index: {}, may-alias: {0,1,2}]
  %s1 = inlined_call_operand.vmem [shape: bf16[2,16,16,4], index: 1, kind: input, shape index: {}, may-alias: {0,1,2}]
  %s2 = inlined_call_operand.vmem [shape: bf16[2,16,16,4], index: 2, kind: input, shape index: {}, may-alias: {0,1,2}]
  %s3 = inlined_call_operand.vmem [shape: bf16[9,4,128], index: 3, kind: input, shape index: {}]
  %s4 = inlined_call_operand.vmem [shape: f32[1,128], index: 4, kind: input, shape index: {}]
  %s5 = inlined_call_operand.vmem [shape: f32[1,128], index: 5, kind: input, shape index: {}]
  %s6 = inlined_call_operand.vmem [shape: f32[2,16,16,128], index: 6, kind: output, shape index: {}]
  %s7 = sld [smem:[#allocation0]]
  $region57: #{conv3x3_bn_relu.3} parent=0
    _
  %s9 = ssub.s32 1, %s7
  %s10 = scalar_select 0, %s9, %s7
  loop: start=0, step=1, limit=6
  $region2: #{conv3x3_bn_relu.3} parent=0 // loop_pre_header
    _
  $region3: #{conv3x3_bn_relu.3} parent=0 // loop_header
    %s12 = sphi 0, %s16
    %p13 = scmp.ge.s32.totalorder %s12, 6
    %s19 = sphi 0, %s31
    %s20 = sphi 0, %s27
    %s21 = sphi 0, %s19
    %s22 = sphi 0, %s20
    %s23 = sphi 0, %s21
    %s24 = sphi 0, %s22
    %s36 = sphi 0, %s38
    %s39 = sphi 0, %s36
    %s40 = sphi 0, %s39
    %s56 = sphi 0, %s40
    %s72 = sphi 0, %s74
    %s75 = sphi 0, %s72
    %s76 = sphi 0, %s75
    %s92 = sphi 0, %s76
    %s108 = sphi 0, %s110
    %s111 = sphi 0, %s108
    %s112 = sphi 0, %s111
    %s128 = sphi 0, %s112
    %s132 = sphi 0, %s132
    %s134 = sphi 0, %s132
    %s135 = sphi 0, %s134
    %s149 = sphi 0, %s135
    %s153 = sphi 0, %s153
    %s155 = sphi 0, %s153
    %s156 = sphi 0, %s155
    %s170 = sphi 0, %s156
    %s174 = sphi 0, %s174
    %s176 = sphi 0, %s174
    %s177 = sphi 0, %s176
    %s191 = sphi 0, %s177
    %s199 = sphi 0, %s201
    %s202 = sphi 0, %s199
    %s203 = sphi 0, %s202
    %s219 = sphi 0, %s203
  $region4: #{conv3x3_bn_relu.3} parent=0 // loop_header_branch
    %15 = sbr.rel (%p13) target = $region8
  $region5: #{conv3x3_bn_relu.3} parent=0 // loop_body
    %s17 = ssub.s32 %s12, 1
    %s18 = ssub.s32 %s12, 2
    %s25 = sadd.s32 1, %s20
    %p26 = scmp.ge.s32.totalorder %s25, 2
    %s27 = scalar_select %p26, 0, %s25
    %s28 = sadd.s32 1, %s19
    %s29 = scalar_select %p26, %s28, %s19
    %p30 = scmp.ge.s32.totalorder %s29, 2
    %s31 = scalar_select %p30, 0, %s29
    %s32 = ssub.s32 %s19, %s31
    %s33 = ssub.s32 %s20, %s27
    %s34 = sor.u32 %s32, %s33
    %p35 = scmp.eq.s32.totalorder %s34, 0
    %s37 = sadd.s32 %s36, 1
    %s38 = scalar_select %p35, %s36, %s37
    %p41 = pneg %p35
    %p42 = scmp.eq.s32.totalorder %s12, 3
    %p43 = por %p41, %p42
    %p44 = scmp.ne.s32.totalorder %s36, %s39
    %p45 = scmp.eq.s32.totalorder %s12, 0
    %p46 = por %p44, %p45
    %p47 = scmp.ne.s32.totalorder %s36, %s39
    %p48 = scmp.eq.s32.totalorder %s17, 3
    %p49 = por %p47, %p48
    %p50 = scmp.ne.s32.totalorder %s39, %s40
    %p51 = scmp.eq.s32.totalorder %s17, 0
    %p52 = por %p50, %p51
    %p53 = scmp.ne.s32.totalorder %s39, %s40
    %p54 = scmp.eq.s32.totalorder %s18, 3
    %p55 = por %p53, %p54
    %p57 = scmp.ne.s32.totalorder %s40, %s56
    %p58 = scmp.eq.s32.totalorder %s18, 0
    %p59 = por %p57, %p58
    %s60 = smul.u32 %s20, 8
    %s61 = ssub.s32 %s60, 1
    %p62 = scmp.gt.s32.totalorder %s61, 0
    %s63 = scalar_select %p62, %s61, 0
    %s64 = smul.u32 %s27, 8
    %s65 = ssub.s32 %s64, 1
    %p66 = scmp.gt.s32.totalorder %s65, 0
    %s67 = scalar_select %p66, %s65, 0
    %s68 = ssub.s32 %s19, %s31
    %s69 = ssub.s32 %s63, %s67
    %s70 = sor.u32 %s68, %s69
    %p71 = scmp.eq.s32.totalorder %s70, 0
    %s73 = sadd.s32 %s72, 1
    %s74 = scalar_select %p71, %s72, %s73
    %p77 = pneg %p71
    %p78 = scmp.eq.s32.totalorder %s12, 3
    %p79 = por %p77, %p78
    %p80 = scmp.ne.s32.totalorder %s72, %s75
    %p81 = scmp.eq.s32.totalorder %s12, 0
    %p82 = por %p80, %p81
    %p83 = scmp.ne.s32.totalorder %s72, %s75
    %p84 = scmp.eq.s32.totalorder %s17, 3
    %p85 = por %p83, %p84
    %p86 = scmp.ne.s32.totalorder %s75, %s76
    %p87 = scmp.eq.s32.totalorder %s17, 0
    %p88 = por %p86, %p87
    %p89 = scmp.ne.s32.totalorder %s75, %s76
    %p90 = scmp.eq.s32.totalorder %s18, 3
    %p91 = por %p89, %p90
    %p93 = scmp.ne.s32.totalorder %s76, %s92
    %p94 = scmp.eq.s32.totalorder %s18, 0
    %p95 = por %p93, %p94
    %s96 = smul.u32 %s20, 8
    %s97 = sadd.s32 %s96, 8
    %p98 = scmp.lt.s32.totalorder %s97, 15
    %s99 = scalar_select %p98, %s97, 15
    %s100 = smul.u32 %s27, 8
    %s101 = sadd.s32 %s100, 8
    %p102 = scmp.lt.s32.totalorder %s101, 15
    %s103 = scalar_select %p102, %s101, 15
    %s104 = ssub.s32 %s19, %s31
    %s105 = ssub.s32 %s99, %s103
    %s106 = sor.u32 %s104, %s105
    %p107 = scmp.eq.s32.totalorder %s106, 0
    %s109 = sadd.s32 %s108, 1
    %s110 = scalar_select %p107, %s108, %s109
    %p113 = pneg %p107
    %p114 = scmp.eq.s32.totalorder %s12, 3
    %p115 = por %p113, %p114
    %p116 = scmp.ne.s32.totalorder %s108, %s111
    %p117 = scmp.eq.s32.totalorder %s12, 0
    %p118 = por %p116, %p117
    %p119 = scmp.ne.s32.totalorder %s108, %s111
    %p120 = scmp.eq.s32.totalorder %s17, 3
    %p121 = por %p119, %p120
    %p122 = scmp.ne.s32.totalorder %s111, %s112
    %p123 = scmp.eq.s32.totalorder %s17, 0
    %p124 = por %p122, %p123
    %p125 = scmp.ne.s32.totalorder %s111, %s112
    %p126 = scmp.eq.s32.totalorder %s18, 3
    %p127 = por %p125, %p126
    %p129 = scmp.ne.s32.totalorder %s112, %s128
    %p130 = scmp.eq.s32.totalorder %s18, 0
    %p131 = por %p129, %p130
    %s133 = sadd.s32 %s132, 1
    %p136 = scmp.eq.s32.totalorder %s12, 3
    %p137 = scmp.ne.s32.totalorder %s132, %s134
    %p138 = scmp.eq.s32.totalorder %s12, 0
    %p139 = por %p137, %p138
    %p140 = scmp.ne.s32.totalorder %s132, %s134
    %p141 = scmp.eq.s32.totalorder %s17, 3
    %p142 = por %p140, %p141
    %p143 = scmp.ne.s32.totalorder %s134, %s135
    %p144 = scmp.eq.s32.totalorder %s17, 0
    %p145 = por %p143, %p144
    %p146 = scmp.ne.s32.totalorder %s134, %s135
    %p147 = scmp.eq.s32.totalorder %s18, 3
    %p148 = por %p146, %p147
    %p150 = scmp.ne.s32.totalorder %s135, %s149
    %p151 = scmp.eq.s32.totalorder %s18, 0
    %p152 = por %p150, %p151
    %s154 = sadd.s32 %s153, 1
    %p157 = scmp.eq.s32.totalorder %s12, 3
    %p158 = scmp.ne.s32.totalorder %s153, %s155
    %p159 = scmp.eq.s32.totalorder %s12, 0
    %p160 = por %p158, %p159
    %p161 = scmp.ne.s32.totalorder %s153, %s155
    %p162 = scmp.eq.s32.totalorder %s17, 3
    %p163 = por %p161, %p162
    %p164 = scmp.ne.s32.totalorder %s155, %s156
    %p165 = scmp.eq.s32.totalorder %s17, 0
    %p166 = por %p164, %p165
    %p167 = scmp.ne.s32.totalorder %s155, %s156
    %p168 = scmp.eq.s32.totalorder %s18, 3
    %p169 = por %p167, %p168
    %p171 = scmp.ne.s32.totalorder %s156, %s170
    %p172 = scmp.eq.s32.totalorder %s18, 0
    %p173 = por %p171, %p172
    %s175 = sadd.s32 %s174, 1
    %p178 = scmp.eq.s32.totalorder %s12, 3
    %p179 = scmp.ne.s32.totalorder %s174, %s176
    %p180 = scmp.eq.s32.totalorder %s12, 0
    %p181 = por %p179, %p180
    %p182 = scmp.ne.s32.totalorder %s174, %s176
    %p183 = scmp.eq.s32.totalorder %s17, 3
    %p184 = por %p182, %p183
    %p185 = scmp.ne.s32.totalorder %s176, %s177
    %p186 = scmp.eq.s32.totalorder %s17, 0
    %p187 = por %p185, %p186
    %p188 = scmp.ne.s32.totalorder %s176, %s177
    %p189 = scmp.eq.s32.totalorder %s18, 3
    %p190 = por %p188, %p189
    %p192 = scmp.ne.s32.totalorder %s177, %s191
    %p193 = scmp.eq.s32.totalorder %s18, 0
    %p194 = por %p192, %p193
    %s195 = ssub.s32 %s19, %s31
    %s196 = ssub.s32 %s20, %s27
    %s197 = sor.u32 %s195, %s196
    %p198 = scmp.eq.s32.totalorder %s197, 0
    %s200 = sadd.s32 %s199, 1
    %s201 = scalar_select %p198, %s199, %s200
    %p204 = pneg %p198
    %p205 = scmp.eq.s32.totalorder %s12, 3
    %p206 = por %p204, %p205
    %p207 = scmp.ne.s32.totalorder %s199, %s202
    %p208 = scmp.eq.s32.totalorder %s12, 0
    %p209 = por %p207, %p208
    %p210 = scmp.ne.s32.totalorder %s199, %s202
    %p211 = scmp.eq.s32.totalorder %s17, 3
    %p212 = por %p210, %p211
    %p213 = scmp.ne.s32.totalorder %s202, %s203
    %p214 = scmp.eq.s32.totalorder %s17, 0
    %p215 = por %p213, %p214
    %p216 = scmp.ne.s32.totalorder %s202, %s203
    %p217 = scmp.eq.s32.totalorder %s18, 3
    %p218 = por %p216, %p217
    %p220 = scmp.ne.s32.totalorder %s203, %s219
    %p221 = scmp.eq.s32.totalorder %s18, 0
    %p222 = por %p220, %p221
    %p223 = scmp.le.s32.totalorder 1, %s12
    %p224 = scmp.lt.s32.totalorder %s12, 5
    %p225 = pnand %p223, %p224
    %p226 = pneg %p225
    // Predicated region
    $region9: #{conv3x3_bn_relu.3} parent=5 // pred_check
      _
    $region10: #{conv3x3_bn_relu.3} parent=5 // pred_check_branch
      %228 = sbr.rel (%p225) target = $region12
    $region11: #{conv3x3_bn_relu.3} parent=5 // pred_region
      %s229 = ssub.s32 %s12, 1
      // Predicated region
      $region13: #{conv3x3_bn_relu.3} parent=11 // pred_check
        %p230 = pneg %p145
      $region14: #{conv3x3_bn_relu.3} parent=11 // pred_check_branch
        %232 = sbr.rel (%p230) target = $region16
      $region15: #{conv3x3_bn_relu.3} parent=11 // pred_region
        _
      $region16: #{conv3x3_bn_relu.3} parent=11 // pred_fallthru
        _
      // Predicated region
      $region17: #{conv3x3_bn_relu.3} parent=11 // pred_check
        %p233 = pneg %p166
      $region18: #{conv3x3_bn_relu.3} parent=11 // pred_check_branch
        %235 = sbr.rel (%p233) target = $region20
      $region19: #{conv3x3_bn_relu.3} parent=11 // pred_region
        _
      $region20: #{conv3x3_bn_relu.3} parent=11 // pred_fallthru
        _
      // Predicated region
      $region21: #{conv3x3_bn_relu.3} parent=11 // pred_check
        %p236 = pneg %p187
      $region22: #{conv3x3_bn_relu.3} parent=11 // pred_check_branch
        %238 = sbr.rel (%p236) target = $region24
      $region23: #{conv3x3_bn_relu.3} parent=11 // pred_region
        _
      $region24: #{conv3x3_bn_relu.3} parent=11 // pred_fallthru
        _
    $region12: #{conv3x3_bn_relu.3} parent=5 // pred_fallthru
      _
    %p239 = scmp.lt.s32.totalorder %s12, 4
    // Predicated region
    $region25: #{conv3x3_bn_relu.3} parent=5 // pred_check
      %p240 = pneg %p239
    $region26: #{conv3x3_bn_relu.3} parent=5 // pred_check_branch
      %242 = sbr.rel (%p240) target = $region28
    $region27: #{conv3x3_bn_relu.3} parent=5 // pred_region
      // Predicated region
      $region29: #{conv3x3_bn_relu.3} parent=27 // pred_check
        %p243 = pneg %p46
      $region30: #{conv3x3_bn_relu.3} parent=27 // pred_check_branch
        %245 = sbr.rel (%p243) target = $region32
      $region31: #{conv3x3_bn_relu.3} parent=27 // pred_region
        %s246 = smul.u32 8, %s20
        %p247 = scmp.lt.s32.totalorder %s19, 1
        %s248 = scalar_select %p247, %s19, 1
        %p249 = scmp.lt.s32.totalorder %s246, 15
        %s250 = scalar_select %p249, %s246, 15
        %s251 = smul.addr %s250, 2
        %s252 = smul.addr %s248, 32
        %s253 = sadd.s32 %s251, %s252
        %s254 = smul.addr %s253, 4
        %s255 = scalar_lea.vmem %s0, %s254
        %s256 = smul.u32 8, %s20
      $region32: #{conv3x3_bn_relu.3} parent=27 // pred_fallthru
        _
      // Predicated region
      $region33: #{conv3x3_bn_relu.3} parent=27 // pred_check
        %p257 = pneg %p82
      $region34: #{conv3x3_bn_relu.3} parent=27 // pred_check_branch
        %259 = sbr.rel (%p257) target = $region36
      $region35: #{conv3x3_bn_relu.3} parent=27 // pred_region
        %s260 = smul.u32 %s20, 8
        %s261 = ssub.s32 %s260, 1
        %p262 = scmp.gt.s32.totalorder %s261, 0
        %s263 = scalar_select %p262, %s261, 0
        %p264 = scmp.lt.s32.totalorder %s19, 1
        %s265 = scalar_select %p264, %s19, 1
        %p266 = scmp.lt.s32.totalorder %s263, 15
        %s267 = scalar_select %p266, %s263, 15
        %s268 = smul.addr %s267, 2
        %s269 = smul.addr %s265, 32
        %s270 = sadd.s32 %s268, %s269
        %s271 = smul.addr %s270, 4
        %s272 = scalar_lea.vmem %s1, %s271
        %s273 = smul.u32 %s20, 8
        %s274 = ssub.s32 %s273, 1
        %p275 = scmp.gt.s32.totalorder %s274, 0
        %s276 = scalar_select %p275, %s274, 0
      $region36: #{conv3x3_bn_relu.3} parent=27 // pred_fallthru
        _
      // Predicated region
      $region37: #{conv3x3_bn_relu.3} parent=27 // pred_check
        %p277 = pneg %p118
      $region38: #{conv3x3_bn_relu.3} parent=27 // pred_check_branch
        %279 = sbr.rel (%p277) target = $region40
      $region39: #{conv3x3_bn_relu.3} parent=27 // pred_region
        %s280 = smul.u32 %s20, 8
        %s281 = sadd.s32 %s280, 8
        %p282 = scmp.lt.s32.totalorder %s281, 15
        %s283 = scalar_select %p282, %s281, 15
        %p284 = scmp.lt.s32.totalorder %s19, 1
        %s285 = scalar_select %p284, %s19, 1
        %p286 = scmp.lt.s32.totalorder %s283, 15
        %s287 = scalar_select %p286, %s283, 15
        %s288 = smul.addr %s287, 2
        %s289 = smul.addr %s285, 32
        %s290 = sadd.s32 %s288, %s289
        %s291 = smul.addr %s290, 4
        %s292 = scalar_lea.vmem %s2, %s291
        %s293 = smul.u32 %s20, 8
        %s294 = sadd.s32 %s293, 8
        %p295 = scmp.lt.s32.totalorder %s294, 15
        %s296 = scalar_select %p295, %s294, 15
      $region40: #{conv3x3_bn_relu.3} parent=27 // pred_fallthru
        _
    $region28: #{conv3x3_bn_relu.3} parent=5 // pred_fallthru
      _
    %p297 = scmp.le.s32.totalorder 1, %s12
    %p298 = scmp.lt.s32.totalorder %s12, 5
    %p299 = pnand %p297, %p298
    %p300 = pneg %p299
    // Predicated region
    $region41: #{conv3x3_bn_relu.3} parent=5 // pred_check
      _
    $region42: #{conv3x3_bn_relu.3} parent=5 // pred_check_branch
      %302 = sbr.rel (%p299) target = $region44
    $region43: #{conv3x3_bn_relu.3} parent=5 // pred_region
      %s303 = ssub.s32 %s12, 1
      %s304 = smul.u32 8, %s22
      %p305 = scmp.lt.s32.totalorder %s21, 1
      %s306 = scalar_select %p305, %s21, 1
      %p307 = scmp.lt.s32.totalorder %s304, 15
      %s308 = scalar_select %p307, %s304, 15
      %s309 = smul.addr %s308, 2
      %s310 = smul.addr %s306, 32
      %s311 = sadd.s32 %s309, %s310
      %s312 = smul.addr %s311, 4
      %s313 = scalar_lea.vmem %s0, %s312
      %p314 = pneg %p52
      %p315 = pneg %p49
      %s316 = smul.u32 %s22, 8
      %s317 = ssub.s32 %s316, 1
      %p318 = scmp.gt.s32.totalorder %s317, 0
      %s319 = scalar_select %p318, %s317, 0
      %p320 = scmp.lt.s32.totalorder %s21, 1
      %s321 = scalar_select %p320, %s21, 1
      %p322 = scmp.lt.s32.totalorder %s319, 15
      %s323 = scalar_select %p322, %s319, 15
      %s324 = smul.addr %s323, 2
      %s325 = smul.addr %s321, 32
      %s326 = sadd.s32 %s324, %s325
      %s327 = smul.addr %s326, 4
      %s328 = scalar_lea.vmem %s1, %s327
      %p329 = pneg %p88
      %p330 = pneg %p85
      %s331 = smul.u32 %s22, 8
      %s332 = sadd.s32 %s331, 8
      %p333 = scmp.lt.s32.totalorder %s332, 15
      %s334 = scalar_select %p333, %s332, 15
      %p335 = scmp.lt.s32.totalorder %s21, 1
      %s336 = scalar_select %p335, %s21, 1
      %p337 = scmp.lt.s32.totalorder %s334, 15
      %s338 = scalar_select %p337, %s334, 15
      %s339 = smul.addr %s338, 2
      %s340 = smul.addr %s336, 32
      %s341 = sadd.s32 %s339, %s340
      %s342 = smul.addr %s341, 4
      %s343 = scalar_lea.vmem %s2, %s342
      %p344 = pneg %p124
      %p345 = pneg %p121
      %p346 = pneg %p145
      %p347 = pneg %p142
      %p348 = pneg %p166
      %p349 = pneg %p163
      %p350 = pneg %p187
      %p351 = pneg %p184
      %p352 = pneg %p215
      %p353 = pneg %p212
      %s354 = smul.u32 8, %s22
      %p355 = scmp.lt.s32.totalorder %s21, 1
      %s356 = scalar_select %p355, %s21, 1
      %p357 = scmp.lt.s32.totalorder %s354, 15
      %s358 = scalar_select %p357, %s354, 15
      %s359 = smul.addr %s358, 2
      %s360 = smul.addr %s356, 32
      %s361 = sadd.s32 %s359, %s360
      %s362 = smul.addr %s361, 8
      %s363 = scalar_lea.vmem %s6, %s362
      %s364 = smul.u32 8, %s22
      %p365 = scmp.lt.s32.totalorder %s21, 1
      %s366 = scalar_select %p365, %s21, 1
      %p367 = scmp.lt.s32.totalorder %s364, 15
      %s368 = scalar_select %p367, %s364, 15
      %s369 = smul.addr %s368, 2
      %s370 = smul.addr %s366, 32
      %s371 = sadd.s32 %s369, %s370
      %s372 = smul.addr %s371, 4
      %s373 = scalar_lea.vmem %s0, %s372
      %s374 = smul.u32 8, %s22
      %s375 = smul.u32 %s22, 8
      %s376 = ssub.s32 %s375, 1
      %p377 = scmp.gt.s32.totalorder %s376, 0
      %s378 = scalar_select %p377, %s376, 0
      %p379 = scmp.lt.s32.totalorder %s21, 1
      %s380 = scalar_select %p379, %s21, 1
      %p381 = scmp.lt.s32.totalorder %s378, 15
      %s382 = scalar_select %p381, %s378, 15
      %s383 = smul.addr %s382, 2
      %s384 = smul.addr %s380, 32
      %s385 = sadd.s32 %s383, %s384
      %s386 = smul.addr %s385, 4
      %s387 = scalar_lea.vmem %s1, %s386
      %s388 = smul.u32 %s22, 8
      %s389 = ssub.s32 %s388, 1
      %p390 = scmp.gt.s32.totalorder %s389, 0
      %s391 = scalar_select %p390, %s389, 0
      %s392 = smul.u32 %s22, 8
      %s393 = sadd.s32 %s392, 8
      %p394 = scmp.lt.s32.totalorder %s393, 15
      %s395 = scalar_select %p394, %s393, 15
      %p396 = scmp.lt.s32.totalorder %s21, 1
      %s397 = scalar_select %p396, %s21, 1
      %p398 = scmp.lt.s32.totalorder %s395, 15
      %s399 = scalar_select %p398, %s395, 15
      %s400 = smul.addr %s399, 2
      %s401 = smul.addr %s397, 32
      %s402 = sadd.s32 %s400, %s401
      %s403 = smul.addr %s402, 4
      %s404 = scalar_lea.vmem %s2, %s403
      %s405 = smul.u32 %s22, 8
      %s406 = sadd.s32 %s405, 8
      %p407 = scmp.lt.s32.totalorder %s406, 15
      %s408 = scalar_select %p407, %s406, 15
      %s409 = smul.u32 8, %s22
      %p410 = scmp.lt.s32.totalorder %s21, 1
      %s411 = scalar_select %p410, %s21, 1
      %p412 = scmp.lt.s32.totalorder %s409, 15
      %s413 = scalar_select %p412, %s409, 15
      %s414 = smul.addr %s413, 2
      %s415 = smul.addr %s411, 32
      %s416 = sadd.s32 %s414, %s415
      %s417 = smul.addr %s416, 8
      %s418 = scalar_lea.vmem %s6, %s417
      %s419 = smul.u32 8, %s22
      %v421 = vld [vmem:[%s373] sm:$0xf]
      %v422 = vld [vmem:[%s373 + $0x4] sm:$0xf]
      %v423 = vld [vmem:[%s373 + $0x8] sm:$0xf]
      %v424 = vld [vmem:[%s373 + $0xc] sm:$0xf]
      %v425 = vld [vmem:[%s373 + $0x10] sm:$0xf]
      %v426 = vld [vmem:[%s373 + $0x14] sm:$0xf]
      %v427 = vld [vmem:[%s373 + $0x18] sm:$0xf]
      %v428 = vld [vmem:[%s373 + $0x1c] sm:$0xf]
      %v429 = vld [vmem:[%s373 + $0x20] sm:$0xf]
      %v430 = vld [vmem:[%s373 + $0x24] sm:$0xf]
      %v431 = vld [vmem:[%s373 + $0x28] sm:$0xf]
      %v432 = vld [vmem:[%s373 + $0x2c] sm:$0xf]
      %v433 = vld [vmem:[%s373 + $0x30] sm:$0xf]
      %v434 = vld [vmem:[%s373 + $0x34] sm:$0xf]
      %v435 = vld [vmem:[%s373 + $0x38] sm:$0xf]
      %v436 = vld [vmem:[%s373 + $0x3c] sm:$0xf]
      %vm437 = vsmask.f32 256
      %vm438 = vsmask.f32 4368
      %vm439 = vmor %vm437, %vm438
      %v441 = vshrl.u32 %v421, 16
      %v443 = vrot.slane %v441, 7
      %v444 = vshll.u32 %v421, 16
      %v446 = vor.u32 %v443, %v444
      %v447 = vrot.slane %v443, 4
      %v449 = vshrl.u32 %v422, 16
      %v451 = vrot.slane %v449, 7
      %v452 = vshll.u32 %v422, 16
      %v454 = vor.u32 %v451, %v452
      %v455 = vsel %vm439, %v447, %v454
      %v456 = vrot.slane %v451, 4
      %v458 = vshrl.u32 %v423, 16
      %v460 = vrot.slane %v458, 7
      %v461 = vshll.u32 %v423, 16
      %v463 = vor.u32 %v460, %v461
      %v464 = vrot.slane %v460, 4
      %v466 = vshrl.u32 %v424, 16
      %v468 = vrot.slane %v466, 7
      %v469 = vshll.u32 %v424, 16
      %v471 = vor.u32 %v468, %v469
      %v472 = vsel %vm439, %v464, %v471
      %v473 = vrot.slane %v468, 4
      %v475 = vshrl.u32 %v425, 16
      %v477 = vrot.slane %v475, 7
      %v478 = vshll.u32 %v425, 16
      %v480 = vor.u32 %v477, %v478
      %v481 = vrot.slane %v477, 4
      %v483 = vshrl.u32 %v426, 16
      %v485 = vrot.slane %v483, 7
      %v486 = vshll.u32 %v426, 16
      %v488 = vor.u32 %v485, %v486
      %v489 = vsel %vm439, %v481, %v488
      %v490 = vrot.slane %v485, 4
      %v492 = vshrl.u32 %v427, 16
      %v494 = vrot.slane %v492, 7
      %v495 = vshll.u32 %v427, 16
      %v497 = vor.u32 %v494, %v495
      %v498 = vrot.slane %v494, 4
      %v500 = vshrl.u32 %v428, 16
      %v502 = vrot.slane %v500, 7
      %v503 = vshll.u32 %v428, 16
      %v505 = vor.u32 %v502, %v503
      %v506 = vsel %vm439, %v498, %v505
      %v507 = vrot.slane %v502, 4
      %v509 = vshrl.u32 %v429, 16
      %v511 = vrot.slane %v509, 7
      %v512 = vshll.u32 %v429, 16
      %v514 = vor.u32 %v511, %v512
      %v515 = vrot.slane %v511, 4
      %v517 = vshrl.u32 %v430, 16
      %v519 = vrot.slane %v517, 7
      %v520 = vshll.u32 %v430, 16
      %v522 = vor.u32 %v519, %v520
      %v523 = vsel %vm439, %v515, %v522
      %v524 = vrot.slane %v519, 4
      %v526 = vshrl.u32 %v431, 16
      %v528 = vrot.slane %v526, 7
      %v529 = vshll.u32 %v431, 16
      %v531 = vor.u32 %v528, %v529
      %v532 = vrot.slane %v528, 4
      %v534 = vshrl.u32 %v432, 16
      %v536 = vrot.slane %v534, 7
      %v537 = vshll.u32 %v432, 16
      %v539 = vor.u32 %v536, %v537
      %v540 = vsel %vm439, %v532, %v539
      %v541 = vrot.slane %v536, 4
      %v543 = vshrl.u32 %v433, 16
      %v545 = vrot.slane %v543, 7
      %v546 = vshll.u32 %v433, 16
      %v548 = vor.u32 %v545, %v546
      %v549 = vrot.slane %v545, 4
      %v551 = vshrl.u32 %v434, 16
      %v553 = vrot.slane %v551, 7
      %v554 = vshll.u32 %v434, 16
      %v556 = vor.u32 %v553, %v554
      %v557 = vsel %vm439, %v549, %v556
      %v558 = vrot.slane %v553, 4
      %v560 = vshrl.u32 %v435, 16
      %v562 = vrot.slane %v560, 7
      %v563 = vshll.u32 %v435, 16
      %v565 = vor.u32 %v562, %v563
      %v566 = vrot.slane %v562, 4
      %v568 = vshrl.u32 %v436, 16
      %v570 = vrot.slane %v568, 7
      %v571 = vshll.u32 %v436, 16
      %v573 = vor.u32 %v570, %v571
      %v574 = vsel %vm439, %v566, %v573
      %v575 = vrot.slane %v570, 4
      %s600 = scalar_lea.vmem [#allocation2], 12
      %vm601 = vcmask 27648
      %vm602 = vsmask.f32 7938
      %vm603 = vmand %vm601, %vm602
      %v604 = vld [vmem:[%s600] sm:$0xf]
      %v605 = vsel %vm603, %v446, %v604
      %606 = vst [vmem:[%s600] sm:$0xf] %v605
      %vm607 = vcmask 27648
      %608 = vst.msk [vmem:[%s600 + $0x4] sm:$0xf] %vm607, %v455
      %vm609 = vcmask 24576
      %vm610 = vmand %vm609, %vm437
      %v611 = vld [vmem:[%s600 + $0x8] sm:$0x1]
      %v612 = vsel %vm610, %v456, %v611
      %613 = vst [vmem:[%s600 + $0x8] sm:$0x1] %v612
      %v614 = vld [vmem:[%s600 + $0xc] sm:$0xf]
      %v615 = vsel %vm603, %v463, %v614
      %616 = vst [vmem:[%s600 + $0xc] sm:$0xf] %v615
      %617 = vst.msk [vmem:[%s600 + $0x10] sm:$0xf] %vm607, %v472
      %v618 = vld [vmem:[%s600 + $0x14] sm:$0x1]
      %v619 = vsel %vm610, %v473, %v618
      %620 = vst [vmem:[%s600 + $0x14] sm:$0x1] %v619
      %v621 = vld [vmem:[%s600 + $0x18] sm:$0xf]
      %v622 = vsel %vm603, %v480, %v621
      %623 = vst [vmem:[%s600 + $0x18] sm:$0xf] %v622
      %624 = vst.msk [vmem:[%s600 + $0x1c] sm:$0xf] %vm607, %v489
      %v625 = vld [vmem:[%s600 + $0x20] sm:$0x1]
      %v626 = vsel %vm610, %v490, %v625
      %627 = vst [vmem:[%s600 + $0x20] sm:$0x1] %v626
      %v628 = vld [vmem:[%s600 + $0x24] sm:$0xf]
      %v629 = vsel %vm603, %v497, %v628
      %630 = vst [vmem:[%s600 + $0x24] sm:$0xf] %v629
      %631 = vst.msk [vmem:[%s600 + $0x28] sm:$0xf] %vm607, %v506
      %v632 = vld [vmem:[%s600 + $0x2c] sm:$0x1]
      %v633 = vsel %vm610, %v507, %v632
      %634 = vst [vmem:[%s600 + $0x2c] sm:$0x1] %v633
      %v635 = vld [vmem:[%s600 + $0x30] sm:$0xf]
      %v636 = vsel %vm603, %v514, %v635
      %637 = vst [vmem:[%s600 + $0x30] sm:$0xf] %v636
      %638 = vst.msk [vmem:[%s600 + $0x34] sm:$0xf] %vm607, %v523
      %v639 = vld [vmem:[%s600 + $0x38] sm:$0x1]
      %v640 = vsel %vm610, %v524, %v639
      %641 = vst [vmem:[%s600 + $0x38] sm:$0x1] %v640
      %v642 = vld [vmem:[%s600 + $0x3c] sm:$0xf]
      %v643 = vsel %vm603, %v531, %v642
      %644 = vst [vmem:[%s600 + $0x3c] sm:$0xf] %v643
      %645 = vst.msk [vmem:[%s600 + $0x40] sm:$0xf] %vm607, %v540
      %v646 = vld [vmem:[%s600 + $0x44] sm:$0x1]
      %v647 = vsel %vm610, %v541, %v646
      %648 = vst [vmem:[%s600 + $0x44] sm:$0x1] %v647
      %v649 = vld [vmem:[%s600 + $0x48] sm:$0xf]
      %v650 = vsel %vm603, %v548, %v649
      %651 = vst [vmem:[%s600 + $0x48] sm:$0xf] %v650
      %652 = vst.msk [vmem:[%s600 + $0x4c] sm:$0xf] %vm607, %v557
      %v653 = vld [vmem:[%s600 + $0x50] sm:$0x1]
      %v654 = vsel %vm610, %v558, %v653
      %655 = vst [vmem:[%s600 + $0x50] sm:$0x1] %v654
      %v656 = vld [vmem:[%s600 + $0x54] sm:$0xf]
      %v657 = vsel %vm603, %v565, %v656
      %658 = vst [vmem:[%s600 + $0x54] sm:$0xf] %v657
      %659 = vst.msk [vmem:[%s600 + $0x58] sm:$0xf] %vm607, %v574
      %v660 = vld [vmem:[%s600 + $0x5c] sm:$0x1]
      %v661 = vsel %vm610, %v575, %v660
      %662 = vst [vmem:[%s600 + $0x5c] sm:$0x1] %v661
      %p663 = scmp.gt.s32.totalorder %s22, 0
      %s664 = scalar_select %p663, 1, 0
      %s665 = scvt.s32.f32 %s664
      %p667 = scmp.ne.f32.partialorder %s665, %s665
      %s668 = sshrl.u32 %s665, 16
      %s669 = sand.u32 %s668, 1
      %s670 = sadd.s32 32767, %s669
      %s671 = sadd.s32 %s665, %s670
      %s672 = sand.u32 %s671, 4294901760
      %s673 = scalar_select %p667, 2143289344, %s672
      %s675 = sshrl.u32 %s673, 16
      %p676 = scmp.lt.s32.totalorder %s22, 1
      %s677 = scalar_select %p676, 1, 0
      %s678 = scvt.s32.f32 %s677
      %p680 = scmp.ne.f32.partialorder %s678, %s678
      %s681 = sshrl.u32 %s678, 16
      %s682 = sand.u32 %s681, 1
      %s683 = sadd.s32 32767, %s682
      %s684 = sadd.s32 %s678, %s683
      %s685 = sand.u32 %s684, 4294901760
      %s686 = scalar_select %p680, 2143289344, %s685
      %s688 = sshrl.u32 %s686, 16
      %v689 = vld [vmem:[%s387] sm:$0xf]
      %v690 = vld [vmem:[%s387 + $0x4] sm:$0xf]
      %s691 = sshll.u32 %s675, 16
      %s692 = sor.u32 %s675, %s691
      %v693 = vstv %s692
      %v695 = vmul.bf16 %v689, %v693
      %v696 = vmul.bf16 %v690, %v693
      %v698 = vshrl.u32 %v695, 16
      %v700 = vrot.slane %v698, 7
      %v701 = vshll.u32 %v695, 16
      %v703 = vor.u32 %v700, %v701
      %v704 = vrot.slane %v700, 4
      %v706 = vshrl.u32 %v696, 16
      %v708 = vrot.slane %v706, 7
      %v709 = vshll.u32 %v696, 16
      %v711 = vor.u32 %v708, %v709
      %v712 = vsel %vm439, %v704, %v711
      %v713 = vrot.slane %v708, 4
      %v717 = vld [vmem:[#allocation2] sm:$0xf]
      %v718 = vsel %vm603, %v703, %v717
      %719 = vst [vmem:[#allocation2] sm:$0xf] %v718
      %720 = vst.msk [vmem:[#allocation2 + $0x4] sm:$0xf] %vm607, %v712
      %v721 = vld [vmem:[#allocation2 + $0x8] sm:$0x1]
      %v722 = vsel %vm610, %v713, %v721
      %723 = vst [vmem:[#allocation2 + $0x8] sm:$0x1] %v722
      %v724 = vld [vmem:[%s404] sm:$0xf]
      %v725 = vld [vmem:[%s404 + $0x4] sm:$0xf]
      %s726 = sshll.u32 %s688, 16
      %s727 = sor.u32 %s688, %s726
      %v728 = vstv %s727
      %v730 = vmul.bf16 %v724, %v728
      %v731 = vmul.bf16 %v725, %v728
      %v733 = vshrl.u32 %v730, 16
      %v735 = vrot.slane %v733, 7
      %v736 = vshll.u32 %v730, 16
      %v738 = vor.u32 %v735, %v736
      %v739 = vrot.slane %v735, 4
      %v741 = vshrl.u32 %v731, 16
      %v743 = vrot.slane %v741, 7
      %v744 = vshll.u32 %v731, 16
      %v746 = vor.u32 %v743, %v744
      %v747 = vsel %vm439, %v739, %v746
      %v748 = vrot.slane %v743, 4
      %s752 = scalar_lea.vmem [#allocation2], 108
      %v753 = vld [vmem:[%s752] sm:$0xf]
      %v754 = vsel %vm603, %v738, %v753
      %755 = vst [vmem:[%s752] sm:$0xf] %v754
      %756 = vst.msk [vmem:[%s752 + $0x4] sm:$0xf] %vm607, %v747
      %v757 = vld [vmem:[%s752 + $0x8] sm:$0x1]
      %v758 = vsel %vm610, %v748, %v757
      %759 = vst [vmem:[%s752 + $0x8] sm:$0x1] %v758
      %v760 = vld [vmem:[#allocation2] sm:$0x1]
      %v761 = vsel %vm610, 0, %v760
      %762 = vst [vmem:[#allocation2] sm:$0x1] %v761
      %v763 = vld [vmem:[#allocation2 + $0xc] sm:$0x1]
      %v764 = vsel %vm610, 0, %v763
      %765 = vst [vmem:[#allocation2 + $0xc] sm:$0x1] %v764
      %v766 = vld [vmem:[#allocation2 + $0x18] sm:$0x1]
      %v767 = vsel %vm610, 0, %v766
      %768 = vst [vmem:[#allocation2 + $0x18] sm:$0x1] %v767
      %v769 = vld [vmem:[#allocation2 + $0x24] sm:$0x1]
      %v770 = vsel %vm610, 0, %v769
      %771 = vst [vmem:[#allocation2 + $0x24] sm:$0x1] %v770
      %v772 = vld [vmem:[#allocation2 + $0x30] sm:$0x1]
      %v773 = vsel %vm610, 0, %v772
      %774 = vst [vmem:[#allocation2 + $0x30] sm:$0x1] %v773
      %v775 = vld [vmem:[#allocation2 + $0x3c] sm:$0x1]
      %v776 = vsel %vm610, 0, %v775
      %777 = vst [vmem:[#allocation2 + $0x3c] sm:$0x1] %v776
      %v778 = vld [vmem:[#allocation2 + $0x48] sm:$0x1]
      %v779 = vsel %vm610, 0, %v778
      %780 = vst [vmem:[#allocation2 + $0x48] sm:$0x1] %v779
      %v781 = vld [vmem:[#allocation2 + $0x54] sm:$0x1]
      %v782 = vsel %vm610, 0, %v781
      %783 = vst [vmem:[#allocation2 + $0x54] sm:$0x1] %v782
      %v784 = vld [vmem:[#allocation2 + $0x60] sm:$0x1]
      %v785 = vsel %vm610, 0, %v784
      %786 = vst [vmem:[#allocation2 + $0x60] sm:$0x1] %v785
      %v787 = vld [vmem:[#allocation2 + $0x6c] sm:$0x1]
      %v788 = vsel %vm610, 0, %v787
      %789 = vst [vmem:[#allocation2 + $0x6c] sm:$0x1] %v788
      %vm790 = vmand %vm609, %vm602
      %v791 = vld [vmem:[#allocation2 + $0x8] sm:$0x1]
      %v792 = vsel %vm790, 0, %v791
      %793 = vst [vmem:[#allocation2 + $0x8] sm:$0x1] %v792
      %v794 = vld [vmem:[#allocation2 + $0x14] sm:$0x1]
      %v795 = vsel %vm790, 0, %v794
      %796 = vst [vmem:[#allocation2 + $0x14] sm:$0x1] %v795
      %v797 = vld [vmem:[#allocation2 + $0x20] sm:$0x1]
      %v798 = vsel %vm790, 0, %v797
      %799 = vst [vmem:[#allocation2 + $0x20] sm:$0x1] %v798
      %v800 = vld [vmem:[#allocation2 + $0x2c] sm:$0x1]
      %v801 = vsel %vm790, 0, %v800
      %802 = vst [vmem:[#allocation2 + $0x2c] sm:$0x1] %v801
      %v803 = vld [vmem:[#allocation2 + $0x38] sm:$0x1]
      %v804 = vsel %vm790, 0, %v803
      %805 = vst [vmem:[#allocation2 + $0x38] sm:$0x1] %v804
      %v806 = vld [vmem:[#allocation2 + $0x44] sm:$0x1]
      %v807 = vsel %vm790, 0, %v806
      %808 = vst [vmem:[#allocation2 + $0x44] sm:$0x1] %v807
      %v809 = vld [vmem:[#allocation2 + $0x50] sm:$0x1]
      %v810 = vsel %vm790, 0, %v809
      %811 = vst [vmem:[#allocation2 + $0x50] sm:$0x1] %v810
      %v812 = vld [vmem:[#allocation2 + $0x5c] sm:$0x1]
      %v813 = vsel %vm790, 0, %v812
      %814 = vst [vmem:[#allocation2 + $0x5c] sm:$0x1] %v813
      %v815 = vld [vmem:[#allocation2 + $0x68] sm:$0x1]
      %v816 = vsel %vm790, 0, %v815
      %817 = vst [vmem:[#allocation2 + $0x68] sm:$0x1] %v816
      %v818 = vld [vmem:[#allocation2 + $0x74] sm:$0x1]
      %v819 = vsel %vm790, 0, %v818
      %820 = vst [vmem:[#allocation2 + $0x74] sm:$0x1] %v819
      %v821 = vld [vmem:[#allocation2] sm:$0xf]
      %v822 = vld [vmem:[#allocation2 + $0x4] sm:$0xf]
      %v823 = vld [vmem:[#allocation2 + $0xc] sm:$0xf]
      %v824 = vld [vmem:[#allocation2 + $0x10] sm:$0xf]
      %v825 = vld [vmem:[#allocation2 + $0x18] sm:$0xf]
      %v826 = vld [vmem:[#allocation2 + $0x1c] sm:$0xf]
      %v827 = vld [vmem:[#allocation2 + $0x24] sm:$0xf]
      %v828 = vld [vmem:[#allocation2 + $0x28] sm:$0xf]
      %v829 = vld [vmem:[#allocation2 + $0x30] sm:$0xf]
      %v830 = vld [vmem:[#allocation2 + $0x34] sm:$0xf]
      %v831 = vld [vmem:[#allocation2 + $0x3c] sm:$0xf]
      %v832 = vld [vmem:[#allocation2 + $0x40] sm:$0xf]
      %v833 = vld [vmem:[#allocation2 + $0x48] sm:$0xf]
      %v834 = vld [vmem:[#allocation2 + $0x4c] sm:$0xf]
      %v835 = vld [vmem:[#allocation2 + $0x54] sm:$0xf]
      %v836 = vld [vmem:[#allocation2 + $0x58] sm:$0xf]
      %v837 = vld [vmem:[%s3] sm:$0x3]
      %v838 = vld [vmem:[#allocation2 + $0x8] sm:$0x1]
      %v839 = vld [vmem:[#allocation2 + $0x14] sm:$0x1]
      %v840 = vld [vmem:[#allocation2 + $0x20] sm:$0x1]
      %v841 = vld [vmem:[#allocation2 + $0x2c] sm:$0x1]
      %v842 = vld [vmem:[#allocation2 + $0x38] sm:$0x1]
      %v843 = vld [vmem:[#allocation2 + $0x44] sm:$0x1]
      %v844 = vld [vmem:[#allocation2 + $0x50] sm:$0x1]
      %v845 = vld [vmem:[#allocation2 + $0x5c] sm:$0x1]
      %vm846 = vsmask.f32 3328
      %vm847 = vsmask.f32 7440
      %vm848 = vmor %vm846, %vm847
      %v850 = vshrl.u32 %v821, 16
      %v852 = vrot.slane %v850, 4
      %v853 = vshll.u32 %v821, 16
      %v855 = vrot.slane %v853, 5
      %v856 = vor.u32 %v852, %v855
      %v857 = vrot.slane %v856, 4
      %v859 = vshll.u32 %v822, 16
      %v861 = vrot.slane %v859, 5
      %v862 = vsel %vm848, %v857, %v861
      %v863 = vshrl.u32 %v822, 16
      %v865 = vrot.slane %v863, 4
      %v866 = vor.u32 %v865, %v861
      %v867 = vrot.slane %v866, 4
      %v869 = vshll.u32 %v838, 16
      %v871 = vrot.slane %v869, 5
      %v872 = vsel %vm848, %v867, %v871
      %v874 = vshrl.u32 %v823, 16
      %v876 = vrot.slane %v874, 4
      %v877 = vshll.u32 %v823, 16
      %v879 = vrot.slane %v877, 5
      %v880 = vor.u32 %v876, %v879
      %v881 = vrot.slane %v880, 4
      %v883 = vshll.u32 %v824, 16
      %v885 = vrot.slane %v883, 5
      %v886 = vsel %vm848, %v881, %v885
      %v887 = vshrl.u32 %v824, 16
      %v889 = vrot.slane %v887, 4
      %v890 = vor.u32 %v889, %v885
      %v891 = vrot.slane %v890, 4
      %v893 = vshll.u32 %v839, 16
      %v895 = vrot.slane %v893, 5
      %v896 = vsel %vm848, %v891, %v895
      %v898 = vshrl.u32 %v825, 16
      %v900 = vrot.slane %v898, 4
      %v901 = vshll.u32 %v825, 16
      %v903 = vrot.slane %v901, 5
      %v904 = vor.u32 %v900, %v903
      %v905 = vrot.slane %v904, 4
      %v907 = vshll.u32 %v826, 16
      %v909 = vrot.slane %v907, 5
      %v910 = vsel %vm848, %v905, %v909
      %v911 = vshrl.u32 %v826, 16
      %v913 = vrot.slane %v911, 4
      %v914 = vor.u32 %v913, %v909
      %v915 = vrot.slane %v914, 4
      %v917 = vshll.u32 %v840, 16
      %v919 = vrot.slane %v917, 5
      %v920 = vsel %vm848, %v915, %v919
      %v922 = vshrl.u32 %v827, 16
      %v924 = vrot.slane %v922, 4
      %v925 = vshll.u32 %v827, 16
      %v927 = vrot.slane %v925, 5
      %v928 = vor.u32 %v924, %v927
      %v929 = vrot.slane %v928, 4
      %v931 = vshll.u32 %v828, 16
      %v933 = vrot.slane %v931, 5
      %v934 = vsel %vm848, %v929, %v933
      %v935 = vshrl.u32 %v828, 16
      %v937 = vrot.slane %v935, 4
      %v938 = vor.u32 %v937, %v933
      %v939 = vrot.slane %v938, 4
      %v941 = vshll.u32 %v841, 16
      %v943 = vrot.slane %v941, 5
      %v944 = vsel %vm848, %v939, %v943
      %v946 = vshrl.u32 %v829, 16
      %v948 = vrot.slane %v946, 4
      %v949 = vshll.u32 %v829, 16
      %v951 = vrot.slane %v949, 5
      %v952 = vor.u32 %v948, %v951
      %v953 = vrot.slane %v952, 4
      %v955 = vshll.u32 %v830, 16
      %v957 = vrot.slane %v955, 5
      %v958 = vsel %vm848, %v953, %v957
      %v959 = vshrl.u32 %v830, 16
      %v961 = vrot.slane %v959, 4
      %v962 = vor.u32 %v961, %v957
      %v963 = vrot.slane %v962, 4
      %v965 = vshll.u32 %v842, 16
      %v967 = vrot.slane %v965, 5
      %v968 = vsel %vm848, %v963, %v967
      %v970 = vshrl.u32 %v831, 16
      %v972 = vrot.slane %v970, 4
      %v973 = vshll.u32 %v831, 16
      %v975 = vrot.slane %v973, 5
      %v976 = vor.u32 %v972, %v975
      %v977 = vrot.slane %v976, 4
      %v979 = vshll.u32 %v832, 16
      %v981 = vrot.slane %v979, 5
      %v982 = vsel %vm848, %v977, %v981
      %v983 = vshrl.u32 %v832, 16
      %v985 = vrot.slane %v983, 4
      %v986 = vor.u32 %v985, %v981
      %v987 = vrot.slane %v986, 4
      %v989 = vshll.u32 %v843, 16
      %v991 = vrot.slane %v989, 5
      %v992 = vsel %vm848, %v987, %v991
      %v994 = vshrl.u32 %v833, 16
      %v996 = vrot.slane %v994, 4
      %v997 = vshll.u32 %v833, 16
      %v999 = vrot.slane %v997, 5
      %v1000 = vor.u32 %v996, %v999
      %v1001 = vrot.slane %v1000, 4
      %v1003 = vshll.u32 %v834, 16
      %v1005 = vrot.slane %v1003, 5
      %v1006 = vsel %vm848, %v1001, %v1005
      %v1007 = vshrl.u32 %v834, 16
      %v1009 = vrot.slane %v1007, 4
      %v1010 = vor.u32 %v1009, %v1005
      %v1011 = vrot.slane %v1010, 4
      %v1013 = vshll.u32 %v844, 16
      %v1015 = vrot.slane %v1013, 5
      %v1016 = vsel %vm848, %v1011, %v1015
      %v1018 = vshrl.u32 %v835, 16
      %v1020 = vrot.slane %v1018, 4
      %v1021 = vshll.u32 %v835, 16
      %v1023 = vrot.slane %v1021, 5
      %v1024 = vor.u32 %v1020, %v1023
      %v1025 = vrot.slane %v1024, 4
      %v1027 = vshll.u32 %v836, 16
      %v1029 = vrot.slane %v1027, 5
      %v1030 = vsel %vm848, %v1025, %v1029
      %v1031 = vshrl.u32 %v836, 16
      %v1033 = vrot.slane %v1031, 4
      %v1034 = vor.u32 %v1033, %v1029
      %v1035 = vrot.slane %v1034, 4
      %v1037 = vshll.u32 %v845, 16
      %v1039 = vrot.slane %v1037, 5
      %v1040 = vsel %vm848, %v1035, %v1039
      %s1041 = scalar_lea.vmem %s3, 2
      %v1042 = vld [vmem:[%s1041] sm:$0x3]
      %v1043 = vunpack.c.l.b16 %v862
      %v1044 = vunpack.c.l.b16 %v872
      %v1045 = vunpack.c.l.b16 %v886
      %v1046 = vunpack.c.l.b16 %v896
      %v1047 = vunpack.c.l.b16 %v910
      %v1048 = vunpack.c.l.b16 %v920
      %v1049 = vunpack.c.l.b16 %v934
      %v1050 = vunpack.c.l.b16 %v944
      %v1051 = vunpack.c.l.b16 %v958
      %v1052 = vunpack.c.l.b16 %v968
      %v1053 = vunpack.c.l.b16 %v982
      %v1054 = vunpack.c.l.b16 %v992
      %v1055 = vunpack.c.l.b16 %v1006
      %v1056 = vunpack.c.l.b16 %v1016
      %v1057 = vunpack.c.l.b16 %v1030
      %v1058 = vunpack.c.l.b16 %v1040
      %v1059 = vpack.c.b16 %v1044, %v1043
      %v1060 = vpack.c.b16 %v1046, %v1045
      %v1061 = vpack.c.b16 %v1048, %v1047
      %v1062 = vpack.c.b16 %v1050, %v1049
      %v1063 = vpack.c.b16 %v1052, %v1051
      %v1064 = vpack.c.b16 %v1054, %v1053
      %v1065 = vpack.c.b16 %v1056, %v1055
      %v1066 = vpack.c.b16 %v1058, %v1057
      %vm1067 = vcmask 31744
      %v1069 = vsel %vm1067, %v1059, 0
      %v1072 = vsel %vm1067, %v1060, 0
      %v1075 = vsel %vm1067, %v1061, 0
      %v1078 = vsel %vm1067, %v1062, 0
      %v1081 = vsel %vm1067, %v1063, 0
      %v1084 = vsel %vm1067, %v1064, 0
      %v1087 = vsel %vm1067, %v1065, 0
      %v1090 = vsel %vm1067, %v1066, 0
      %vm1092 = vcmask 1041408
      %v1094 = vsel %vm1092, %v1042, 0
      %1096 = vmatprep.subr.bf16.mxu0 0
      %1097 = vmatpush1.bf16.msra.mxu0 0
      %1098 = vmatprep.subr.bf16.mxu0 0
      %1099 = vmatpush1.bf16.msra.mxu0 0
      %1100 = vmatprep.subr.bf16.mxu0 0
      %1101 = vmatpush1.bf16.msra.mxu0 0
      %1102 = vmatprep.subr.bf16.mxu0 0
      %1103 = vmatpush1.bf16.msra.mxu0 0
      %1104 = vmatprep.subr.bf16.mxu0 0
      %1105 = vmatpush1.bf16.msra.mxu0 0
      %1106 = vmatprep.subr.bf16.mxu0 0
      %1107 = vmatpush1.bf16.msra.mxu0 0
      %1108 = vmatprep.subr.bf16.mxu0 0
      %1109 = vmatpush1.bf16.msra.mxu0 0
      %1110 = vmatprep.subr.bf16.mxu0 0
      %1111 = vmatpush1.bf16.msra.mxu0 %v1094
      %1112 = vmatprep.subr.bf16.mxu0 0
      %1113 = vmatpush2.bf16.msra.mxu0 0
      %1114 = vmatprep.subr.bf16.mxu0 0
      %1115 = vmatpush2.bf16.msra.mxu0 0
      %1116 = vmatprep.subr.bf16.mxu0 0
      %1117 = vmatpush2.bf16.msra.mxu0 0
      %1118 = vmatprep.subr.bf16.mxu0 0
      %1119 = vmatpush2.bf16.msra.mxu0 0
      %1120 = vmatprep.subr.bf16.mxu0 0
      %1121 = vmatpush2.bf16.msra.mxu0 0
      %1122 = vmatprep.subr.bf16.mxu0 0
      %1123 = vmatpush2.bf16.msra.mxu0 0
      %1124 = vmatprep.subr.bf16.mxu0 0
      %1125 = vmatpush2.bf16.msra.mxu0 0
      %1126 = vmatprep.subr.bf16.mxu0 0
      %1127 = vmatpush2.bf16.msra.mxu0 0
      %1128 = vmatprep.mubr.bf16.mxu0 0
      %1129 = vmatmul.mubr.bf16.gmra.mxu0 %v1069
      %v1130 = vpop.f32.mrf.mxu0
      %v1131 = vadd.f32 0.0, %v1130
      %v1132 = vpop.f32.mrf.mxu0
      %v1133 = vpop.f32.mrf.mxu0
      %v1134 = vadd.f32 0.0, %v1133
      %v1135 = vpop.f32.mrf.mxu0
      %1136 = vmatprep.mubr.bf16.mxu0 0
      %1137 = vmatmul.mubr.bf16.gmra.mxu0 %v1072
      %v1138 = vpop.f32.mrf.mxu0
      %v1139 = vadd.f32 0.0, %v1138
      %v1140 = vpop.f32.mrf.mxu0
      %v1141 = vpop.f32.mrf.mxu0
      %v1142 = vadd.f32 0.0, %v1141
      %v1143 = vpop.f32.mrf.mxu0
      %1144 = vmatprep.mubr.bf16.mxu0 0
      %1145 = vmatmul.mubr.bf16.gmra.mxu0 %v1075
      %v1146 = vpop.f32.mrf.mxu0
      %v1147 = vadd.f32 0.0, %v1146
      %v1148 = vpop.f32.mrf.mxu0
      %v1149 = vpop.f32.mrf.mxu0
      %v1150 = vadd.f32 0.0, %v1149
      %v1151 = vpop.f32.mrf.mxu0
      %1152 = vmatprep.mubr.bf16.mxu0 0
      %1153 = vmatmul.mubr.bf16.gmra.mxu0 %v1078
      %v1154 = vpop.f32.mrf.mxu0
      %v1155 = vadd.f32 0.0, %v1154
      %v1156 = vpop.f32.mrf.mxu0
      %v1157 = vpop.f32.mrf.mxu0
      %v1158 = vadd.f32 0.0, %v1157
      %v1159 = vpop.f32.mrf.mxu0
      %1160 = vmatprep.mubr.bf16.mxu0 0
      %1161 = vmatmul.mubr.bf16.gmra.mxu0 %v1081
      %v1162 = vpop.f32.mrf.mxu0
      %v1163 = vadd.f32 0.0, %v1162
      %v1164 = vpop.f32.mrf.mxu0
      %v1165 = vpop.f32.mrf.mxu0
      %v1166 = vadd.f32 0.0, %v1165
      %v1167 = vpop.f32.mrf.mxu0
      %1168 = vmatprep.mubr.bf16.mxu0 0
      %1169 = vmatmul.mubr.bf16.gmra.mxu0 %v1084
      %v1170 = vpop.f32.mrf.mxu0
      %v1171 = vadd.f32 0.0, %v1170
      %v1172 = vpop.f32.mrf.mxu0
      %v1173 = vpop.f32.mrf.mxu0
      %v1174 = vadd.f32 0.0, %v1173
      %v1175 = vpop.f32.mrf.mxu0
      %1176 = vmatprep.mubr.bf16.mxu0 0
      %1177 = vmatmul.mubr.bf16.gmra.mxu0 %v1087
      %v1178 = vpop.f32.mrf.mxu0
      %v1179 = vadd.f32 0.0, %v1178
      %v1180 = vpop.f32.mrf.mxu0
      %v1181 = vpop.f32.mrf.mxu0
      %v1182 = vadd.f32 0.0, %v1181
      %v1183 = vpop.f32.mrf.mxu0
      %1184 = vmatprep.mubr.bf16.mxu0 0
      %1185 = vmatmul.mubr.bf16.gmra.mxu0 %v1090
      %v1186 = vpop.f32.mrf.mxu0
      %v1187 = vadd.f32 0.0, %v1186
      %v1188 = vpop.f32.mrf.mxu0
      %v1189 = vpop.f32.mrf.mxu0
      %v1190 = vadd.f32 0.0, %v1189
      %v1191 = vpop.f32.mrf.mxu0
      %1192 = vdwg.mxu0
      %v1209 = vunpack.c.l.b16 %v821
      %v1210 = vunpack.c.l.b16 %v822
      %v1211 = vunpack.c.l.b16 %v823
      %v1212 = vunpack.c.l.b16 %v824
      %v1213 = vunpack.c.l.b16 %v825
      %v1214 = vunpack.c.l.b16 %v826
      %v1215 = vunpack.c.l.b16 %v827
      %v1216 = vunpack.c.l.b16 %v828
      %v1217 = vunpack.c.l.b16 %v829
      %v1218 = vunpack.c.l.b16 %v830
      %v1219 = vunpack.c.l.b16 %v831
      %v1220 = vunpack.c.l.b16 %v832
      %v1221 = vunpack.c.l.b16 %v833
      %v1222 = vunpack.c.l.b16 %v834
      %v1223 = vunpack.c.l.b16 %v835
      %v1224 = vunpack.c.l.b16 %v836
      %v1225 = vpack.c.b16 %v1210, %v1209
      %v1226 = vpack.c.b16 %v1212, %v1211
      %v1227 = vpack.c.b16 %v1214, %v1213
      %v1228 = vpack.c.b16 %v1216, %v1215
      %v1229 = vpack.c.b16 %v1218, %v1217
      %v1230 = vpack.c.b16 %v1220, %v1219
      %v1231 = vpack.c.b16 %v1222, %v1221
      %v1232 = vpack.c.b16 %v1224, %v1223
      %v1234 = vsel %vm1067, %v1225, 0
      %v1237 = vsel %vm1067, %v1226, 0
      %v1240 = vsel %vm1067, %v1227, 0
      %v1243 = vsel %vm1067, %v1228, 0
      %v1246 = vsel %vm1067, %v1229, 0
      %v1249 = vsel %vm1067, %v1230, 0
      %v1252 = vsel %vm1067, %v1231, 0
      %v1255 = vsel %vm1067, %v1232, 0
      %v1258 = vsel %vm1092, %v837, 0
      %1260 = vmatprep.subr.bf16.mxu0 0
      %1261 = vmatpush1.bf16.msra.mxu0 0
      %1262 = vmatprep.subr.bf16.mxu0 0
      %1263 = vmatpush1.bf16.msra.mxu0 0
      %1264 = vmatprep.subr.bf16.mxu0 0
      %1265 = vmatpush1.bf16.msra.mxu0 0
      %1266 = vmatprep.subr.bf16.mxu0 0
      %1267 = vmatpush1.bf16.msra.mxu0 0
      %1268 = vmatprep.subr.bf16.mxu0 0
      %1269 = vmatpush1.bf16.msra.mxu0 0
      %1270 = vmatprep.subr.bf16.mxu0 0
      %1271 = vmatpush1.bf16.msra.mxu0 0
      %1272 = vmatprep.subr.bf16.mxu0 0
      %1273 = vmatpush1.bf16.msra.mxu0 0
      %1274 = vmatprep.subr.bf16.mxu0 0
      %1275 = vmatpush1.bf16.msra.mxu0 %v1258
      %1276 = vmatprep.subr.bf16.mxu0 0
      %1277 = vmatpush2.bf16.msra.mxu0 0
      %1278 = vmatprep.subr.bf16.mxu0 0
      %1279 = vmatpush2.bf16.msra.mxu0 0
      %1280 = vmatprep.subr.bf16.mxu0 0
      %1281 = vmatpush2.bf16.msra.mxu0 0
      %1282 = vmatprep.subr.bf16.mxu0 0
      %1283 = vmatpush2.bf16.msra.mxu0 0
      %1284 = vmatprep.subr.bf16.mxu0 0
      %1285 = vmatpush2.bf16.msra.mxu0 0
      %1286 = vmatprep.subr.bf16.mxu0 0
      %1287 = vmatpush2.bf16.msra.mxu0 0
      %1288 = vmatprep.subr.bf16.mxu0 0
      %1289 = vmatpush2.bf16.msra.mxu0 0
      %1290 = vmatprep.subr.bf16.mxu0 0
      %1291 = vmatpush2.bf16.msra.mxu0 0
      %1292 = vmatprep.mubr.bf16.mxu0 0
      %1293 = vmatmul.mubr.bf16.gmra.mxu0 %v1234
      %v1294 = vpop.f32.mrf.mxu0
      %v1295 = vadd.f32 %v1131, %v1294
      %v1296 = vpop.f32.mrf.mxu0
      %v1297 = vpop.f32.mrf.mxu0
      %v1298 = vadd.f32 %v1134, %v1297
      %v1299 = vpop.f32.mrf.mxu0
      %1300 = vmatprep.mubr.bf16.mxu0 0
      %1301 = vmatmul.mubr.bf16.gmra.mxu0 %v1237
      %v1302 = vpop.f32.mrf.mxu0
      %v1303 = vadd.f32 %v1139, %v1302
      %v1304 = vpop.f32.mrf.mxu0
      %v1305 = vpop.f32.mrf.mxu0
      %v1306 = vadd.f32 %v1142, %v1305
      %v1307 = vpop.f32.mrf.mxu0
      %1308 = vmatprep.mubr.bf16.mxu0 0
      %1309 = vmatmul.mubr.bf16.gmra.mxu0 %v1240
      %v1310 = vpop.f32.mrf.mxu0
      %v1311 = vadd.f32 %v1147, %v1310
      %v1312 = vpop.f32.mrf.mxu0
      %v1313 = vpop.f32.mrf.mxu0
      %v1314 = vadd.f32 %v1150, %v1313
      %v1315 = vpop.f32.mrf.mxu0
      %1316 = vmatprep.mubr.bf16.mxu0 0
      %1317 = vmatmul.mubr.bf16.gmra.mxu0 %v1243
      %v1318 = vpop.f32.mrf.mxu0
      %v1319 = vadd.f32 %v1155, %v1318
      %v1320 = vpop.f32.mrf.mxu0
      %v1321 = vpop.f32.mrf.mxu0
      %v1322 = vadd.f32 %v1158, %v1321
      %v1323 = vpop.f32.mrf.mxu0
      %1324 = vmatprep.mubr.bf16.mxu0 0
      %1325 = vmatmul.mubr.bf16.gmra.mxu0 %v1246
      %v1326 = vpop.f32.mrf.mxu0
      %v1327 = vadd.f32 %v1163, %v1326
      %v1328 = vpop.f32.mrf.mxu0
      %v1329 = vpop.f32.mrf.mxu0
      %v1330 = vadd.f32 %v1166, %v1329
      %v1331 = vpop.f32.mrf.mxu0
      %1332 = vmatprep.mubr.bf16.mxu0 0
      %1333 = vmatmul.mubr.bf16.gmra.mxu0 %v1249
      %v1334 = vpop.f32.mrf.mxu0
      %v1335 = vadd.f32 %v1171, %v1334
      %v1336 = vpop.f32.mrf.mxu0
      %v1337 = vpop.f32.mrf.mxu0
      %v1338 = vadd.f32 %v1174, %v1337
      %v1339 = vpop.f32.mrf.mxu0
      %1340 = vmatprep.mubr.bf16.mxu0 0
      %1341 = vmatmul.mubr.bf16.gmra.mxu0 %v1252
      %v1342 = vpop.f32.mrf.mxu0
      %v1343 = vadd.f32 %v1179, %v1342
      %v1344 = vpop.f32.mrf.mxu0
      %v1345 = vpop.f32.mrf.mxu0
      %v1346 = vadd.f32 %v1182, %v1345
      %v1347 = vpop.f32.mrf.mxu0
      %1348 = vmatprep.mubr.bf16.mxu0 0
      %1349 = vmatmul.mubr.bf16.gmra.mxu0 %v1255
      %v1350 = vpop.f32.mrf.mxu0
      %v1351 = vadd.f32 %v1187, %v1350
      %v1352 = vpop.f32.mrf.mxu0
      %v1353 = vpop.f32.mrf.mxu0
      %v1354 = vadd.f32 %v1190, %v1353
      %v1355 = vpop.f32.mrf.mxu0
      %1356 = vdwg.mxu0
      %v1357 = vld [vmem:[#allocation2] sm:$0xe]
      %v1358 = vld [vmem:[#allocation2 + $0xc] sm:$0xe]
      %v1359 = vld [vmem:[#allocation2 + $0x18] sm:$0xe]
      %v1360 = vld [vmem:[#allocation2 + $0x24] sm:$0xe]
      %v1361 = vld [vmem:[#allocation2 + $0x30] sm:$0xe]
      %v1362 = vld [vmem:[#allocation2 + $0x3c] sm:$0xe]
      %v1363 = vld [vmem:[#allocation2 + $0x48] sm:$0xe]
      %v1364 = vld [vmem:[#allocation2 + $0x54] sm:$0xe]
      %vm1381 = vcmask 1042432
      %vm1382 = vcmask 1046532
      %vm1383 = vmor %vm1381, %vm1382
      %v1384 = vrot.slane %v1357, 5
      %v1385 = vrot.slane %v1384, 4
      %v1386 = vrot.slane %v822, 5
      %v1387 = vsel %vm1383, %v1385, %v1386
      %v1388 = vrot.slane %v1386, 4
      %v1389 = vrot.slane %v838, 5
      %v1390 = vsel %vm1383, %v1388, %v1389
      %v1391 = vrot.slane %v1358, 5
      %v1392 = vrot.slane %v1391, 4
      %v1393 = vrot.slane %v824, 5
      %v1394 = vsel %vm1383, %v1392, %v1393
      %v1395 = vrot.slane %v1393, 4
      %v1396 = vrot.slane %v839, 5
      %v1397 = vsel %vm1383, %v1395, %v1396
      %v1398 = vrot.slane %v1359, 5
      %v1399 = vrot.slane %v1398, 4
      %v1400 = vrot.slane %v826, 5
      %v1401 = vsel %vm1383, %v1399, %v1400
      %v1402 = vrot.slane %v1400, 4
      %v1403 = vrot.slane %v840, 5
      %v1404 = vsel %vm1383, %v1402, %v1403
      %v1405 = vrot.slane %v1360, 5
      %v1406 = vrot.slane %v1405, 4
      %v1407 = vrot.slane %v828, 5
      %v1408 = vsel %vm1383, %v1406, %v1407
      %v1409 = vrot.slane %v1407, 4
      %v1410 = vrot.slane %v841, 5
      %v1411 = vsel %vm1383, %v1409, %v1410
      %v1412 = vrot.slane %v1361, 5
      %v1413 = vrot.slane %v1412, 4
      %v1414 = vrot.slane %v830, 5
      %v1415 = vsel %vm1383, %v1413, %v1414
      %v1416 = vrot.slane %v1414, 4
      %v1417 = vrot.slane %v842, 5
      %v1418 = vsel %vm1383, %v1416, %v1417
      %v1419 = vrot.slane %v1362, 5
      %v1420 = vrot.slane %v1419, 4
      %v1421 = vrot.slane %v832, 5
      %v1422 = vsel %vm1383, %v1420, %v1421
      %v1423 = vrot.slane %v1421, 4
      %v1424 = vrot.slane %v843, 5
      %v1425 = vsel %vm1383, %v1423, %v1424
      %v1426 = vrot.slane %v1363, 5
      %v1427 = vrot.slane %v1426, 4
      %v1428 = vrot.slane %v834, 5
      %v1429 = vsel %vm1383, %v1427, %v1428
      %v1430 = vrot.slane %v1428, 4
      %v1431 = vrot.slane %v844, 5
      %v1432 = vsel %vm1383, %v1430, %v1431
      %v1433 = vrot.slane %v1364, 5
      %v1434 = vrot.slane %v1433, 4
      %v1435 = vrot.slane %v836, 5
      %v1436 = vsel %vm1383, %v1434, %v1435
      %v1437 = vrot.slane %v1435, 4
      %v1438 = vrot.slane %v845, 5
      %v1439 = vsel %vm1383, %v1437, %v1438
      %s1440 = scalar_lea.vmem %s3, 4
      %v1441 = vld [vmem:[%s1440] sm:$0x3]
      %v1442 = vunpack.c.l.b16 %v1387
      %v1443 = vunpack.c.l.b16 %v1390
      %v1444 = vunpack.c.l.b16 %v1394
      %v1445 = vunpack.c.l.b16 %v1397
      %v1446 = vunpack.c.l.b16 %v1401
      %v1447 = vunpack.c.l.b16 %v1404
      %v1448 = vunpack.c.l.b16 %v1408
      %v1449 = vunpack.c.l.b16 %v1411
      %v1450 = vunpack.c.l.b16 %v1415
      %v1451 = vunpack.c.l.b16 %v1418
      %v1452 = vunpack.c.l.b16 %v1422
      %v1453 = vunpack.c.l.b16 %v1425
      %v1454 = vunpack.c.l.b16 %v1429
      %v1455 = vunpack.c.l.b16 %v1432
      %v1456 = vunpack.c.l.b16 %v1436
      %v1457 = vunpack.c.l.b16 %v1439
      %v1458 = vpack.c.b16 %v1443, %v1442
      %v1459 = vpack.c.b16 %v1445, %v1444
      %v1460 = vpack.c.b16 %v1447, %v1446
      %v1461 = vpack.c.b16 %v1449, %v1448
      %v1462 = vpack.c.b16 %v1451, %v1450
      %v1463 = vpack.c.b16 %v1453, %v1452
      %v1464 = vpack.c.b16 %v1455, %v1454
      %v1465 = vpack.c.b16 %v1457, %v1456
      %v1467 = vsel %vm1067, %v1458, 0
      %v1470 = vsel %vm1067, %v1459, 0
      %v1473 = vsel %vm1067, %v1460, 0
      %v1476 = vsel %vm1067, %v1461, 0
      %v1479 = vsel %vm1067, %v1462, 0
      %v1482 = vsel %vm1067, %v1463, 0
      %v1485 = vsel %vm1067, %v1464, 0
      %v1488 = vsel %vm1067, %v1465, 0
      %v1491 = vsel %vm1092, %v1441, 0
      %1493 = vmatprep.subr.bf16.mxu0 0
      %1494 = vmatpush1.bf16.msra.mxu0 0
      %1495 = vmatprep.subr.bf16.mxu0 0
      %1496 = vmatpush1.bf16.msra.mxu0 0
      %1497 = vmatprep.subr.bf16.mxu0 0
      %1498 = vmatpush1.bf16.msra.mxu0 0
      %1499 = vmatprep.subr.bf16.mxu0 0
      %1500 = vmatpush1.bf16.msra.mxu0 0
      %1501 = vmatprep.subr.bf16.mxu0 0
      %1502 = vmatpush1.bf16.msra.mxu0 0
      %1503 = vmatprep.subr.bf16.mxu0 0
      %1504 = vmatpush1.bf16.msra.mxu0 0
      %1505 = vmatprep.subr.bf16.mxu0 0
      %1506 = vmatpush1.bf16.msra.mxu0 0
      %1507 = vmatprep.subr.bf16.mxu0 0
      %1508 = vmatpush1.bf16.msra.mxu0 %v1491
      %1509 = vmatprep.subr.bf16.mxu0 0
      %1510 = vmatpush2.bf16.msra.mxu0 0
      %1511 = vmatprep.subr.bf16.mxu0 0
      %1512 = vmatpush2.bf16.msra.mxu0 0
      %1513 = vmatprep.subr.bf16.mxu0 0
      %1514 = vmatpush2.bf16.msra.mxu0 0
      %1515 = vmatprep.subr.bf16.mxu0 0
      %1516 = vmatpush2.bf16.msra.mxu0 0
      %1517 = vmatprep.subr.bf16.mxu0 0
      %1518 = vmatpush2.bf16.msra.mxu0 0
      %1519 = vmatprep.subr.bf16.mxu0 0
      %1520 = vmatpush2.bf16.msra.mxu0 0
      %1521 = vmatprep.subr.bf16.mxu0 0
      %1522 = vmatpush2.bf16.msra.mxu0 0
      %1523 = vmatprep.subr.bf16.mxu0 0
      %1524 = vmatpush2.bf16.msra.mxu0 0
      %1525 = vmatprep.mubr.bf16.mxu0 0
      %1526 = vmatmul.mubr.bf16.gmra.mxu0 %v1467
      %v1527 = vpop.f32.mrf.mxu0
      %v1528 = vadd.f32 0.0, %v1527
      %v1529 = vpop.f32.mrf.mxu0
      %v1530 = vpop.f32.mrf.mxu0
      %v1531 = vadd.f32 0.0, %v1530
      %v1532 = vpop.f32.mrf.mxu0
      %1533 = vmatprep.mubr.bf16.mxu0 0
      %1534 = vmatmul.mubr.bf16.gmra.mxu0 %v1470
      %v1535 = vpop.f32.mrf.mxu0
      %v1536 = vadd.f32 0.0, %v1535
      %v1537 = vpop.f32.mrf.mxu0
      %v1538 = vpop.f32.mrf.mxu0
      %v1539 = vadd.f32 0.0, %v1538
      %v1540 = vpop.f32.mrf.mxu0
      %1541 = vmatprep.mubr.bf16.mxu0 0
      %1542 = vmatmul.mubr.bf16.gmra.mxu0 %v1473
      %v1543 = vpop.f32.mrf.mxu0
      %v1544 = vadd.f32 0.0, %v1543
      %v1545 = vpop.f32.mrf.mxu0
      %v1546 = vpop.f32.mrf.mxu0
      %v1547 = vadd.f32 0.0, %v1546
      %v1548 = vpop.f32.mrf.mxu0
      %1549 = vmatprep.mubr.bf16.mxu0 0
      %1550 = vmatmul.mubr.bf16.gmra.mxu0 %v1476
      %v1551 = vpop.f32.mrf.mxu0
      %v1552 = vadd.f32 0.0, %v1551
      %v1553 = vpop.f32.mrf.mxu0
      %v1554 = vpop.f32.mrf.mxu0
      %v1555 = vadd.f32 0.0, %v1554
      %v1556 = vpop.f32.mrf.mxu0
      %1557 = vmatprep.mubr.bf16.mxu0 0
      %1558 = vmatmul.mubr.bf16.gmra.mxu0 %v1479
      %v1559 = vpop.f32.mrf.mxu0
      %v1560 = vadd.f32 0.0, %v1559
      %v1561 = vpop.f32.mrf.mxu0
      %v1562 = vpop.f32.mrf.mxu0
      %v1563 = vadd.f32 0.0, %v1562
      %v1564 = vpop.f32.mrf.mxu0
      %1565 = vmatprep.mubr.bf16.mxu0 0
      %1566 = vmatmul.mubr.bf16.gmra.mxu0 %v1482
      %v1567 = vpop.f32.mrf.mxu0
      %v1568 = vadd.f32 0.0, %v1567
      %v1569 = vpop.f32.mrf.mxu0
      %v1570 = vpop.f32.mrf.mxu0
      %v1571 = vadd.f32 0.0, %v1570
      %v1572 = vpop.f32.mrf.mxu0
      %1573 = vmatprep.mubr.bf16.mxu0 0
      %1574 = vmatmul.mubr.bf16.gmra.mxu0 %v1485
      %v1575 = vpop.f32.mrf.mxu0
      %v1576 = vadd.f32 0.0, %v1575
      %v1577 = vpop.f32.mrf.mxu0
      %v1578 = vpop.f32.mrf.mxu0
      %v1579 = vadd.f32 0.0, %v1578
      %v1580 = vpop.f32.mrf.mxu0
      %1581 = vmatprep.mubr.bf16.mxu0 0
      %1582 = vmatmul.mubr.bf16.gmra.mxu0 %v1488
      %v1583 = vpop.f32.mrf.mxu0
      %v1584 = vadd.f32 0.0, %v1583
      %v1585 = vpop.f32.mrf.mxu0
      %v1586 = vpop.f32.mrf.mxu0
      %v1587 = vadd.f32 0.0, %v1586
      %v1588 = vpop.f32.mrf.mxu0
      %1589 = vdwg.mxu0
      %v1590 = vadd.f32 %v1295, %v1528
      %v1591 = vadd.f32 %v1298, %v1531
      %v1592 = vadd.f32 %v1303, %v1536
      %v1593 = vadd.f32 %v1306, %v1539
      %v1594 = vadd.f32 %v1311, %v1544
      %v1595 = vadd.f32 %v1314, %v1547
      %v1596 = vadd.f32 %v1319, %v1552
      %v1597 = vadd.f32 %v1322, %v1555
      %v1598 = vadd.f32 %v1327, %v1560
      %v1599 = vadd.f32 %v1330, %v1563
      %v1600 = vadd.f32 %v1335, %v1568
      %v1601 = vadd.f32 %v1338, %v1571
      %v1602 = vadd.f32 %v1343, %v1576
      %v1603 = vadd.f32 %v1346, %v1579
      %v1604 = vadd.f32 %v1351, %v1584
      %v1605 = vadd.f32 %v1354, %v1587
      %v1606 = vld [vmem:[%s600] sm:$0xf]
      %v1607 = vld [vmem:[%s600 + $0x4] sm:$0xf]
      %v1608 = vld [vmem:[%s600 + $0xc] sm:$0xf]
      %v1609 = vld [vmem:[%s600 + $0x10] sm:$0xf]
      %v1610 = vld [vmem:[%s600 + $0x18] sm:$0xf]
      %v1611 = vld [vmem:[%s600 + $0x1c] sm:$0xf]
      %v1612 = vld [vmem:[%s600 + $0x24] sm:$0xf]
      %v1613 = vld [vmem:[%s600 + $0x28] sm:$0xf]
      %v1614 = vld [vmem:[%s600 + $0x30] sm:$0xf]
      %v1615 = vld [vmem:[%s600 + $0x34] sm:$0xf]
      %v1616 = vld [vmem:[%s600 + $0x3c] sm:$0xf]
      %v1617 = vld [vmem:[%s600 + $0x40] sm:$0xf]
      %v1618 = vld [vmem:[%s600 + $0x48] sm:$0xf]
      %v1619 = vld [vmem:[%s600 + $0x4c] sm:$0xf]
      %v1620 = vld [vmem:[%s600 + $0x54] sm:$0xf]
      %v1621 = vld [vmem:[%s600 + $0x58] sm:$0xf]
      %s1622 = scalar_lea.vmem %s3, 6
      %v1623 = vld [vmem:[%s1622] sm:$0x3]
      %v1640 = vunpack.c.l.b16 %v1606
      %v1641 = vunpack.c.l.b16 %v1607
      %v1642 = vunpack.c.l.b16 %v1608
      %v1643 = vunpack.c.l.b16 %v1609
      %v1644 = vunpack.c.l.b16 %v1610
      %v1645 = vunpack.c.l.b16 %v1611
      %v1646 = vunpack.c.l.b16 %v1612
      %v1647 = vunpack.c.l.b16 %v1613
      %v1648 = vunpack.c.l.b16 %v1614
      %v1649 = vunpack.c.l.b16 %v1615
      %v1650 = vunpack.c.l.b16 %v1616
      %v1651 = vunpack.c.l.b16 %v1617
      %v1652 = vunpack.c.l.b16 %v1618
      %v1653 = vunpack.c.l.b16 %v1619
      %v1654 = vunpack.c.l.b16 %v1620
      %v1655 = vunpack.c.l.b16 %v1621
      %v1656 = vpack.c.b16 %v1641, %v1640
      %v1657 = vpack.c.b16 %v1643, %v1642
      %v1658 = vpack.c.b16 %v1645, %v1644
      %v1659 = vpack.c.b16 %v1647, %v1646
      %v1660 = vpack.c.b16 %v1649, %v1648
      %v1661 = vpack.c.b16 %v1651, %v1650
      %v1662 = vpack.c.b16 %v1653, %v1652
      %v1663 = vpack.c.b16 %v1655, %v1654
      %v1665 = vsel %vm1067, %v1656, 0
      %v1668 = vsel %vm1067, %v1657, 0
      %v1671 = vsel %vm1067, %v1658, 0
      %v1674 = vsel %vm1067, %v1659, 0
      %v1677 = vsel %vm1067, %v1660, 0
      %v1680 = vsel %vm1067, %v1661, 0
      %v1683 = vsel %vm1067, %v1662, 0
      %v1686 = vsel %vm1067, %v1663, 0
      %v1689 = vsel %vm1092, %v1623, 0
      %1691 = vmatprep.subr.bf16.mxu0 0
      %1692 = vmatpush1.bf16.msra.mxu0 0
      %1693 = vmatprep.subr.bf16.mxu0 0
      %1694 = vmatpush1.bf16.msra.mxu0 0
      %1695 = vmatprep.subr.bf16.mxu0 0
      %1696 = vmatpush1.bf16.msra.mxu0 0
      %1697 = vmatprep.subr.bf16.mxu0 0
      %1698 = vmatpush1.bf16.msra.mxu0 0
      %1699 = vmatprep.subr.bf16.mxu0 0
      %1700 = vmatpush1.bf16.msra.mxu0 0
      %1701 = vmatprep.subr.bf16.mxu0 0
      %1702 = vmatpush1.bf16.msra.mxu0 0
      %1703 = vmatprep.subr.bf16.mxu0 0
      %1704 = vmatpush1.bf16.msra.mxu0 0
      %1705 = vmatprep.subr.bf16.mxu0 0
      %1706 = vmatpush1.bf16.msra.mxu0 %v1689
      %1707 = vmatprep.subr.bf16.mxu0 0
      %1708 = vmatpush2.bf16.msra.mxu0 0
      %1709 = vmatprep.subr.bf16.mxu0 0
      %1710 = vmatpush2.bf16.msra.mxu0 0
      %1711 = vmatprep.subr.bf16.mxu0 0
      %1712 = vmatpush2.bf16.msra.mxu0 0
      %1713 = vmatprep.subr.bf16.mxu0 0
      %1714 = vmatpush2.bf16.msra.mxu0 0
      %1715 = vmatprep.subr.bf16.mxu0 0
      %1716 = vmatpush2.bf16.msra.mxu0 0
      %1717 = vmatprep.subr.bf16.mxu0 0
      %1718 = vmatpush2.bf16.msra.mxu0 0
      %1719 = vmatprep.subr.bf16.mxu0 0
      %1720 = vmatpush2.bf16.msra.mxu0 0
      %1721 = vmatprep.subr.bf16.mxu0 0
      %1722 = vmatpush2.bf16.msra.mxu0 0
      %1723 = vmatprep.mubr.bf16.mxu0 0
      %1724 = vmatmul.mubr.bf16.gmra.mxu0 %v1665
      %v1725 = vpop.f32.mrf.mxu0
      %v1726 = vadd.f32 0.0, %v1725
      %v1727 = vpop.f32.mrf.mxu0
      %v1728 = vpop.f32.mrf.mxu0
      %v1729 = vadd.f32 0.0, %v1728
      %v1730 = vpop.f32.mrf.mxu0
      %1731 = vmatprep.mubr.bf16.mxu0 0
      %1732 = vmatmul.mubr.bf16.gmra.mxu0 %v1668
      %v1733 = vpop.f32.mrf.mxu0
      %v1734 = vadd.f32 0.0, %v1733
      %v1735 = vpop.f32.mrf.mxu0
      %v1736 = vpop.f32.mrf.mxu0
      %v1737 = vadd.f32 0.0, %v1736
      %v1738 = vpop.f32.mrf.mxu0
      %1739 = vmatprep.mubr.bf16.mxu0 0
      %1740 = vmatmul.mubr.bf16.gmra.mxu0 %v1671
      %v1741 = vpop.f32.mrf.mxu0
      %v1742 = vadd.f32 0.0, %v1741
      %v1743 = vpop.f32.mrf.mxu0
      %v1744 = vpop.f32.mrf.mxu0
      %v1745 = vadd.f32 0.0, %v1744
      %v1746 = vpop.f32.mrf.mxu0
      %1747 = vmatprep.mubr.bf16.mxu0 0
      %1748 = vmatmul.mubr.bf16.gmra.mxu0 %v1674
      %v1749 = vpop.f32.mrf.mxu0
      %v1750 = vadd.f32 0.0, %v1749
      %v1751 = vpop.f32.mrf.mxu0
      %v1752 = vpop.f32.mrf.mxu0
      %v1753 = vadd.f32 0.0, %v1752
      %v1754 = vpop.f32.mrf.mxu0
      %1755 = vmatprep.mubr.bf16.mxu0 0
      %1756 = vmatmul.mubr.bf16.gmra.mxu0 %v1677
      %v1757 = vpop.f32.mrf.mxu0
      %v1758 = vadd.f32 0.0, %v1757
      %v1759 = vpop.f32.mrf.mxu0
      %v1760 = vpop.f32.mrf.mxu0
      %v1761 = vadd.f32 0.0, %v1760
      %v1762 = vpop.f32.mrf.mxu0
      %1763 = vmatprep.mubr.bf16.mxu0 0
      %1764 = vmatmul.mubr.bf16.gmra.mxu0 %v1680
      %v1765 = vpop.f32.mrf.mxu0
      %v1766 = vadd.f32 0.0, %v1765
      %v1767 = vpop.f32.mrf.mxu0
      %v1768 = vpop.f32.mrf.mxu0
      %v1769 = vadd.f32 0.0, %v1768
      %v1770 = vpop.f32.mrf.mxu0
      %1771 = vmatprep.mubr.bf16.mxu0 0
      %1772 = vmatmul.mubr.bf16.gmra.mxu0 %v1683
      %v1773 = vpop.f32.mrf.mxu0
      %v1774 = vadd.f32 0.0, %v1773
      %v1775 = vpop.f32.mrf.mxu0
      %v1776 = vpop.f32.mrf.mxu0
      %v1777 = vadd.f32 0.0, %v1776
      %v1778 = vpop.f32.mrf.mxu0
      %1779 = vmatprep.mubr.bf16.mxu0 0
      %1780 = vmatmul.mubr.bf16.gmra.mxu0 %v1686
      %v1781 = vpop.f32.mrf.mxu0
      %v1782 = vadd.f32 0.0, %v1781
      %v1783 = vpop.f32.mrf.mxu0
      %v1784 = vpop.f32.mrf.mxu0
      %v1785 = vadd.f32 0.0, %v1784
      %v1786 = vpop.f32.mrf.mxu0
      %1787 = vdwg.mxu0
      %v1788 = vadd.f32 %v1590, %v1726
      %v1789 = vadd.f32 %v1591, %v1729
      %v1790 = vadd.f32 %v1592, %v1734
      %v1791 = vadd.f32 %v1593, %v1737
      %v1792 = vadd.f32 %v1594, %v1742
      %v1793 = vadd.f32 %v1595, %v1745
      %v1794 = vadd.f32 %v1596, %v1750
      %v1795 = vadd.f32 %v1597, %v1753
      %v1796 = vadd.f32 %v1598, %v1758
      %v1797 = vadd.f32 %v1599, %v1761
      %v1798 = vadd.f32 %v1600, %v1766
      %v1799 = vadd.f32 %v1601, %v1769
      %v1800 = vadd.f32 %v1602, %v1774
      %v1801 = vadd.f32 %v1603, %v1777
      %v1802 = vadd.f32 %v1604, %v1782
      %v1803 = vadd.f32 %v1605, %v1785
      %v1804 = vld [vmem:[%s600] sm:$0xf]
      %v1805 = vld [vmem:[%s600 + $0x4] sm:$0xf]
      %v1806 = vld [vmem:[%s600 + $0x8] sm:$0x1]
      %v1807 = vld [vmem:[%s600 + $0xc] sm:$0xf]
      %v1808 = vld [vmem:[%s600 + $0x10] sm:$0xf]
      %v1809 = vld [vmem:[%s600 + $0x14] sm:$0x1]
      %v1810 = vld [vmem:[%s600 + $0x18] sm:$0xf]
      %v1811 = vld [vmem:[%s600 + $0x1c] sm:$0xf]
      %v1812 = vld [vmem:[%s600 + $0x20] sm:$0x1]
      %v1813 = vld [vmem:[%s600 + $0x24] sm:$0xf]
      %v1814 = vld [vmem:[%s600 + $0x28] sm:$0xf]
      %v1815 = vld [vmem:[%s600 + $0x2c] sm:$0x1]
      %v1816 = vld [vmem:[%s600 + $0x30] sm:$0xf]
      %v1817 = vld [vmem:[%s600 + $0x34] sm:$0xf]
      %v1818 = vld [vmem:[%s600 + $0x38] sm:$0x1]
      %v1819 = vld [vmem:[%s600 + $0x3c] sm:$0xf]
      %v1820 = vld [vmem:[%s600 + $0x40] sm:$0xf]
      %v1821 = vld [vmem:[%s600 + $0x44] sm:$0x1]
      %v1822 = vld [vmem:[%s600 + $0x48] sm:$0xf]
      %v1823 = vld [vmem:[%s600 + $0x4c] sm:$0xf]
      %v1824 = vld [vmem:[%s600 + $0x50] sm:$0x1]
      %v1825 = vld [vmem:[%s600 + $0x54] sm:$0xf]
      %v1826 = vld [vmem:[%s600 + $0x58] sm:$0xf]
      %v1827 = vld [vmem:[%s600 + $0x5c] sm:$0x1]
      %v1829 = vshrl.u32 %v1804, 16
      %v1831 = vrot.slane %v1829, 4
      %v1832 = vshll.u32 %v1804, 16
      %v1834 = vrot.slane %v1832, 5
      %v1835 = vor.u32 %v1831, %v1834
      %v1836 = vrot.slane %v1835, 4
      %v1838 = vshll.u32 %v1805, 16
      %v1840 = vrot.slane %v1838, 5
      %v1841 = vsel %vm848, %v1836, %v1840
      %v1842 = vshrl.u32 %v1805, 16
      %v1844 = vrot.slane %v1842, 4
      %v1845 = vor.u32 %v1844, %v1840
      %v1846 = vrot.slane %v1845, 4
      %v1848 = vshll.u32 %v1806, 16
      %v1850 = vrot.slane %v1848, 5
      %v1851 = vsel %vm848, %v1846, %v1850
      %v1853 = vshrl.u32 %v1807, 16
      %v1855 = vrot.slane %v1853, 4
      %v1856 = vshll.u32 %v1807, 16
      %v1858 = vrot.slane %v1856, 5
      %v1859 = vor.u32 %v1855, %v1858
      %v1860 = vrot.slane %v1859, 4
      %v1862 = vshll.u32 %v1808, 16
      %v1864 = vrot.slane %v1862, 5
      %v1865 = vsel %vm848, %v1860, %v1864
      %v1866 = vshrl.u32 %v1808, 16
      %v1868 = vrot.slane %v1866, 4
      %v1869 = vor.u32 %v1868, %v1864
      %v1870 = vrot.slane %v1869, 4
      %v1872 = vshll.u32 %v1809, 16
      %v1874 = vrot.slane %v1872, 5
      %v1875 = vsel %vm848, %v1870, %v1874
      %v1877 = vshrl.u32 %v1810, 16
      %v1879 = vrot.slane %v1877, 4
      %v1880 = vshll.u32 %v1810, 16
      %v1882 = vrot.slane %v1880, 5
      %v1883 = vor.u32 %v1879, %v1882
      %v1884 = vrot.slane %v1883, 4
      %v1886 = vshll.u32 %v1811, 16
      %v1888 = vrot.slane %v1886, 5
      %v1889 = vsel %vm848, %v1884, %v1888
      %v1890 = vshrl.u32 %v1811, 16
      %v1892 = vrot.slane %v1890, 4
      %v1893 = vor.u32 %v1892, %v1888
      %v1894 = vrot.slane %v1893, 4
      %v1896 = vshll.u32 %v1812, 16
      %v1898 = vrot.slane %v1896, 5
      %v1899 = vsel %vm848, %v1894, %v1898
      %v1901 = vshrl.u32 %v1813, 16
      %v1903 = vrot.slane %v1901, 4
      %v1904 = vshll.u32 %v1813, 16
      %v1906 = vrot.slane %v1904, 5
      %v1907 = vor.u32 %v1903, %v1906
      %v1908 = vrot.slane %v1907, 4
      %v1910 = vshll.u32 %v1814, 16
      %v1912 = vrot.slane %v1910, 5
      %v1913 = vsel %vm848, %v1908, %v1912
      %v1914 = vshrl.u32 %v1814, 16
      %v1916 = vrot.slane %v1914, 4
      %v1917 = vor.u32 %v1916, %v1912
      %v1918 = vrot.slane %v1917, 4
      %v1920 = vshll.u32 %v1815, 16
      %v1922 = vrot.slane %v1920, 5
      %v1923 = vsel %vm848, %v1918, %v1922
      %v1925 = vshrl.u32 %v1816, 16
      %v1927 = vrot.slane %v1925, 4
      %v1928 = vshll.u32 %v1816, 16
      %v1930 = vrot.slane %v1928, 5
      %v1931 = vor.u32 %v1927, %v1930
      %v1932 = vrot.slane %v1931, 4
      %v1934 = vshll.u32 %v1817, 16
      %v1936 = vrot.slane %v1934, 5
      %v1937 = vsel %vm848, %v1932, %v1936
      %v1938 = vshrl.u32 %v1817, 16
      %v1940 = vrot.slane %v1938, 4
      %v1941 = vor.u32 %v1940, %v1936
      %v1942 = vrot.slane %v1941, 4
      %v1944 = vshll.u32 %v1818, 16
      %v1946 = vrot.slane %v1944, 5
      %v1947 = vsel %vm848, %v1942, %v1946
      %v1949 = vshrl.u32 %v1819, 16
      %v1951 = vrot.slane %v1949, 4
      %v1952 = vshll.u32 %v1819, 16
      %v1954 = vrot.slane %v1952, 5
      %v1955 = vor.u32 %v1951, %v1954
      %v1956 = vrot.slane %v1955, 4
      %v1958 = vshll.u32 %v1820, 16
      %v1960 = vrot.slane %v1958, 5
      %v1961 = vsel %vm848, %v1956, %v1960
      %v1962 = vshrl.u32 %v1820, 16
      %v1964 = vrot.slane %v1962, 4
      %v1965 = vor.u32 %v1964, %v1960
      %v1966 = vrot.slane %v1965, 4
      %v1968 = vshll.u32 %v1821, 16
      %v1970 = vrot.slane %v1968, 5
      %v1971 = vsel %vm848, %v1966, %v1970
      %v1973 = vshrl.u32 %v1822, 16
      %v1975 = vrot.slane %v1973, 4
      %v1976 = vshll.u32 %v1822, 16
      %v1978 = vrot.slane %v1976, 5
      %v1979 = vor.u32 %v1975, %v1978
      %v1980 = vrot.slane %v1979, 4
      %v1982 = vshll.u32 %v1823, 16
      %v1984 = vrot.slane %v1982, 5
      %v1985 = vsel %vm848, %v1980, %v1984
      %v1986 = vshrl.u32 %v1823, 16
      %v1988 = vrot.slane %v1986, 4
      %v1989 = vor.u32 %v1988, %v1984
      %v1990 = vrot.slane %v1989, 4
      %v1992 = vshll.u32 %v1824, 16
      %v1994 = vrot.slane %v1992, 5
      %v1995 = vsel %vm848, %v1990, %v1994
      %v1997 = vshrl.u32 %v1825, 16
      %v1999 = vrot.slane %v1997, 4
      %v2000 = vshll.u32 %v1825, 16
      %v2002 = vrot.slane %v2000, 5
      %v2003 = vor.u32 %v1999, %v2002
      %v2004 = vrot.slane %v2003, 4
      %v2006 = vshll.u32 %v1826, 16
      %v2008 = vrot.slane %v2006, 5
      %v2009 = vsel %vm848, %v2004, %v2008
      %v2010 = vshrl.u32 %v1826, 16
      %v2012 = vrot.slane %v2010, 4
      %v2013 = vor.u32 %v2012, %v2008
      %v2014 = vrot.slane %v2013, 4
      %v2016 = vshll.u32 %v1827, 16
      %v2018 = vrot.slane %v2016, 5
      %v2019 = vsel %vm848, %v2014, %v2018
      %s2020 = scalar_lea.vmem %s3, 8
      %v2021 = vld [vmem:[%s2020] sm:$0x3]
      %v2022 = vunpack.c.l.b16 %v1841
      %v2023 = vunpack.c.l.b16 %v1851
      %v2024 = vunpack.c.l.b16 %v1865
      %v2025 = vunpack.c.l.b16 %v1875
      %v2026 = vunpack.c.l.b16 %v1889
      %v2027 = vunpack.c.l.b16 %v1899
      %v2028 = vunpack.c.l.b16 %v1913
      %v2029 = vunpack.c.l.b16 %v1923
      %v2030 = vunpack.c.l.b16 %v1937
      %v2031 = vunpack.c.l.b16 %v1947
      %v2032 = vunpack.c.l.b16 %v1961
      %v2033 = vunpack.c.l.b16 %v1971
      %v2034 = vunpack.c.l.b16 %v1985
      %v2035 = vunpack.c.l.b16 %v1995
      %v2036 = vunpack.c.l.b16 %v2009
      %v2037 = vunpack.c.l.b16 %v2019
      %v2038 = vpack.c.b16 %v2023, %v2022
      %v2039 = vpack.c.b16 %v2025, %v2024
      %v2040 = vpack.c.b16 %v2027, %v2026
      %v2041 = vpack.c.b16 %v2029, %v2028
      %v2042 = vpack.c.b16 %v2031, %v2030
      %v2043 = vpack.c.b16 %v2033, %v2032
      %v2044 = vpack.c.b16 %v2035, %v2034
      %v2045 = vpack.c.b16 %v2037, %v2036
      %v2047 = vsel %vm1067, %v2038, 0
      %v2050 = vsel %vm1067, %v2039, 0
      %v2053 = vsel %vm1067, %v2040, 0
      %v2056 = vsel %vm1067, %v2041, 0
      %v2059 = vsel %vm1067, %v2042, 0
      %v2062 = vsel %vm1067, %v2043, 0
      %v2065 = vsel %vm1067, %v2044, 0
      %v2068 = vsel %vm1067, %v2045, 0
      %v2071 = vsel %vm1092, %v2021, 0
      %2073 = vmatprep.subr.bf16.mxu0 0
      %2074 = vmatpush1.bf16.msra.mxu0 0
      %2075 = vmatprep.subr.bf16.mxu0 0
      %2076 = vmatpush1.bf16.msra.mxu0 0
      %2077 = vmatprep.subr.bf16.mxu0 0
      %2078 = vmatpush1.bf16.msra.mxu0 0
      %2079 = vmatprep.subr.bf16.mxu0 0
      %2080 = vmatpush1.bf16.msra.mxu0 0
      %2081 = vmatprep.subr.bf16.mxu0 0
      %2082 = vmatpush1.bf16.msra.mxu0 0
      %2083 = vmatprep.subr.bf16.mxu0 0
      %2084 = vmatpush1.bf16.msra.mxu0 0
      %2085 = vmatprep.subr.bf16.mxu0 0
      %2086 = vmatpush1.bf16.msra.mxu0 0
      %2087 = vmatprep.subr.bf16.mxu0 0
      %2088 = vmatpush1.bf16.msra.mxu0 %v2071
      %2089 = vmatprep.subr.bf16.mxu0 0
      %2090 = vmatpush2.bf16.msra.mxu0 0
      %2091 = vmatprep.subr.bf16.mxu0 0
      %2092 = vmatpush2.bf16.msra.mxu0 0
      %2093 = vmatprep.subr.bf16.mxu0 0
      %2094 = vmatpush2.bf16.msra.mxu0 0
      %2095 = vmatprep.subr.bf16.mxu0 0
      %2096 = vmatpush2.bf16.msra.mxu0 0
      %2097 = vmatprep.subr.bf16.mxu0 0
      %2098 = vmatpush2.bf16.msra.mxu0 0
      %2099 = vmatprep.subr.bf16.mxu0 0
      %2100 = vmatpush2.bf16.msra.mxu0 0
      %2101 = vmatprep.subr.bf16.mxu0 0
      %2102 = vmatpush2.bf16.msra.mxu0 0
      %2103 = vmatprep.subr.bf16.mxu0 0
      %2104 = vmatpush2.bf16.msra.mxu0 0
      %2105 = vmatprep.mubr.bf16.mxu0 0
      %2106 = vmatmul.mubr.bf16.gmra.mxu0 %v2047
      %v2107 = vpop.f32.mrf.mxu0
      %v2108 = vadd.f32 0.0, %v2107
      %v2109 = vpop.f32.mrf.mxu0
      %v2110 = vpop.f32.mrf.mxu0
      %v2111 = vadd.f32 0.0, %v2110
      %v2112 = vpop.f32.mrf.mxu0
      %2113 = vmatprep.mubr.bf16.mxu0 0
      %2114 = vmatmul.mubr.bf16.gmra.mxu0 %v2050
      %v2115 = vpop.f32.mrf.mxu0
      %v2116 = vadd.f32 0.0, %v2115
      %v2117 = vpop.f32.mrf.mxu0
      %v2118 = vpop.f32.mrf.mxu0
      %v2119 = vadd.f32 0.0, %v2118
      %v2120 = vpop.f32.mrf.mxu0
      %2121 = vmatprep.mubr.bf16.mxu0 0
      %2122 = vmatmul.mubr.bf16.gmra.mxu0 %v2053
      %v2123 = vpop.f32.mrf.mxu0
      %v2124 = vadd.f32 0.0, %v2123
      %v2125 = vpop.f32.mrf.mxu0
      %v2126 = vpop.f32.mrf.mxu0
      %v2127 = vadd.f32 0.0, %v2126
      %v2128 = vpop.f32.mrf.mxu0
      %2129 = vmatprep.mubr.bf16.mxu0 0
      %2130 = vmatmul.mubr.bf16.gmra.mxu0 %v2056
      %v2131 = vpop.f32.mrf.mxu0
      %v2132 = vadd.f32 0.0, %v2131
      %v2133 = vpop.f32.mrf.mxu0
      %v2134 = vpop.f32.mrf.mxu0
      %v2135 = vadd.f32 0.0, %v2134
      %v2136 = vpop.f32.mrf.mxu0
      %2137 = vmatprep.mubr.bf16.mxu0 0
      %2138 = vmatmul.mubr.bf16.gmra.mxu0 %v2059
      %v2139 = vpop.f32.mrf.mxu0
      %v2140 = vadd.f32 0.0, %v2139
      %v2141 = vpop.f32.mrf.mxu0
      %v2142 = vpop.f32.mrf.mxu0
      %v2143 = vadd.f32 0.0, %v2142
      %v2144 = vpop.f32.mrf.mxu0
      %2145 = vmatprep.mubr.bf16.mxu0 0
      %2146 = vmatmul.mubr.bf16.gmra.mxu0 %v2062
      %v2147 = vpop.f32.mrf.mxu0
      %v2148 = vadd.f32 0.0, %v2147
      %v2149 = vpop.f32.mrf.mxu0
      %v2150 = vpop.f32.mrf.mxu0
      %v2151 = vadd.f32 0.0, %v2150
      %v2152 = vpop.f32.mrf.mxu0
      %2153 = vmatprep.mubr.bf16.mxu0 0
      %2154 = vmatmul.mubr.bf16.gmra.mxu0 %v2065
      %v2155 = vpop.f32.mrf.mxu0
      %v2156 = vadd.f32 0.0, %v2155
      %v2157 = vpop.f32.mrf.mxu0
      %v2158 = vpop.f32.mrf.mxu0
      %v2159 = vadd.f32 0.0, %v2158
      %v2160 = vpop.f32.mrf.mxu0
      %2161 = vmatprep.mubr.bf16.mxu0 0
      %2162 = vmatmul.mubr.bf16.gmra.mxu0 %v2068
      %v2163 = vpop.f32.mrf.mxu0
      %v2164 = vadd.f32 0.0, %v2163
      %v2165 = vpop.f32.mrf.mxu0
      %v2166 = vpop.f32.mrf.mxu0
      %v2167 = vadd.f32 0.0, %v2166
      %v2168 = vpop.f32.mrf.mxu0
      %2169 = vdwg.mxu0
      %v2170 = vadd.f32 %v1788, %v2108
      %v2171 = vadd.f32 %v1789, %v2111
      %v2172 = vadd.f32 %v1790, %v2116
      %v2173 = vadd.f32 %v1791, %v2119
      %v2174 = vadd.f32 %v1792, %v2124
      %v2175 = vadd.f32 %v1793, %v2127
      %v2176 = vadd.f32 %v1794, %v2132
      %v2177 = vadd.f32 %v1795, %v2135
      %v2178 = vadd.f32 %v1796, %v2140
      %v2179 = vadd.f32 %v1797, %v2143
      %v2180 = vadd.f32 %v1798, %v2148
      %v2181 = vadd.f32 %v1799, %v2151
      %v2182 = vadd.f32 %v1800, %v2156
      %v2183 = vadd.f32 %v1801, %v2159
      %v2184 = vadd.f32 %v1802, %v2164
      %v2185 = vadd.f32 %v1803, %v2167
      %v2186 = vld [vmem:[%s600] sm:$0xe]
      %v2187 = vld [vmem:[%s600 + $0xc] sm:$0xe]
      %v2188 = vld [vmem:[%s600 + $0x18] sm:$0xe]
      %v2189 = vld [vmem:[%s600 + $0x24] sm:$0xe]
      %v2190 = vld [vmem:[%s600 + $0x30] sm:$0xe]
      %v2191 = vld [vmem:[%s600 + $0x3c] sm:$0xe]
      %v2192 = vld [vmem:[%s600 + $0x48] sm:$0xe]
      %v2193 = vld [vmem:[%s600 + $0x54] sm:$0xe]
      %v2218 = vrot.slane %v2186, 5
      %v2219 = vrot.slane %v2218, 4
      %v2220 = vrot.slane %v1805, 5
      %v2221 = vsel %vm1383, %v2219, %v2220
      %v2222 = vrot.slane %v2220, 4
      %v2223 = vrot.slane %v1806, 5
      %v2224 = vsel %vm1383, %v2222, %v2223
      %v2225 = vrot.slane %v2187, 5
      %v2226 = vrot.slane %v2225, 4
      %v2227 = vrot.slane %v1808, 5
      %v2228 = vsel %vm1383, %v2226, %v2227
      %v2229 = vrot.slane %v2227, 4
      %v2230 = vrot.slane %v1809, 5
      %v2231 = vsel %vm1383, %v2229, %v2230
      %v2232 = vrot.slane %v2188, 5
      %v2233 = vrot.slane %v2232, 4
      %v2234 = vrot.slane %v1811, 5
      %v2235 = vsel %vm1383, %v2233, %v2234
      %v2236 = vrot.slane %v2234, 4
      %v2237 = vrot.slane %v1812, 5
      %v2238 = vsel %vm1383, %v2236, %v2237
      %v2239 = vrot.slane %v2189, 5
      %v2240 = vrot.slane %v2239, 4
      %v2241 = vrot.slane %v1814, 5
      %v2242 = vsel %vm1383, %v2240, %v2241
      %v2243 = vrot.slane %v2241, 4
      %v2244 = vrot.slane %v1815, 5
      %v2245 = vsel %vm1383, %v2243, %v2244
      %v2246 = vrot.slane %v2190, 5
      %v2247 = vrot.slane %v2246, 4
      %v2248 = vrot.slane %v1817, 5
      %v2249 = vsel %vm1383, %v2247, %v2248
      %v2250 = vrot.slane %v2248, 4
      %v2251 = vrot.slane %v1818, 5
      %v2252 = vsel %vm1383, %v2250, %v2251
      %v2253 = vrot.slane %v2191, 5
      %v2254 = vrot.slane %v2253, 4
      %v2255 = vrot.slane %v1820, 5
      %v2256 = vsel %vm1383, %v2254, %v2255
      %v2257 = vrot.slane %v2255, 4
      %v2258 = vrot.slane %v1821, 5
      %v2259 = vsel %vm1383, %v2257, %v2258
      %v2260 = vrot.slane %v2192, 5
      %v2261 = vrot.slane %v2260, 4
      %v2262 = vrot.slane %v1823, 5
      %v2263 = vsel %vm1383, %v2261, %v2262
      %v2264 = vrot.slane %v2262, 4
      %v2265 = vrot.slane %v1824, 5
      %v2266 = vsel %vm1383, %v2264, %v2265
      %v2267 = vrot.slane %v2193, 5
      %v2268 = vrot.slane %v2267, 4
      %v2269 = vrot.slane %v1826, 5
      %v2270 = vsel %vm1383, %v2268, %v2269
      %v2271 = vrot.slane %v2269, 4
      %v2272 = vrot.slane %v1827, 5
      %v2273 = vsel %vm1383, %v2271, %v2272
      %s2274 = scalar_lea.vmem %s3, 10
      %v2275 = vld [vmem:[%s2274] sm:$0x3]
      %v2276 = vunpack.c.l.b16 %v2221
      %v2277 = vunpack.c.l.b16 %v2224
      %v2278 = vunpack.c.l.b16 %v2228
      %v2279 = vunpack.c.l.b16 %v2231
      %v2280 = vunpack.c.l.b16 %v2235
      %v2281 = vunpack.c.l.b16 %v2238
      %v2282 = vunpack.c.l.b16 %v2242
      %v2283 = vunpack.c.l.b16 %v2245
      %v2284 = vunpack.c.l.b16 %v2249
      %v2285 = vunpack.c.l.b16 %v2252
      %v2286 = vunpack.c.l.b16 %v2256
      %v2287 = vunpack.c.l.b16 %v2259
      %v2288 = vunpack.c.l.b16 %v2263
      %v2289 = vunpack.c.l.b16 %v2266
      %v2290 = vunpack.c.l.b16 %v2270
      %v2291 = vunpack.c.l.b16 %v2273
      %v2292 = vpack.c.b16 %v2277, %v2276
      %v2293 = vpack.c.b16 %v2279, %v2278
      %v2294 = vpack.c.b16 %v2281, %v2280
      %v2295 = vpack.c.b16 %v2283, %v2282
      %v2296 = vpack.c.b16 %v2285, %v2284
      %v2297 = vpack.c.b16 %v2287, %v2286
      %v2298 = vpack.c.b16 %v2289, %v2288
      %v2299 = vpack.c.b16 %v2291, %v2290
      %v2301 = vsel %vm1067, %v2292, 0
      %v2304 = vsel %vm1067, %v2293, 0
      %v2307 = vsel %vm1067, %v2294, 0
      %v2310 = vsel %vm1067, %v2295, 0
      %v2313 = vsel %vm1067, %v2296, 0
      %v2316 = vsel %vm1067, %v2297, 0
      %v2319 = vsel %vm1067, %v2298, 0
      %v2322 = vsel %vm1067, %v2299, 0
      %v2325 = vsel %vm1092, %v2275, 0
      %2327 = vmatprep.subr.bf16.mxu0 0
      %2328 = vmatpush1.bf16.msra.mxu0 0
      %2329 = vmatprep.subr.bf16.mxu0 0
      %2330 = vmatpush1.bf16.msra.mxu0 0
      %2331 = vmatprep.subr.bf16.mxu0 0
      %2332 = vmatpush1.bf16.msra.mxu0 0
      %2333 = vmatprep.subr.bf16.mxu0 0
      %2334 = vmatpush1.bf16.msra.mxu0 0
      %2335 = vmatprep.subr.bf16.mxu0 0
      %2336 = vmatpush1.bf16.msra.mxu0 0
      %2337 = vmatprep.subr.bf16.mxu0 0
      %2338 = vmatpush1.bf16.msra.mxu0 0
      %2339 = vmatprep.subr.bf16.mxu0 0
      %2340 = vmatpush1.bf16.msra.mxu0 0
      %2341 = vmatprep.subr.bf16.mxu0 0
      %2342 = vmatpush1.bf16.msra.mxu0 %v2325
      %2343 = vmatprep.subr.bf16.mxu0 0
      %2344 = vmatpush2.bf16.msra.mxu0 0
      %2345 = vmatprep.subr.bf16.mxu0 0
      %2346 = vmatpush2.bf16.msra.mxu0 0
      %2347 = vmatprep.subr.bf16.mxu0 0
      %2348 = vmatpush2.bf16.msra.mxu0 0
      %2349 = vmatprep.subr.bf16.mxu0 0
      %2350 = vmatpush2.bf16.msra.mxu0 0
      %2351 = vmatprep.subr.bf16.mxu0 0
      %2352 = vmatpush2.bf16.msra.mxu0 0
      %2353 = vmatprep.subr.bf16.mxu0 0
      %2354 = vmatpush2.bf16.msra.mxu0 0
      %2355 = vmatprep.subr.bf16.mxu0 0
      %2356 = vmatpush2.bf16.msra.mxu0 0
      %2357 = vmatprep.subr.bf16.mxu0 0
      %2358 = vmatpush2.bf16.msra.mxu0 0
      %2359 = vmatprep.mubr.bf16.mxu0 0
      %2360 = vmatmul.mubr.bf16.gmra.mxu0 %v2301
      %v2361 = vpop.f32.mrf.mxu0
      %v2362 = vadd.f32 0.0, %v2361
      %v2363 = vpop.f32.mrf.mxu0
      %v2364 = vpop.f32.mrf.mxu0
      %v2365 = vadd.f32 0.0, %v2364
      %v2366 = vpop.f32.mrf.mxu0
      %2367 = vmatprep.mubr.bf16.mxu0 0
      %2368 = vmatmul.mubr.bf16.gmra.mxu0 %v2304
      %v2369 = vpop.f32.mrf.mxu0
      %v2370 = vadd.f32 0.0, %v2369
      %v2371 = vpop.f32.mrf.mxu0
      %v2372 = vpop.f32.mrf.mxu0
      %v2373 = vadd.f32 0.0, %v2372
      %v2374 = vpop.f32.mrf.mxu0
      %2375 = vmatprep.mubr.bf16.mxu0 0
      %2376 = vmatmul.mubr.bf16.gmra.mxu0 %v2307
      %v2377 = vpop.f32.mrf.mxu0
      %v2378 = vadd.f32 0.0, %v2377
      %v2379 = vpop.f32.mrf.mxu0
      %v2380 = vpop.f32.mrf.mxu0
      %v2381 = vadd.f32 0.0, %v2380
      %v2382 = vpop.f32.mrf.mxu0
      %2383 = vmatprep.mubr.bf16.mxu0 0
      %2384 = vmatmul.mubr.bf16.gmra.mxu0 %v2310
      %v2385 = vpop.f32.mrf.mxu0
      %v2386 = vadd.f32 0.0, %v2385
      %v2387 = vpop.f32.mrf.mxu0
      %v2388 = vpop.f32.mrf.mxu0
      %v2389 = vadd.f32 0.0, %v2388
      %v2390 = vpop.f32.mrf.mxu0
      %2391 = vmatprep.mubr.bf16.mxu0 0
      %2392 = vmatmul.mubr.bf16.gmra.mxu0 %v2313
      %v2393 = vpop.f32.mrf.mxu0
      %v2394 = vadd.f32 0.0, %v2393
      %v2395 = vpop.f32.mrf.mxu0
      %v2396 = vpop.f32.mrf.mxu0
      %v2397 = vadd.f32 0.0, %v2396
      %v2398 = vpop.f32.mrf.mxu0
      %2399 = vmatprep.mubr.bf16.mxu0 0
      %2400 = vmatmul.mubr.bf16.gmra.mxu0 %v2316
      %v2401 = vpop.f32.mrf.mxu0
      %v2402 = vadd.f32 0.0, %v2401
      %v2403 = vpop.f32.mrf.mxu0
      %v2404 = vpop.f32.mrf.mxu0
      %v2405 = vadd.f32 0.0, %v2404
      %v2406 = vpop.f32.mrf.mxu0
      %2407 = vmatprep.mubr.bf16.mxu0 0
      %2408 = vmatmul.mubr.bf16.gmra.mxu0 %v2319
      %v2409 = vpop.f32.mrf.mxu0
      %v2410 = vadd.f32 0.0, %v2409
      %v2411 = vpop.f32.mrf.mxu0
      %v2412 = vpop.f32.mrf.mxu0
      %v2413 = vadd.f32 0.0, %v2412
      %v2414 = vpop.f32.mrf.mxu0
      %2415 = vmatprep.mubr.bf16.mxu0 0
      %2416 = vmatmul.mubr.bf16.gmra.mxu0 %v2322
      %v2417 = vpop.f32.mrf.mxu0
      %v2418 = vadd.f32 0.0, %v2417
      %v2419 = vpop.f32.mrf.mxu0
      %v2420 = vpop.f32.mrf.mxu0
      %v2421 = vadd.f32 0.0, %v2420
      %v2422 = vpop.f32.mrf.mxu0
      %2423 = vdwg.mxu0
      %v2424 = vadd.f32 %v2170, %v2362
      %v2425 = vadd.f32 %v2171, %v2365
      %v2426 = vadd.f32 %v2172, %v2370
      %v2427 = vadd.f32 %v2173, %v2373
      %v2428 = vadd.f32 %v2174, %v2378
      %v2429 = vadd.f32 %v2175, %v2381
      %v2430 = vadd.f32 %v2176, %v2386
      %v2431 = vadd.f32 %v2177, %v2389
      %v2432 = vadd.f32 %v2178, %v2394
      %v2433 = vadd.f32 %v2179, %v2397
      %v2434 = vadd.f32 %v2180, %v2402
      %v2435 = vadd.f32 %v2181, %v2405
      %v2436 = vadd.f32 %v2182, %v2410
      %v2437 = vadd.f32 %v2183, %v2413
      %v2438 = vadd.f32 %v2184, %v2418
      %v2439 = vadd.f32 %v2185, %v2421
      %s2440 = scalar_lea.vmem [#allocation2], 24
      %v2441 = vld [vmem:[%s2440] sm:$0xf]
      %v2442 = vld [vmem:[%s2440 + $0x4] sm:$0xf]
      %v2443 = vld [vmem:[%s2440 + $0xc] sm:$0xf]
      %v2444 = vld [vmem:[%s2440 + $0x10] sm:$0xf]
      %v2445 = vld [vmem:[%s2440 + $0x18] sm:$0xf]
      %v2446 = vld [vmem:[%s2440 + $0x1c] sm:$0xf]
      %v2447 = vld [vmem:[%s2440 + $0x24] sm:$0xf]
      %v2448 = vld [vmem:[%s2440 + $0x28] sm:$0xf]
      %v2449 = vld [vmem:[%s2440 + $0x30] sm:$0xf]
      %v2450 = vld [vmem:[%s2440 + $0x34] sm:$0xf]
      %v2451 = vld [vmem:[%s2440 + $0x3c] sm:$0xf]
      %v2452 = vld [vmem:[%s2440 + $0x40] sm:$0xf]
      %v2453 = vld [vmem:[%s2440 + $0x48] sm:$0xf]
      %v2454 = vld [vmem:[%s2440 + $0x4c] sm:$0xf]
      %v2455 = vld [vmem:[%s2440 + $0x54] sm:$0xf]
      %v2456 = vld [vmem:[%s2440 + $0x58] sm:$0xf]
      %s2457 = scalar_lea.vmem %s3, 12
      %v2458 = vld [vmem:[%s2457] sm:$0x3]
      %v2475 = vunpack.c.l.b16 %v2441
      %v2476 = vunpack.c.l.b16 %v2442
      %v2477 = vunpack.c.l.b16 %v2443
      %v2478 = vunpack.c.l.b16 %v2444
      %v2479 = vunpack.c.l.b16 %v2445
      %v2480 = vunpack.c.l.b16 %v2446
      %v2481 = vunpack.c.l.b16 %v2447
      %v2482 = vunpack.c.l.b16 %v2448
      %v2483 = vunpack.c.l.b16 %v2449
      %v2484 = vunpack.c.l.b16 %v2450
      %v2485 = vunpack.c.l.b16 %v2451
      %v2486 = vunpack.c.l.b16 %v2452
      %v2487 = vunpack.c.l.b16 %v2453
      %v2488 = vunpack.c.l.b16 %v2454
      %v2489 = vunpack.c.l.b16 %v2455
      %v2490 = vunpack.c.l.b16 %v2456
      %v2491 = vpack.c.b16 %v2476, %v2475
      %v2492 = vpack.c.b16 %v2478, %v2477
      %v2493 = vpack.c.b16 %v2480, %v2479
      %v2494 = vpack.c.b16 %v2482, %v2481
      %v2495 = vpack.c.b16 %v2484, %v2483
      %v2496 = vpack.c.b16 %v2486, %v2485
      %v2497 = vpack.c.b16 %v2488, %v2487
      %v2498 = vpack.c.b16 %v2490, %v2489
      %v2500 = vsel %vm1067, %v2491, 0
      %v2503 = vsel %vm1067, %v2492, 0
      %v2506 = vsel %vm1067, %v2493, 0
      %v2509 = vsel %vm1067, %v2494, 0
      %v2512 = vsel %vm1067, %v2495, 0
      %v2515 = vsel %vm1067, %v2496, 0
      %v2518 = vsel %vm1067, %v2497, 0
      %v2521 = vsel %vm1067, %v2498, 0
      %v2524 = vsel %vm1092, %v2458, 0
      %2526 = vmatprep.subr.bf16.mxu0 0
      %2527 = vmatpush1.bf16.msra.mxu0 0
      %2528 = vmatprep.subr.bf16.mxu0 0
      %2529 = vmatpush1.bf16.msra.mxu0 0
      %2530 = vmatprep.subr.bf16.mxu0 0
      %2531 = vmatpush1.bf16.msra.mxu0 0
      %2532 = vmatprep.subr.bf16.mxu0 0
      %2533 = vmatpush1.bf16.msra.mxu0 0
      %2534 = vmatprep.subr.bf16.mxu0 0
      %2535 = vmatpush1.bf16.msra.mxu0 0
      %2536 = vmatprep.subr.bf16.mxu0 0
      %2537 = vmatpush1.bf16.msra.mxu0 0
      %2538 = vmatprep.subr.bf16.mxu0 0
      %2539 = vmatpush1.bf16.msra.mxu0 0
      %2540 = vmatprep.subr.bf16.mxu0 0
      %2541 = vmatpush1.bf16.msra.mxu0 %v2524
      %2542 = vmatprep.subr.bf16.mxu0 0
      %2543 = vmatpush2.bf16.msra.mxu0 0
      %2544 = vmatprep.subr.bf16.mxu0 0
      %2545 = vmatpush2.bf16.msra.mxu0 0
      %2546 = vmatprep.subr.bf16.mxu0 0
      %2547 = vmatpush2.bf16.msra.mxu0 0
      %2548 = vmatprep.subr.bf16.mxu0 0
      %2549 = vmatpush2.bf16.msra.mxu0 0
      %2550 = vmatprep.subr.bf16.mxu0 0
      %2551 = vmatpush2.bf16.msra.mxu0 0
      %2552 = vmatprep.subr.bf16.mxu0 0
      %2553 = vmatpush2.bf16.msra.mxu0 0
      %2554 = vmatprep.subr.bf16.mxu0 0
      %2555 = vmatpush2.bf16.msra.mxu0 0
      %2556 = vmatprep.subr.bf16.mxu0 0
      %2557 = vmatpush2.bf16.msra.mxu0 0
      %2558 = vmatprep.mubr.bf16.mxu0 0
      %2559 = vmatmul.mubr.bf16.gmra.mxu0 %v2500
      %v2560 = vpop.f32.mrf.mxu0
      %v2561 = vadd.f32 0.0, %v2560
      %v2562 = vpop.f32.mrf.mxu0
      %v2563 = vpop.f32.mrf.mxu0
      %v2564 = vadd.f32 0.0, %v2563
      %v2565 = vpop.f32.mrf.mxu0
      %2566 = vmatprep.mubr.bf16.mxu0 0
      %2567 = vmatmul.mubr.bf16.gmra.mxu0 %v2503
      %v2568 = vpop.f32.mrf.mxu0
      %v2569 = vadd.f32 0.0, %v2568
      %v2570 = vpop.f32.mrf.mxu0
      %v2571 = vpop.f32.mrf.mxu0
      %v2572 = vadd.f32 0.0, %v2571
      %v2573 = vpop.f32.mrf.mxu0
      %2574 = vmatprep.mubr.bf16.mxu0 0
      %2575 = vmatmul.mubr.bf16.gmra.mxu0 %v2506
      %v2576 = vpop.f32.mrf.mxu0
      %v2577 = vadd.f32 0.0, %v2576
      %v2578 = vpop.f32.mrf.mxu0
      %v2579 = vpop.f32.mrf.mxu0
      %v2580 = vadd.f32 0.0, %v2579
      %v2581 = vpop.f32.mrf.mxu0
      %2582 = vmatprep.mubr.bf16.mxu0 0
      %2583 = vmatmul.mubr.bf16.gmra.mxu0 %v2509
      %v2584 = vpop.f32.mrf.mxu0
      %v2585 = vadd.f32 0.0, %v2584
      %v2586 = vpop.f32.mrf.mxu0
      %v2587 = vpop.f32.mrf.mxu0
      %v2588 = vadd.f32 0.0, %v2587
      %v2589 = vpop.f32.mrf.mxu0
      %2590 = vmatprep.mubr.bf16.mxu0 0
      %2591 = vmatmul.mubr.bf16.gmra.mxu0 %v2512
      %v2592 = vpop.f32.mrf.mxu0
      %v2593 = vadd.f32 0.0, %v2592
      %v2594 = vpop.f32.mrf.mxu0
      %v2595 = vpop.f32.mrf.mxu0
      %v2596 = vadd.f32 0.0, %v2595
      %v2597 = vpop.f32.mrf.mxu0
      %2598 = vmatprep.mubr.bf16.mxu0 0
      %2599 = vmatmul.mubr.bf16.gmra.mxu0 %v2515
      %v2600 = vpop.f32.mrf.mxu0
      %v2601 = vadd.f32 0.0, %v2600
      %v2602 = vpop.f32.mrf.mxu0
      %v2603 = vpop.f32.mrf.mxu0
      %v2604 = vadd.f32 0.0, %v2603
      %v2605 = vpop.f32.mrf.mxu0
      %2606 = vmatprep.mubr.bf16.mxu0 0
      %2607 = vmatmul.mubr.bf16.gmra.mxu0 %v2518
      %v2608 = vpop.f32.mrf.mxu0
      %v2609 = vadd.f32 0.0, %v2608
      %v2610 = vpop.f32.mrf.mxu0
      %v2611 = vpop.f32.mrf.mxu0
      %v2612 = vadd.f32 0.0, %v2611
      %v2613 = vpop.f32.mrf.mxu0
      %2614 = vmatprep.mubr.bf16.mxu0 0
      %2615 = vmatmul.mubr.bf16.gmra.mxu0 %v2521
      %v2616 = vpop.f32.mrf.mxu0
      %v2617 = vadd.f32 0.0, %v2616
      %v2618 = vpop.f32.mrf.mxu0
      %v2619 = vpop.f32.mrf.mxu0
      %v2620 = vadd.f32 0.0, %v2619
      %v2621 = vpop.f32.mrf.mxu0
      %2622 = vdwg.mxu0
      %v2623 = vadd.f32 %v2424, %v2561
      %v2624 = vadd.f32 %v2425, %v2564
      %v2625 = vadd.f32 %v2426, %v2569
      %v2626 = vadd.f32 %v2427, %v2572
      %v2627 = vadd.f32 %v2428, %v2577
      %v2628 = vadd.f32 %v2429, %v2580
      %v2629 = vadd.f32 %v2430, %v2585
      %v2630 = vadd.f32 %v2431, %v2588
      %v2631 = vadd.f32 %v2432, %v2593
      %v2632 = vadd.f32 %v2433, %v2596
      %v2633 = vadd.f32 %v2434, %v2601
      %v2634 = vadd.f32 %v2435, %v2604
      %v2635 = vadd.f32 %v2436, %v2609
      %v2636 = vadd.f32 %v2437, %v2612
      %v2637 = vadd.f32 %v2438, %v2617
      %v2638 = vadd.f32 %v2439, %v2620
      %v2639 = vld [vmem:[%s2440] sm:$0xf]
      %v2640 = vld [vmem:[%s2440 + $0x4] sm:$0xf]
      %v2641 = vld [vmem:[%s2440 + $0x8] sm:$0x1]
      %v2642 = vld [vmem:[%s2440 + $0xc] sm:$0xf]
      %v2643 = vld [vmem:[%s2440 + $0x10] sm:$0xf]
      %v2644 = vld [vmem:[%s2440 + $0x14] sm:$0x1]
      %v2645 = vld [vmem:[%s2440 + $0x18] sm:$0xf]
      %v2646 = vld [vmem:[%s2440 + $0x1c] sm:$0xf]
      %v2647 = vld [vmem:[%s2440 + $0x20] sm:$0x1]
      %v2648 = vld [vmem:[%s2440 + $0x24] sm:$0xf]
      %v2649 = vld [vmem:[%s2440 + $0x28] sm:$0xf]
      %v2650 = vld [vmem:[%s2440 + $0x2c] sm:$0x1]
      %v2651 = vld [vmem:[%s2440 + $0x30] sm:$0xf]
      %v2652 = vld [vmem:[%s2440 + $0x34] sm:$0xf]
      %v2653 = vld [vmem:[%s2440 + $0x38] sm:$0x1]
      %v2654 = vld [vmem:[%s2440 + $0x3c] sm:$0xf]
      %v2655 = vld [vmem:[%s2440 + $0x40] sm:$0xf]
      %v2656 = vld [vmem:[%s2440 + $0x44] sm:$0x1]
      %v2657 = vld [vmem:[%s2440 + $0x48] sm:$0xf]
      %v2658 = vld [vmem:[%s2440 + $0x4c] sm:$0xf]
      %v2659 = vld [vmem:[%s2440 + $0x50] sm:$0x1]
      %v2660 = vld [vmem:[%s2440 + $0x54] sm:$0xf]
      %v2661 = vld [vmem:[%s2440 + $0x58] sm:$0xf]
      %v2662 = vld [vmem:[%s2440 + $0x5c] sm:$0x1]
      %v2664 = vshrl.u32 %v2639, 16
      %v2666 = vrot.slane %v2664, 4
      %v2667 = vshll.u32 %v2639, 16
      %v2669 = vrot.slane %v2667, 5
      %v2670 = vor.u32 %v2666, %v2669
      %v2671 = vrot.slane %v2670, 4
      %v2673 = vshll.u32 %v2640, 16
      %v2675 = vrot.slane %v2673, 5
      %v2676 = vsel %vm848, %v2671, %v2675
      %v2677 = vshrl.u32 %v2640, 16
      %v2679 = vrot.slane %v2677, 4
      %v2680 = vor.u32 %v2679, %v2675
      %v2681 = vrot.slane %v2680, 4
      %v2683 = vshll.u32 %v2641, 16
      %v2685 = vrot.slane %v2683, 5
      %v2686 = vsel %vm848, %v2681, %v2685
      %v2688 = vshrl.u32 %v2642, 16
      %v2690 = vrot.slane %v2688, 4
      %v2691 = vshll.u32 %v2642, 16
      %v2693 = vrot.slane %v2691, 5
      %v2694 = vor.u32 %v2690, %v2693
      %v2695 = vrot.slane %v2694, 4
      %v2697 = vshll.u32 %v2643, 16
      %v2699 = vrot.slane %v2697, 5
      %v2700 = vsel %vm848, %v2695, %v2699
      %v2701 = vshrl.u32 %v2643, 16
      %v2703 = vrot.slane %v2701, 4
      %v2704 = vor.u32 %v2703, %v2699
      %v2705 = vrot.slane %v2704, 4
      %v2707 = vshll.u32 %v2644, 16
      %v2709 = vrot.slane %v2707, 5
      %v2710 = vsel %vm848, %v2705, %v2709
      %v2712 = vshrl.u32 %v2645, 16
      %v2714 = vrot.slane %v2712, 4
      %v2715 = vshll.u32 %v2645, 16
      %v2717 = vrot.slane %v2715, 5
      %v2718 = vor.u32 %v2714, %v2717
      %v2719 = vrot.slane %v2718, 4
      %v2721 = vshll.u32 %v2646, 16
      %v2723 = vrot.slane %v2721, 5
      %v2724 = vsel %vm848, %v2719, %v2723
      %v2725 = vshrl.u32 %v2646, 16
      %v2727 = vrot.slane %v2725, 4
      %v2728 = vor.u32 %v2727, %v2723
      %v2729 = vrot.slane %v2728, 4
      %v2731 = vshll.u32 %v2647, 16
      %v2733 = vrot.slane %v2731, 5
      %v2734 = vsel %vm848, %v2729, %v2733
      %v2736 = vshrl.u32 %v2648, 16
      %v2738 = vrot.slane %v2736, 4
      %v2739 = vshll.u32 %v2648, 16
      %v2741 = vrot.slane %v2739, 5
      %v2742 = vor.u32 %v2738, %v2741
      %v2743 = vrot.slane %v2742, 4
      %v2745 = vshll.u32 %v2649, 16
      %v2747 = vrot.slane %v2745, 5
      %v2748 = vsel %vm848, %v2743, %v2747
      %v2749 = vshrl.u32 %v2649, 16
      %v2751 = vrot.slane %v2749, 4
      %v2752 = vor.u32 %v2751, %v2747
      %v2753 = vrot.slane %v2752, 4
      %v2755 = vshll.u32 %v2650, 16
      %v2757 = vrot.slane %v2755, 5
      %v2758 = vsel %vm848, %v2753, %v2757
      %v2760 = vshrl.u32 %v2651, 16
      %v2762 = vrot.slane %v2760, 4
      %v2763 = vshll.u32 %v2651, 16
      %v2765 = vrot.slane %v2763, 5
      %v2766 = vor.u32 %v2762, %v2765
      %v2767 = vrot.slane %v2766, 4
      %v2769 = vshll.u32 %v2652, 16
      %v2771 = vrot.slane %v2769, 5
      %v2772 = vsel %vm848, %v2767, %v2771
      %v2773 = vshrl.u32 %v2652, 16
      %v2775 = vrot.slane %v2773, 4
      %v2776 = vor.u32 %v2775, %v2771
      %v2777 = vrot.slane %v2776, 4
      %v2779 = vshll.u32 %v2653, 16
      %v2781 = vrot.slane %v2779, 5
      %v2782 = vsel %vm848, %v2777, %v2781
      %v2784 = vshrl.u32 %v2654, 16
      %v2786 = vrot.slane %v2784, 4
      %v2787 = vshll.u32 %v2654, 16
      %v2789 = vrot.slane %v2787, 5
      %v2790 = vor.u32 %v2786, %v2789
      %v2791 = vrot.slane %v2790, 4
      %v2793 = vshll.u32 %v2655, 16
      %v2795 = vrot.slane %v2793, 5
      %v2796 = vsel %vm848, %v2791, %v2795
      %v2797 = vshrl.u32 %v2655, 16
      %v2799 = vrot.slane %v2797, 4
      %v2800 = vor.u32 %v2799, %v2795
      %v2801 = vrot.slane %v2800, 4
      %v2803 = vshll.u32 %v2656, 16
      %v2805 = vrot.slane %v2803, 5
      %v2806 = vsel %vm848, %v2801, %v2805
      %v2808 = vshrl.u32 %v2657, 16
      %v2810 = vrot.slane %v2808, 4
      %v2811 = vshll.u32 %v2657, 16
      %v2813 = vrot.slane %v2811, 5
      %v2814 = vor.u32 %v2810, %v2813
      %v2815 = vrot.slane %v2814, 4
      %v2817 = vshll.u32 %v2658, 16
      %v2819 = vrot.slane %v2817, 5
      %v2820 = vsel %vm848, %v2815, %v2819
      %v2821 = vshrl.u32 %v2658, 16
      %v2823 = vrot.slane %v2821, 4
      %v2824 = vor.u32 %v2823, %v2819
      %v2825 = vrot.slane %v2824, 4
      %v2827 = vshll.u32 %v2659, 16
      %v2829 = vrot.slane %v2827, 5
      %v2830 = vsel %vm848, %v2825, %v2829
      %v2832 = vshrl.u32 %v2660, 16
      %v2834 = vrot.slane %v2832, 4
      %v2835 = vshll.u32 %v2660, 16
      %v2837 = vrot.slane %v2835, 5
      %v2838 = vor.u32 %v2834, %v2837
      %v2839 = vrot.slane %v2838, 4
      %v2841 = vshll.u32 %v2661, 16
      %v2843 = vrot.slane %v2841, 5
      %v2844 = vsel %vm848, %v2839, %v2843
      %v2845 = vshrl.u32 %v2661, 16
      %v2847 = vrot.slane %v2845, 4
      %v2848 = vor.u32 %v2847, %v2843
      %v2849 = vrot.slane %v2848, 4
      %v2851 = vshll.u32 %v2662, 16
      %v2853 = vrot.slane %v2851, 5
      %v2854 = vsel %vm848, %v2849, %v2853
      %s2855 = scalar_lea.vmem %s3, 14
      %v2856 = vld [vmem:[%s2855] sm:$0x3]
      %v2857 = vunpack.c.l.b16 %v2676
      %v2858 = vunpack.c.l.b16 %v2686
      %v2859 = vunpack.c.l.b16 %v2700
      %v2860 = vunpack.c.l.b16 %v2710
      %v2861 = vunpack.c.l.b16 %v2724
      %v2862 = vunpack.c.l.b16 %v2734
      %v2863 = vunpack.c.l.b16 %v2748
      %v2864 = vunpack.c.l.b16 %v2758
      %v2865 = vunpack.c.l.b16 %v2772
      %v2866 = vunpack.c.l.b16 %v2782
      %v2867 = vunpack.c.l.b16 %v2796
      %v2868 = vunpack.c.l.b16 %v2806
      %v2869 = vunpack.c.l.b16 %v2820
      %v2870 = vunpack.c.l.b16 %v2830
      %v2871 = vunpack.c.l.b16 %v2844
      %v2872 = vunpack.c.l.b16 %v2854
      %v2873 = vpack.c.b16 %v2858, %v2857
      %v2874 = vpack.c.b16 %v2860, %v2859
      %v2875 = vpack.c.b16 %v2862, %v2861
      %v2876 = vpack.c.b16 %v2864, %v2863
      %v2877 = vpack.c.b16 %v2866, %v2865
      %v2878 = vpack.c.b16 %v2868, %v2867
      %v2879 = vpack.c.b16 %v2870, %v2869
      %v2880 = vpack.c.b16 %v2872, %v2871
      %v2882 = vsel %vm1067, %v2873, 0
      %v2885 = vsel %vm1067, %v2874, 0
      %v2888 = vsel %vm1067, %v2875, 0
      %v2891 = vsel %vm1067, %v2876, 0
      %v2894 = vsel %vm1067, %v2877, 0
      %v2897 = vsel %vm1067, %v2878, 0
      %v2900 = vsel %vm1067, %v2879, 0
      %v2903 = vsel %vm1067, %v2880, 0
      %v2906 = vsel %vm1092, %v2856, 0
      %2908 = vmatprep.subr.bf16.mxu0 0
      %2909 = vmatpush1.bf16.msra.mxu0 0
      %2910 = vmatprep.subr.bf16.mxu0 0
      %2911 = vmatpush1.bf16.msra.mxu0 0
      %2912 = vmatprep.subr.bf16.mxu0 0
      %2913 = vmatpush1.bf16.msra.mxu0 0
      %2914 = vmatprep.subr.bf16.mxu0 0
      %2915 = vmatpush1.bf16.msra.mxu0 0
      %2916 = vmatprep.subr.bf16.mxu0 0
      %2917 = vmatpush1.bf16.msra.mxu0 0
      %2918 = vmatprep.subr.bf16.mxu0 0
      %2919 = vmatpush1.bf16.msra.mxu0 0
      %2920 = vmatprep.subr.bf16.mxu0 0
      %2921 = vmatpush1.bf16.msra.mxu0 0
      %2922 = vmatprep.subr.bf16.mxu0 0
      %2923 = vmatpush1.bf16.msra.mxu0 %v2906
      %2924 = vmatprep.subr.bf16.mxu0 0
      %2925 = vmatpush2.bf16.msra.mxu0 0
      %2926 = vmatprep.subr.bf16.mxu0 0
      %2927 = vmatpush2.bf16.msra.mxu0 0
      %2928 = vmatprep.subr.bf16.mxu0 0
      %2929 = vmatpush2.bf16.msra.mxu0 0
      %2930 = vmatprep.subr.bf16.mxu0 0
      %2931 = vmatpush2.bf16.msra.mxu0 0
      %2932 = vmatprep.subr.bf16.mxu0 0
      %2933 = vmatpush2.bf16.msra.mxu0 0
      %2934 = vmatprep.subr.bf16.mxu0 0
      %2935 = vmatpush2.bf16.msra.mxu0 0
      %2936 = vmatprep.subr.bf16.mxu0 0
      %2937 = vmatpush2.bf16.msra.mxu0 0
      %2938 = vmatprep.subr.bf16.mxu0 0
      %2939 = vmatpush2.bf16.msra.mxu0 0
      %2940 = vmatprep.mubr.bf16.mxu0 0
      %2941 = vmatmul.mubr.bf16.gmra.mxu0 %v2882
      %v2942 = vpop.f32.mrf.mxu0
      %v2943 = vadd.f32 0.0, %v2942
      %v2944 = vpop.f32.mrf.mxu0
      %v2945 = vpop.f32.mrf.mxu0
      %v2946 = vadd.f32 0.0, %v2945
      %v2947 = vpop.f32.mrf.mxu0
      %2948 = vmatprep.mubr.bf16.mxu0 0
      %2949 = vmatmul.mubr.bf16.gmra.mxu0 %v2885
      %v2950 = vpop.f32.mrf.mxu0
      %v2951 = vadd.f32 0.0, %v2950
      %v2952 = vpop.f32.mrf.mxu0
      %v2953 = vpop.f32.mrf.mxu0
      %v2954 = vadd.f32 0.0, %v2953
      %v2955 = vpop.f32.mrf.mxu0
      %2956 = vmatprep.mubr.bf16.mxu0 0
      %2957 = vmatmul.mubr.bf16.gmra.mxu0 %v2888
      %v2958 = vpop.f32.mrf.mxu0
      %v2959 = vadd.f32 0.0, %v2958
      %v2960 = vpop.f32.mrf.mxu0
      %v2961 = vpop.f32.mrf.mxu0
      %v2962 = vadd.f32 0.0, %v2961
      %v2963 = vpop.f32.mrf.mxu0
      %2964 = vmatprep.mubr.bf16.mxu0 0
      %2965 = vmatmul.mubr.bf16.gmra.mxu0 %v2891
      %v2966 = vpop.f32.mrf.mxu0
      %v2967 = vadd.f32 0.0, %v2966
      %v2968 = vpop.f32.mrf.mxu0
      %v2969 = vpop.f32.mrf.mxu0
      %v2970 = vadd.f32 0.0, %v2969
      %v2971 = vpop.f32.mrf.mxu0
      %2972 = vmatprep.mubr.bf16.mxu0 0
      %2973 = vmatmul.mubr.bf16.gmra.mxu0 %v2894
      %v2974 = vpop.f32.mrf.mxu0
      %v2975 = vadd.f32 0.0, %v2974
      %v2976 = vpop.f32.mrf.mxu0
      %v2977 = vpop.f32.mrf.mxu0
      %v2978 = vadd.f32 0.0, %v2977
      %v2979 = vpop.f32.mrf.mxu0
      %2980 = vmatprep.mubr.bf16.mxu0 0
      %2981 = vmatmul.mubr.bf16.gmra.mxu0 %v2897
      %v2982 = vpop.f32.mrf.mxu0
      %v2983 = vadd.f32 0.0, %v2982
      %v2984 = vpop.f32.mrf.mxu0
      %v2985 = vpop.f32.mrf.mxu0
      %v2986 = vadd.f32 0.0, %v2985
      %v2987 = vpop.f32.mrf.mxu0
      %2988 = vmatprep.mubr.bf16.mxu0 0
      %2989 = vmatmul.mubr.bf16.gmra.mxu0 %v2900
      %v2990 = vpop.f32.mrf.mxu0
      %v2991 = vadd.f32 0.0, %v2990
      %v2992 = vpop.f32.mrf.mxu0
      %v2993 = vpop.f32.mrf.mxu0
      %v2994 = vadd.f32 0.0, %v2993
      %v2995 = vpop.f32.mrf.mxu0
      %2996 = vmatprep.mubr.bf16.mxu0 0
      %2997 = vmatmul.mubr.bf16.gmra.mxu0 %v2903
      %v2998 = vpop.f32.mrf.mxu0
      %v2999 = vadd.f32 0.0, %v2998
      %v3000 = vpop.f32.mrf.mxu0
      %v3001 = vpop.f32.mrf.mxu0
      %v3002 = vadd.f32 0.0, %v3001
      %v3003 = vpop.f32.mrf.mxu0
      %3004 = vdwg.mxu0
      %v3005 = vadd.f32 %v2623, %v2943
      %v3006 = vadd.f32 %v2624, %v2946
      %v3007 = vadd.f32 %v2625, %v2951
      %v3008 = vadd.f32 %v2626, %v2954
      %v3009 = vadd.f32 %v2627, %v2959
      %v3010 = vadd.f32 %v2628, %v2962
      %v3011 = vadd.f32 %v2629, %v2967
      %v3012 = vadd.f32 %v2630, %v2970
      %v3013 = vadd.f32 %v2631, %v2975
      %v3014 = vadd.f32 %v2632, %v2978
      %v3015 = vadd.f32 %v2633, %v2983
      %v3016 = vadd.f32 %v2634, %v2986
      %v3017 = vadd.f32 %v2635, %v2991
      %v3018 = vadd.f32 %v2636, %v2994
      %v3019 = vadd.f32 %v2637, %v2999
      %v3020 = vadd.f32 %v2638, %v3002
      %v3021 = vld [vmem:[%s2440] sm:$0xe]
      %v3022 = vld [vmem:[%s2440 + $0xc] sm:$0xe]
      %v3023 = vld [vmem:[%s2440 + $0x18] sm:$0xe]
      %v3024 = vld [vmem:[%s2440 + $0x24] sm:$0xe]
      %v3025 = vld [vmem:[%s2440 + $0x30] sm:$0xe]
      %v3026 = vld [vmem:[%s2440 + $0x3c] sm:$0xe]
      %v3027 = vld [vmem:[%s2440 + $0x48] sm:$0xe]
      %v3028 = vld [vmem:[%s2440 + $0x54] sm:$0xe]
      %v3053 = vrot.slane %v3021, 5
      %v3054 = vrot.slane %v3053, 4
      %v3055 = vrot.slane %v2640, 5
      %v3056 = vsel %vm1383, %v3054, %v3055
      %v3057 = vrot.slane %v3055, 4
      %v3058 = vrot.slane %v2641, 5
      %v3059 = vsel %vm1383, %v3057, %v3058
      %v3060 = vrot.slane %v3022, 5
      %v3061 = vrot.slane %v3060, 4
      %v3062 = vrot.slane %v2643, 5
      %v3063 = vsel %vm1383, %v3061, %v3062
      %v3064 = vrot.slane %v3062, 4
      %v3065 = vrot.slane %v2644, 5
      %v3066 = vsel %vm1383, %v3064, %v3065
      %v3067 = vrot.slane %v3023, 5
      %v3068 = vrot.slane %v3067, 4
      %v3069 = vrot.slane %v2646, 5
      %v3070 = vsel %vm1383, %v3068, %v3069
      %v3071 = vrot.slane %v3069, 4
      %v3072 = vrot.slane %v2647, 5
      %v3073 = vsel %vm1383, %v3071, %v3072
      %v3074 = vrot.slane %v3024, 5
      %v3075 = vrot.slane %v3074, 4
      %v3076 = vrot.slane %v2649, 5
      %v3077 = vsel %vm1383, %v3075, %v3076
      %v3078 = vrot.slane %v3076, 4
      %v3079 = vrot.slane %v2650, 5
      %v3080 = vsel %vm1383, %v3078, %v3079
      %v3081 = vrot.slane %v3025, 5
      %v3082 = vrot.slane %v3081, 4
      %v3083 = vrot.slane %v2652, 5
      %v3084 = vsel %vm1383, %v3082, %v3083
      %v3085 = vrot.slane %v3083, 4
      %v3086 = vrot.slane %v2653, 5
      %v3087 = vsel %vm1383, %v3085, %v3086
      %v3088 = vrot.slane %v3026, 5
      %v3089 = vrot.slane %v3088, 4
      %v3090 = vrot.slane %v2655, 5
      %v3091 = vsel %vm1383, %v3089, %v3090
      %v3092 = vrot.slane %v3090, 4
      %v3093 = vrot.slane %v2656, 5
      %v3094 = vsel %vm1383, %v3092, %v3093
      %v3095 = vrot.slane %v3027, 5
      %v3096 = vrot.slane %v3095, 4
      %v3097 = vrot.slane %v2658, 5
      %v3098 = vsel %vm1383, %v3096, %v3097
      %v3099 = vrot.slane %v3097, 4
      %v3100 = vrot.slane %v2659, 5
      %v3101 = vsel %vm1383, %v3099, %v3100
      %v3102 = vrot.slane %v3028, 5
      %v3103 = vrot.slane %v3102, 4
      %v3104 = vrot.slane %v2661, 5
      %v3105 = vsel %vm1383, %v3103, %v3104
      %v3106 = vrot.slane %v3104, 4
      %v3107 = vrot.slane %v2662, 5
      %v3108 = vsel %vm1383, %v3106, %v3107
      %s3109 = scalar_lea.vmem %s3, 16
      %v3110 = vld [vmem:[%s3109] sm:$0x3]
      %v3111 = vunpack.c.l.b16 %v3056
      %v3112 = vunpack.c.l.b16 %v3059
      %v3113 = vunpack.c.l.b16 %v3063
      %v3114 = vunpack.c.l.b16 %v3066
      %v3115 = vunpack.c.l.b16 %v3070
      %v3116 = vunpack.c.l.b16 %v3073
      %v3117 = vunpack.c.l.b16 %v3077
      %v3118 = vunpack.c.l.b16 %v3080
      %v3119 = vunpack.c.l.b16 %v3084
      %v3120 = vunpack.c.l.b16 %v3087
      %v3121 = vunpack.c.l.b16 %v3091
      %v3122 = vunpack.c.l.b16 %v3094
      %v3123 = vunpack.c.l.b16 %v3098
      %v3124 = vunpack.c.l.b16 %v3101
      %v3125 = vunpack.c.l.b16 %v3105
      %v3126 = vunpack.c.l.b16 %v3108
      %v3127 = vpack.c.b16 %v3112, %v3111
      %v3128 = vpack.c.b16 %v3114, %v3113
      %v3129 = vpack.c.b16 %v3116, %v3115
      %v3130 = vpack.c.b16 %v3118, %v3117
      %v3131 = vpack.c.b16 %v3120, %v3119
      %v3132 = vpack.c.b16 %v3122, %v3121
      %v3133 = vpack.c.b16 %v3124, %v3123
      %v3134 = vpack.c.b16 %v3126, %v3125
      %v3136 = vsel %vm1067, %v3127, 0
      %v3139 = vsel %vm1067, %v3128, 0
      %v3142 = vsel %vm1067, %v3129, 0
      %v3145 = vsel %vm1067, %v3130, 0
      %v3148 = vsel %vm1067, %v3131, 0
      %v3151 = vsel %vm1067, %v3132, 0
      %v3154 = vsel %vm1067, %v3133, 0
      %v3157 = vsel %vm1067, %v3134, 0
      %v3160 = vsel %vm1092, %v3110, 0
      %3162 = vmatprep.subr.bf16.mxu0 0
      %3163 = vmatpush1.bf16.msra.mxu0 0
      %3164 = vmatprep.subr.bf16.mxu0 0
      %3165 = vmatpush1.bf16.msra.mxu0 0
      %3166 = vmatprep.subr.bf16.mxu0 0
      %3167 = vmatpush1.bf16.msra.mxu0 0
      %3168 = vmatprep.subr.bf16.mxu0 0
      %3169 = vmatpush1.bf16.msra.mxu0 0
      %3170 = vmatprep.subr.bf16.mxu0 0
      %3171 = vmatpush1.bf16.msra.mxu0 0
      %3172 = vmatprep.subr.bf16.mxu0 0
      %3173 = vmatpush1.bf16.msra.mxu0 0
      %3174 = vmatprep.subr.bf16.mxu0 0
      %3175 = vmatpush1.bf16.msra.mxu0 0
      %3176 = vmatprep.subr.bf16.mxu0 0
      %3177 = vmatpush1.bf16.msra.mxu0 %v3160
      %3178 = vmatprep.subr.bf16.mxu0 0
      %3179 = vmatpush2.bf16.msra.mxu0 0
      %3180 = vmatprep.subr.bf16.mxu0 0
      %3181 = vmatpush2.bf16.msra.mxu0 0
      %3182 = vmatprep.subr.bf16.mxu0 0
      %3183 = vmatpush2.bf16.msra.mxu0 0
      %3184 = vmatprep.subr.bf16.mxu0 0
      %3185 = vmatpush2.bf16.msra.mxu0 0
      %3186 = vmatprep.subr.bf16.mxu0 0
      %3187 = vmatpush2.bf16.msra.mxu0 0
      %3188 = vmatprep.subr.bf16.mxu0 0
      %3189 = vmatpush2.bf16.msra.mxu0 0
      %3190 = vmatprep.subr.bf16.mxu0 0
      %3191 = vmatpush2.bf16.msra.mxu0 0
      %3192 = vmatprep.subr.bf16.mxu0 0
      %3193 = vmatpush2.bf16.msra.mxu0 0
      %3194 = vmatprep.mubr.bf16.mxu0 0
      %3195 = vmatmul.mubr.bf16.gmra.mxu0 %v3136
      %v3196 = vpop.f32.mrf.mxu0
      %v3197 = vadd.f32 0.0, %v3196
      %v3198 = vpop.f32.mrf.mxu0
      %v3199 = vpop.f32.mrf.mxu0
      %v3200 = vadd.f32 0.0, %v3199
      %v3201 = vpop.f32.mrf.mxu0
      %3202 = vmatprep.mubr.bf16.mxu0 0
      %3203 = vmatmul.mubr.bf16.gmra.mxu0 %v3139
      %v3204 = vpop.f32.mrf.mxu0
      %v3205 = vadd.f32 0.0, %v3204
      %v3206 = vpop.f32.mrf.mxu0
      %v3207 = vpop.f32.mrf.mxu0
      %v3208 = vadd.f32 0.0, %v3207
      %v3209 = vpop.f32.mrf.mxu0
      %3210 = vmatprep.mubr.bf16.mxu0 0
      %3211 = vmatmul.mubr.bf16.gmra.mxu0 %v3142
      %v3212 = vpop.f32.mrf.mxu0
      %v3213 = vadd.f32 0.0, %v3212
      %v3214 = vpop.f32.mrf.mxu0
      %v3215 = vpop.f32.mrf.mxu0
      %v3216 = vadd.f32 0.0, %v3215
      %v3217 = vpop.f32.mrf.mxu0
      %3218 = vmatprep.mubr.bf16.mxu0 0
      %3219 = vmatmul.mubr.bf16.gmra.mxu0 %v3145
      %v3220 = vpop.f32.mrf.mxu0
      %v3221 = vadd.f32 0.0, %v3220
      %v3222 = vpop.f32.mrf.mxu0
      %v3223 = vpop.f32.mrf.mxu0
      %v3224 = vadd.f32 0.0, %v3223
      %v3225 = vpop.f32.mrf.mxu0
      %3226 = vmatprep.mubr.bf16.mxu0 0
      %3227 = vmatmul.mubr.bf16.gmra.mxu0 %v3148
      %v3228 = vpop.f32.mrf.mxu0
      %v3229 = vadd.f32 0.0, %v3228
      %v3230 = vpop.f32.mrf.mxu0
      %v3231 = vpop.f32.mrf.mxu0
      %v3232 = vadd.f32 0.0, %v3231
      %v3233 = vpop.f32.mrf.mxu0
      %3234 = vmatprep.mubr.bf16.mxu0 0
      %3235 = vmatmul.mubr.bf16.gmra.mxu0 %v3151
      %v3236 = vpop.f32.mrf.mxu0
      %v3237 = vadd.f32 0.0, %v3236
      %v3238 = vpop.f32.mrf.mxu0
      %v3239 = vpop.f32.mrf.mxu0
      %v3240 = vadd.f32 0.0, %v3239
      %v3241 = vpop.f32.mrf.mxu0
      %3242 = vmatprep.mubr.bf16.mxu0 0
      %3243 = vmatmul.mubr.bf16.gmra.mxu0 %v3154
      %v3244 = vpop.f32.mrf.mxu0
      %v3245 = vadd.f32 0.0, %v3244
      %v3246 = vpop.f32.mrf.mxu0
      %v3247 = vpop.f32.mrf.mxu0
      %v3248 = vadd.f32 0.0, %v3247
      %v3249 = vpop.f32.mrf.mxu0
      %3250 = vmatprep.mubr.bf16.mxu0 0
      %3251 = vmatmul.mubr.bf16.gmra.mxu0 %v3157
      %v3252 = vpop.f32.mrf.mxu0
      %v3253 = vadd.f32 0.0, %v3252
      %v3254 = vpop.f32.mrf.mxu0
      %v3255 = vpop.f32.mrf.mxu0
      %v3256 = vadd.f32 0.0, %v3255
      %v3257 = vpop.f32.mrf.mxu0
      %3258 = vdwg.mxu0
      %v3259 = vadd.f32 %v3005, %v3197
      %v3260 = vadd.f32 %v3006, %v3200
      %v3261 = vadd.f32 %v3007, %v3205
      %v3262 = vadd.f32 %v3008, %v3208
      %v3263 = vadd.f32 %v3009, %v3213
      %v3264 = vadd.f32 %v3010, %v3216
      %v3265 = vadd.f32 %v3011, %v3221
      %v3266 = vadd.f32 %v3012, %v3224
      %v3267 = vadd.f32 %v3013, %v3229
      %v3268 = vadd.f32 %v3014, %v3232
      %v3269 = vadd.f32 %v3015, %v3237
      %v3270 = vadd.f32 %v3016, %v3240
      %v3271 = vadd.f32 %v3017, %v3245
      %v3272 = vadd.f32 %v3018, %v3248
      %v3273 = vadd.f32 %v3019, %v3253
      %v3274 = vadd.f32 %v3020, %v3256
      %v3275 = vld [vmem:[%s4] sm:$0x1]
      %v3277 = vlaneseq
      %v3278 = vshrl.u32 %v3277, 7
      %v3279 = vsub.s32 0, %v3278
      %v3280 = vrot.slane %v3275, %v3279
      %v3282 = vmul.f32 %v3259, %v3280
      %v3283 = vmul.f32 %v3260, %v3280
      %v3284 = vmul.f32 %v3261, %v3280
      %v3285 = vmul.f32 %v3262, %v3280
      %v3286 = vmul.f32 %v3263, %v3280
      %v3287 = vmul.f32 %v3264, %v3280
      %v3288 = vmul.f32 %v3265, %v3280
      %v3289 = vmul.f32 %v3266, %v3280
      %v3290 = vmul.f32 %v3267, %v3280
      %v3291 = vmul.f32 %v3268, %v3280
      %v3292 = vmul.f32 %v3269, %v3280
      %v3293 = vmul.f32 %v3270, %v3280
      %v3294 = vmul.f32 %v3271, %v3280
      %v3295 = vmul.f32 %v3272, %v3280
      %v3296 = vmul.f32 %v3273, %v3280
      %v3297 = vmul.f32 %v3274, %v3280
      %v3298 = vld [vmem:[%s5] sm:$0x1]
      %v3300 = vlaneseq
      %v3301 = vshrl.u32 %v3300, 7
      %v3302 = vsub.s32 0, %v3301
      %v3303 = vrot.slane %v3298, %v3302
      %v3305 = vadd.f32 %v3282, %v3303
      %v3306 = vadd.f32 %v3283, %v3303
      %v3307 = vadd.f32 %v3284, %v3303
      %v3308 = vadd.f32 %v3285, %v3303
      %v3309 = vadd.f32 %v3286, %v3303
      %v3310 = vadd.f32 %v3287, %v3303
      %v3311 = vadd.f32 %v3288, %v3303
      %v3312 = vadd.f32 %v3289, %v3303
      %v3313 = vadd.f32 %v3290, %v3303
      %v3314 = vadd.f32 %v3291, %v3303
      %v3315 = vadd.f32 %v3292, %v3303
      %v3316 = vadd.f32 %v3293, %v3303
      %v3317 = vadd.f32 %v3294, %v3303
      %v3318 = vadd.f32 %v3295, %v3303
      %v3319 = vadd.f32 %v3296, %v3303
      %v3320 = vadd.f32 %v3297, %v3303
      %v3321 = vmax.f32 %v3305, 0.0
      %v3322 = vmax.f32 %v3306, 0.0
      %v3323 = vmax.f32 %v3307, 0.0
      %v3324 = vmax.f32 %v3308, 0.0
      %v3325 = vmax.f32 %v3309, 0.0
      %v3326 = vmax.f32 %v3310, 0.0
      %v3327 = vmax.f32 %v3311, 0.0
      %v3328 = vmax.f32 %v3312, 0.0
      %v3329 = vmax.f32 %v3313, 0.0
      %v3330 = vmax.f32 %v3314, 0.0
      %v3331 = vmax.f32 %v3315, 0.0
      %v3332 = vmax.f32 %v3316, 0.0
      %v3333 = vmax.f32 %v3317, 0.0
      %v3334 = vmax.f32 %v3318, 0.0
      %v3335 = vmax.f32 %v3319, 0.0
      %v3336 = vmax.f32 %v3320, 0.0
      %3337 = vst [vmem:[%s418] sm:$0xff] %v3321
      %3338 = vst [vmem:[%s418 + $0x8] sm:$0xff] %v3322
      %3339 = vst [vmem:[%s418 + $0x10] sm:$0xff] %v3323
      %3340 = vst [vmem:[%s418 + $0x18] sm:$0xff] %v3324
      %3341 = vst [vmem:[%s418 + $0x20] sm:$0xff] %v3325
      %3342 = vst [vmem:[%s418 + $0x28] sm:$0xff] %v3326
      %3343 = vst [vmem:[%s418 + $0x30] sm:$0xff] %v3327
      %3344 = vst [vmem:[%s418 + $0x38] sm:$0xff] %v3328
      %3345 = vst [vmem:[%s418 + $0x40] sm:$0xff] %v3329
      %3346 = vst [vmem:[%s418 + $0x48] sm:$0xff] %v3330
      %3347 = vst [vmem:[%s418 + $0x50] sm:$0xff] %v3331
      %3348 = vst [vmem:[%s418 + $0x58] sm:$0xff] %v3332
      %3349 = vst [vmem:[%s418 + $0x60] sm:$0xff] %v3333
      %3350 = vst [vmem:[%s418 + $0x68] sm:$0xff] %v3334
      %3351 = vst [vmem:[%s418 + $0x70] sm:$0xff] %v3335
      %3352 = vst [vmem:[%s418 + $0x78] sm:$0xff] %v3336
      %s3353 = smul.u32 8, %s22
      %p3354 = scmp.lt.s32.totalorder %s21, 1
      %s3355 = scalar_select %p3354, %s21, 1
      %p3356 = scmp.lt.s32.totalorder %s3353, 15
      %s3357 = scalar_select %p3356, %s3353, 15
      %s3358 = smul.addr %s3357, 2
      %s3359 = smul.addr %s3355, 32
      %s3360 = sadd.s32 %s3358, %s3359
      %s3361 = smul.addr %s3360, 8
      %s3362 = scalar_lea.vmem %s6, %s3361
      // Predicated region
      $region45: #{conv3x3_bn_relu.3} parent=43 // pred_check
        %p3363 = pneg %p212
      $region46: #{conv3x3_bn_relu.3} parent=43 // pred_check_branch
        %3365 = sbr.rel (%p3363) target = $region48
      $region47: #{conv3x3_bn_relu.3} parent=43 // pred_region
        %s3366 = smul.u32 8, %s22
      $region48: #{conv3x3_bn_relu.3} parent=43 // pred_fallthru
        _
    $region44: #{conv3x3_bn_relu.3} parent=5 // pred_fallthru
      _
    %p3367 = scmp.le.s32.totalorder 2, %s12
    // Predicated region
    $region49: #{conv3x3_bn_relu.3} parent=5 // pred_check
      %p3368 = pneg %p3367
    $region50: #{conv3x3_bn_relu.3} parent=5 // pred_check_branch
      %3370 = sbr.rel (%p3368) target = $region52
    $region51: #{conv3x3_bn_relu.3} parent=5 // pred_region
      %s3371 = ssub.s32 %s12, 2
      // Predicated region
      $region53: #{conv3x3_bn_relu.3} parent=51 // pred_check
        %p3372 = pneg %p218
      $region54: #{conv3x3_bn_relu.3} parent=51 // pred_check_branch
        %3374 = sbr.rel (%p3372) target = $region56
      $region55: #{conv3x3_bn_relu.3} parent=51 // pred_region
        %s3375 = smul.u32 8, %s24
        %p3376 = scmp.lt.s32.totalorder %s23, 1
        %s3377 = scalar_select %p3376, %s23, 1
        %p3378 = scmp.lt.s32.totalorder %s3375, 15
        %s3379 = scalar_select %p3378, %s3375, 15
        %s3380 = smul.addr %s3379, 2
        %s3381 = smul.addr %s3377, 32
        %s3382 = sadd.s32 %s3380, %s3381
        %s3383 = smul.addr %s3382, 8
        %s3384 = scalar_lea.vmem %s6, %s3383
      $region56: #{conv3x3_bn_relu.3} parent=51 // pred_fallthru
        _
    $region52: #{conv3x3_bn_relu.3} parent=5 // pred_fallthru
      _
  $region6: #{conv3x3_bn_relu.3} parent=0 // loop_footer
    %s16 = sadd.s32 1, %s12
  $region7: #{conv3x3_bn_relu.3} parent=0 // loop_footer_branch
    %11 = sbr.rel target = $region3
  $region8: #{conv3x3_bn_relu.3} parent=0 // loop_exit
    _

// kernel: conv3x3_bn_relu.2
$region0: #{conv3x3_bn_relu.2}
  #allocation0 [shape = 'u32[]', space=smem, size = 0x4, offset = 0x4, fixed_abs, tag = 'smem constant byte address 0x4 - core index']
  #allocation1 [shape = 'u32[144,128]{1,0:T(1,128)}', space=vmem, size = 0x12000, scoped, tag = 'internal scratch']
  #allocation2 [shape = 'bf16[10,18,4]{2,1,0:T(8,128)(2,1)}', space=vmem, size = 0xf000, scoped, tag = 'scratch operand']
  %s0 = inlined_call_operand.vmem [shape: bf16[2,16,16,4], index: 0, kind: input, shape index: {}, may-alias: {0,1,2}]
  %s1 = inlined_call_operand.vmem [shape: bf16[2,16,16,4], index: 1, kind: input, shape index: {}, may-alias: {0,1,2}]
  %s2 = inlined_call_operand.vmem [shape: bf16[2,16,16,4], index: 2, kind: input, shape index: {}, may-alias: {0,1,2}]
  %s3 = inlined_call_operand.vmem [shape: bf16[9,4,128], index: 3, kind: input, shape index: {}]
  %s4 = inlined_call_operand.vmem [shape: f32[2,2,128], index: 4, kind: output, shape index: {}]
  %s5 = sld [smem:[#allocation0]]
  $region53: #{conv3x3_bn_relu.2} parent=0
    _
  %s7 = ssub.s32 1, %s5
  %s8 = scalar_select 0, %s7, %s5
  loop: start=0, step=1, limit=6
  $region2: #{conv3x3_bn_relu.2} parent=0 // loop_pre_header
    _
  $region3: #{conv3x3_bn_relu.2} parent=0 // loop_header
    %s10 = sphi 0, %s14
    %p11 = scmp.ge.s32.totalorder %s10, 6
    %s17 = sphi 0, %s29
    %s18 = sphi 0, %s25
    %s19 = sphi 0, %s17
    %s20 = sphi 0, %s18
    %s21 = sphi 0, %s19
    %s22 = sphi 0, %s20
    %s34 = sphi 0, %s36
    %s37 = sphi 0, %s34
    %s38 = sphi 0, %s37
    %s54 = sphi 0, %s38
    %s70 = sphi 0, %s72
    %s73 = sphi 0, %s70
    %s74 = sphi 0, %s73
    %s90 = sphi 0, %s74
    %s106 = sphi 0, %s108
    %s109 = sphi 0, %s106
    %s110 = sphi 0, %s109
    %s126 = sphi 0, %s110
    %s130 = sphi 0, %s130
    %s132 = sphi 0, %s130
    %s133 = sphi 0, %s132
    %s147 = sphi 0, %s133
    %s153 = sphi 0, %s155
    %s156 = sphi 0, %s153
    %s157 = sphi 0, %s156
    %s173 = sphi 0, %s157
  $region4: #{conv3x3_bn_relu.2} parent=0 // loop_header_branch
    %13 = sbr.rel (%p11) target = $region8
  $region5: #{conv3x3_bn_relu.2} parent=0 // loop_body
    %s15 = ssub.s32 %s10, 1
    %s16 = ssub.s32 %s10, 2
    %s23 = sadd.s32 1, %s18
    %p24 = scmp.ge.s32.totalorder %s23, 2
    %s25 = scalar_select %p24, 0, %s23
    %s26 = sadd.s32 1, %s17
    %s27 = scalar_select %p24, %s26, %s17
    %p28 = scmp.ge.s32.totalorder %s27, 2
    %s29 = scalar_select %p28, 0, %s27
    %s30 = ssub.s32 %s17, %s29
    %s31 = ssub.s32 %s18, %s25
    %s32 = sor.u32 %s30, %s31
    %p33 = scmp.eq.s32.totalorder %s32, 0
    %s35 = sadd.s32 %s34, 1
    %s36 = scalar_select %p33, %s34, %s35
    %p39 = pneg %p33
    %p40 = scmp.eq.s32.totalorder %s10, 3
    %p41 = por %p39, %p40
    %p42 = scmp.ne.s32.totalorder %s34, %s37
    %p43 = scmp.eq.s32.totalorder %s10, 0
    %p44 = por %p42, %p43
    %p45 = scmp.ne.s32.totalorder %s34, %s37
    %p46 = scmp.eq.s32.totalorder %s15, 3
    %p47 = por %p45, %p46
    %p48 = scmp.ne.s32.totalorder %s37, %s38
    %p49 = scmp.eq.s32.totalorder %s15, 0
    %p50 = por %p48, %p49
    %p51 = scmp.ne.s32.totalorder %s37, %s38
    %p52 = scmp.eq.s32.totalorder %s16, 3
    %p53 = por %p51, %p52
    %p55 = scmp.ne.s32.totalorder %s38, %s54
    %p56 = scmp.eq.s32.totalorder %s16, 0
    %p57 = por %p55, %p56
    %s58 = smul.u32 %s18, 8
    %s59 = ssub.s32 %s58, 1
    %p60 = scmp.gt.s32.totalorder %s59, 0
    %s61 = scalar_select %p60, %s59, 0
    %s62 = smul.u32 %s25, 8
    %s63 = ssub.s32 %s62, 1
    %p64 = scmp.gt.s32.totalorder %s63, 0
    %s65 = scalar_select %p64, %s63, 0
    %s66 = ssub.s32 %s17, %s29
    %s67 = ssub.s32 %s61, %s65
    %s68 = sor.u32 %s66, %s67
    %p69 = scmp.eq.s32.totalorder %s68, 0
    %s71 = sadd.s32 %s70, 1
    %s72 = scalar_select %p69, %s70, %s71
    %p75 = pneg %p69
    %p76 = scmp.eq.s32.totalorder %s10, 3
    %p77 = por %p75, %p76
    %p78 = scmp.ne.s32.totalorder %s70, %s73
    %p79 = scmp.eq.s32.totalorder %s10, 0
    %p80 = por %p78, %p79
    %p81 = scmp.ne.s32.totalorder %s70, %s73
    %p82 = scmp.eq.s32.totalorder %s15, 3
    %p83 = por %p81, %p82
    %p84 = scmp.ne.s32.totalorder %s73, %s74
    %p85 = scmp.eq.s32.totalorder %s15, 0
    %p86 = por %p84, %p85
    %p87 = scmp.ne.s32.totalorder %s73, %s74
    %p88 = scmp.eq.s32.totalorder %s16, 3
    %p89 = por %p87, %p88
    %p91 = scmp.ne.s32.totalorder %s74, %s90
    %p92 = scmp.eq.s32.totalorder %s16, 0
    %p93 = por %p91, %p92
    %s94 = smul.u32 %s18, 8
    %s95 = sadd.s32 %s94, 8
    %p96 = scmp.lt.s32.totalorder %s95, 15
    %s97 = scalar_select %p96, %s95, 15
    %s98 = smul.u32 %s25, 8
    %s99 = sadd.s32 %s98, 8
    %p100 = scmp.lt.s32.totalorder %s99, 15
    %s101 = scalar_select %p100, %s99, 15
    %s102 = ssub.s32 %s17, %s29
    %s103 = ssub.s32 %s97, %s101
    %s104 = sor.u32 %s102, %s103
    %p105 = scmp.eq.s32.totalorder %s104, 0
    %s107 = sadd.s32 %s106, 1
    %s108 = scalar_select %p105, %s106, %s107
    %p111 = pneg %p105
    %p112 = scmp.eq.s32.totalorder %s10, 3
    %p113 = por %p111, %p112
    %p114 = scmp.ne.s32.totalorder %s106, %s109
    %p115 = scmp.eq.s32.totalorder %s10, 0
    %p116 = por %p114, %p115
    %p117 = scmp.ne.s32.totalorder %s106, %s109
    %p118 = scmp.eq.s32.totalorder %s15, 3
    %p119 = por %p117, %p118
    %p120 = scmp.ne.s32.totalorder %s109, %s110
    %p121 = scmp.eq.s32.totalorder %s15, 0
    %p122 = por %p120, %p121
    %p123 = scmp.ne.s32.totalorder %s109, %s110
    %p124 = scmp.eq.s32.totalorder %s16, 3
    %p125 = por %p123, %p124
    %p127 = scmp.ne.s32.totalorder %s110, %s126
    %p128 = scmp.eq.s32.totalorder %s16, 0
    %p129 = por %p127, %p128
    %s131 = sadd.s32 %s130, 1
    %p134 = scmp.eq.s32.totalorder %s10, 3
    %p135 = scmp.ne.s32.totalorder %s130, %s132
    %p136 = scmp.eq.s32.totalorder %s10, 0
    %p137 = por %p135, %p136
    %p138 = scmp.ne.s32.totalorder %s130, %s132
    %p139 = scmp.eq.s32.totalorder %s15, 3
    %p140 = por %p138, %p139
    %p141 = scmp.ne.s32.totalorder %s132, %s133
    %p142 = scmp.eq.s32.totalorder %s15, 0
    %p143 = por %p141, %p142
    %p144 = scmp.ne.s32.totalorder %s132, %s133
    %p145 = scmp.eq.s32.totalorder %s16, 3
    %p146 = por %p144, %p145
    %p148 = scmp.ne.s32.totalorder %s133, %s147
    %p149 = scmp.eq.s32.totalorder %s16, 0
    %p150 = por %p148, %p149
    %s151 = ssub.s32 %s17, %s29
    %p152 = scmp.eq.s32.totalorder %s151, 0
    %s154 = sadd.s32 %s153, 1
    %s155 = scalar_select %p152, %s153, %s154
    %p158 = pneg %p152
    %p159 = scmp.eq.s32.totalorder %s10, 3
    %p160 = por %p158, %p159
    %p161 = scmp.ne.s32.totalorder %s153, %s156
    %p162 = scmp.eq.s32.totalorder %s10, 0
    %p163 = por %p161, %p162
    %p164 = scmp.ne.s32.totalorder %s153, %s156
    %p165 = scmp.eq.s32.totalorder %s15, 3
    %p166 = por %p164, %p165
    %p167 = scmp.ne.s32.totalorder %s156, %s157
    %p168 = scmp.eq.s32.totalorder %s15, 0
    %p169 = por %p167, %p168
    %p170 = scmp.ne.s32.totalorder %s156, %s157
    %p171 = scmp.eq.s32.totalorder %s16, 3
    %p172 = por %p170, %p171
    %p174 = scmp.ne.s32.totalorder %s157, %s173
    %p175 = scmp.eq.s32.totalorder %s16, 0
    %p176 = por %p174, %p175
    %p177 = scmp.le.s32.totalorder 1, %s10
    %p178 = scmp.lt.s32.totalorder %s10, 5
    %p179 = pnand %p177, %p178
    %p180 = pneg %p179
    // Predicated region
    $region9: #{conv3x3_bn_relu.2} parent=5 // pred_check
      _
    $region10: #{conv3x3_bn_relu.2} parent=5 // pred_check_branch
      %182 = sbr.rel (%p179) target = $region12
    $region11: #{conv3x3_bn_relu.2} parent=5 // pred_region
      %s183 = ssub.s32 %s10, 1
      // Predicated region
      $region13: #{conv3x3_bn_relu.2} parent=11 // pred_check
        %p184 = pneg %p143
      $region14: #{conv3x3_bn_relu.2} parent=11 // pred_check_branch
        %186 = sbr.rel (%p184) target = $region16
      $region15: #{conv3x3_bn_relu.2} parent=11 // pred_region
        _
      $region16: #{conv3x3_bn_relu.2} parent=11 // pred_fallthru
        _
    $region12: #{conv3x3_bn_relu.2} parent=5 // pred_fallthru
      _
    %p187 = scmp.lt.s32.totalorder %s10, 4
    // Predicated region
    $region17: #{conv3x3_bn_relu.2} parent=5 // pred_check
      %p188 = pneg %p187
    $region18: #{conv3x3_bn_relu.2} parent=5 // pred_check_branch
      %190 = sbr.rel (%p188) target = $region20
    $region19: #{conv3x3_bn_relu.2} parent=5 // pred_region
      // Predicated region
      $region21: #{conv3x3_bn_relu.2} parent=19 // pred_check
        %p191 = pneg %p44
      $region22: #{conv3x3_bn_relu.2} parent=19 // pred_check_branch
        %193 = sbr.rel (%p191) target = $region24
      $region23: #{conv3x3_bn_relu.2} parent=19 // pred_region
        %s194 = smul.u32 8, %s18
        %p195 = scmp.lt.s32.totalorder %s17, 1
        %s196 = scalar_select %p195, %s17, 1
        %p197 = scmp.lt.s32.totalorder %s194, 15
        %s198 = scalar_select %p197, %s194, 15
        %s199 = smul.addr %s198, 2
        %s200 = smul.addr %s196, 32
        %s201 = sadd.s32 %s199, %s200
        %s202 = smul.addr %s201, 4
        %s203 = scalar_lea.vmem %s0, %s202
        %s204 = smul.u32 8, %s18
      $region24: #{conv3x3_bn_relu.2} parent=19 // pred_fallthru
        _
      // Predicated region
      $region25: #{conv3x3_bn_relu.2} parent=19 // pred_check
        %p205 = pneg %p80
      $region26: #{conv3x3_bn_relu.2} parent=19 // pred_check_branch
        %207 = sbr.rel (%p205) target = $region28
      $region27: #{conv3x3_bn_relu.2} parent=19 // pred_region
        %s208 = smul.u32 %s18, 8
        %s209 = ssub.s32 %s208, 1
        %p210 = scmp.gt.s32.totalorder %s209, 0
        %s211 = scalar_select %p210, %s209, 0
        %p212 = scmp.lt.s32.totalorder %s17, 1
        %s213 = scalar_select %p212, %s17, 1
        %p214 = scmp.lt.s32.totalorder %s211, 15
        %s215 = scalar_select %p214, %s211, 15
        %s216 = smul.addr %s215, 2
        %s217 = smul.addr %s213, 32
        %s218 = sadd.s32 %s216, %s217
        %s219 = smul.addr %s218, 4
        %s220 = scalar_lea.vmem %s1, %s219
        %s221 = smul.u32 %s18, 8
        %s222 = ssub.s32 %s221, 1
        %p223 = scmp.gt.s32.totalorder %s222, 0
        %s224 = scalar_select %p223, %s222, 0
      $region28: #{conv3x3_bn_relu.2} parent=19 // pred_fallthru
        _
      // Predicated region
      $region29: #{conv3x3_bn_relu.2} parent=19 // pred_check
        %p225 = pneg %p116
      $region30: #{conv3x3_bn_relu.2} parent=19 // pred_check_branch
        %227 = sbr.rel (%p225) target = $region32
      $region31: #{conv3x3_bn_relu.2} parent=19 // pred_region
        %s228 = smul.u32 %s18, 8
        %s229 = sadd.s32 %s228, 8
        %p230 = scmp.lt.s32.totalorder %s229, 15
        %s231 = scalar_select %p230, %s229, 15
        %p232 = scmp.lt.s32.totalorder %s17, 1
        %s233 = scalar_select %p232, %s17, 1
        %p234 = scmp.lt.s32.totalorder %s231, 15
        %s235 = scalar_select %p234, %s231, 15
        %s236 = smul.addr %s235, 2
        %s237 = smul.addr %s233, 32
        %s238 = sadd.s32 %s236, %s237
        %s239 = smul.addr %s238, 4
        %s240 = scalar_lea.vmem %s2, %s239
        %s241 = smul.u32 %s18, 8
        %s242 = sadd.s32 %s241, 8
        %p243 = scmp.lt.s32.totalorder %s242, 15
        %s244 = scalar_select %p243, %s242, 15
      $region32: #{conv3x3_bn_relu.2} parent=19 // pred_fallthru
        _
    $region20: #{conv3x3_bn_relu.2} parent=5 // pred_fallthru
      _
    %p245 = scmp.le.s32.totalorder 1, %s10
    %p246 = scmp.lt.s32.totalorder %s10, 5
    %p247 = pnand %p245, %p246
    %p248 = pneg %p247
    // Predicated region
    $region33: #{conv3x3_bn_relu.2} parent=5 // pred_check
      _
    $region34: #{conv3x3_bn_relu.2} parent=5 // pred_check_branch
      %250 = sbr.rel (%p247) target = $region36
    $region35: #{conv3x3_bn_relu.2} parent=5 // pred_region
      %s251 = ssub.s32 %s10, 1
      %s252 = smul.u32 8, %s20
      %p253 = scmp.lt.s32.totalorder %s19, 1
      %s254 = scalar_select %p253, %s19, 1
      %p255 = scmp.lt.s32.totalorder %s252, 15
      %s256 = scalar_select %p255, %s252, 15
      %s257 = smul.addr %s256, 2
      %s258 = smul.addr %s254, 32
      %s259 = sadd.s32 %s257, %s258
      %s260 = smul.addr %s259, 4
      %s261 = scalar_lea.vmem %s0, %s260
      %p262 = pneg %p50
      %p263 = pneg %p47
      %s264 = smul.u32 %s20, 8
      %s265 = ssub.s32 %s264, 1
      %p266 = scmp.gt.s32.totalorder %s265, 0
      %s267 = scalar_select %p266, %s265, 0
      %p268 = scmp.lt.s32.totalorder %s19, 1
      %s269 = scalar_select %p268, %s19, 1
      %p270 = scmp.lt.s32.totalorder %s267, 15
      %s271 = scalar_select %p270, %s267, 15
      %s272 = smul.addr %s271, 2
      %s273 = smul.addr %s269, 32
      %s274 = sadd.s32 %s272, %s273
      %s275 = smul.addr %s274, 4
      %s276 = scalar_lea.vmem %s1, %s275
      %p277 = pneg %p86
      %p278 = pneg %p83
      %s279 = smul.u32 %s20, 8
      %s280 = sadd.s32 %s279, 8
      %p281 = scmp.lt.s32.totalorder %s280, 15
      %s282 = scalar_select %p281, %s280, 15
      %p283 = scmp.lt.s32.totalorder %s19, 1
      %s284 = scalar_select %p283, %s19, 1
      %p285 = scmp.lt.s32.totalorder %s282, 15
      %s286 = scalar_select %p285, %s282, 15
      %s287 = smul.addr %s286, 2
      %s288 = smul.addr %s284, 32
      %s289 = sadd.s32 %s287, %s288
      %s290 = smul.addr %s289, 4
      %s291 = scalar_lea.vmem %s2, %s290
      %p292 = pneg %p122
      %p293 = pneg %p119
      %p294 = pneg %p143
      %p295 = pneg %p140
      %p296 = pneg %p169
      %p297 = pneg %p166
      %p298 = scmp.lt.s32.totalorder %s19, 1
      %s299 = scalar_select %p298, %s19, 1
      %s300 = smul.addr %s299, 2
      %s301 = scalar_lea.vmem %s4, %s300
      %s302 = smul.u32 8, %s20
      %p303 = scmp.lt.s32.totalorder %s19, 1
      %s304 = scalar_select %p303, %s19, 1
      %p305 = scmp.lt.s32.totalorder %s302, 15
      %s306 = scalar_select %p305, %s302, 15
      %s307 = smul.addr %s306, 2
      %s308 = smul.addr %s304, 32
      %s309 = sadd.s32 %s307, %s308
      %s310 = smul.addr %s309, 4
      %s311 = scalar_lea.vmem %s0, %s310
      %s312 = smul.u32 8, %s20
      %s313 = smul.u32 %s20, 8
      %s314 = ssub.s32 %s313, 1
      %p315 = scmp.gt.s32.totalorder %s314, 0
      %s316 = scalar_select %p315, %s314, 0
      %p317 = scmp.lt.s32.totalorder %s19, 1
      %s318 = scalar_select %p317, %s19, 1
      %p319 = scmp.lt.s32.totalorder %s316, 15
      %s320 = scalar_select %p319, %s316, 15
      %s321 = smul.addr %s320, 2
      %s322 = smul.addr %s318, 32
      %s323 = sadd.s32 %s321, %s322
      %s324 = smul.addr %s323, 4
      %s325 = scalar_lea.vmem %s1, %s324
      %s326 = smul.u32 %s20, 8
      %s327 = ssub.s32 %s326, 1
      %p328 = scmp.gt.s32.totalorder %s327, 0
      %s329 = scalar_select %p328, %s327, 0
      %s330 = smul.u32 %s20, 8
      %s331 = sadd.s32 %s330, 8
      %p332 = scmp.lt.s32.totalorder %s331, 15
      %s333 = scalar_select %p332, %s331, 15
      %p334 = scmp.lt.s32.totalorder %s19, 1
      %s335 = scalar_select %p334, %s19, 1
      %p336 = scmp.lt.s32.totalorder %s333, 15
      %s337 = scalar_select %p336, %s333, 15
      %s338 = smul.addr %s337, 2
      %s339 = smul.addr %s335, 32
      %s340 = sadd.s32 %s338, %s339
      %s341 = smul.addr %s340, 4
      %s342 = scalar_lea.vmem %s2, %s341
      %s343 = smul.u32 %s20, 8
      %s344 = sadd.s32 %s343, 8
      %p345 = scmp.lt.s32.totalorder %s344, 15
      %s346 = scalar_select %p345, %s344, 15
      %p347 = scmp.lt.s32.totalorder %s19, 1
      %s348 = scalar_select %p347, %s19, 1
      %s349 = smul.addr %s348, 2
      %s350 = scalar_lea.vmem %s4, %s349
      %v352 = vld [vmem:[%s311] sm:$0xf]
      %v353 = vld [vmem:[%s311 + $0x4] sm:$0xf]
      %v354 = vld [vmem:[%s311 + $0x8] sm:$0xf]
      %v355 = vld [vmem:[%s311 + $0xc] sm:$0xf]
      %v356 = vld [vmem:[%s311 + $0x10] sm:$0xf]
      %v357 = vld [vmem:[%s311 + $0x14] sm:$0xf]
      %v358 = vld [vmem:[%s311 + $0x18] sm:$0xf]
      %v359 = vld [vmem:[%s311 + $0x1c] sm:$0xf]
      %v360 = vld [vmem:[%s311 + $0x20] sm:$0xf]
      %v361 = vld [vmem:[%s311 + $0x24] sm:$0xf]
      %v362 = vld [vmem:[%s311 + $0x28] sm:$0xf]
      %v363 = vld [vmem:[%s311 + $0x2c] sm:$0xf]
      %v364 = vld [vmem:[%s311 + $0x30] sm:$0xf]
      %v365 = vld [vmem:[%s311 + $0x34] sm:$0xf]
      %v366 = vld [vmem:[%s311 + $0x38] sm:$0xf]
      %v367 = vld [vmem:[%s311 + $0x3c] sm:$0xf]
      %vm368 = vsmask.f32 256
      %vm369 = vsmask.f32 4368
      %vm370 = vmor %vm368, %vm369
      %v372 = vshrl.u32 %v352, 16
      %v374 = vrot.slane %v372, 7
      %v375 = vshll.u32 %v352, 16
      %v377 = vor.u32 %v374, %v375
      %v378 = vrot.slane %v374, 4
      %v380 = vshrl.u32 %v353, 16
      %v382 = vrot.slane %v380, 7
      %v383 = vshll.u32 %v353, 16
      %v385 = vor.u32 %v382, %v383
      %v386 = vsel %vm370, %v378, %v385
      %v387 = vrot.slane %v382, 4
      %v389 = vshrl.u32 %v354, 16
      %v391 = vrot.slane %v389, 7
      %v392 = vshll.u32 %v354, 16
      %v394 = vor.u32 %v391, %v392
      %v395 = vrot.slane %v391, 4
      %v397 = vshrl.u32 %v355, 16
      %v399 = vrot.slane %v397, 7
      %v400 = vshll.u32 %v355, 16
      %v402 = vor.u32 %v399, %v400
      %v403 = vsel %vm370, %v395, %v402
      %v404 = vrot.slane %v399, 4
      %v406 = vshrl.u32 %v356, 16
      %v408 = vrot.slane %v406, 7
      %v409 = vshll.u32 %v356, 16
      %v411 = vor.u32 %v408, %v409
      %v412 = vrot.slane %v408, 4
      %v414 = vshrl.u32 %v357, 16
      %v416 = vrot.slane %v414, 7
      %v417 = vshll.u32 %v357, 16
      %v419 = vor.u32 %v416, %v417
      %v420 = vsel %vm370, %v412, %v419
      %v421 = vrot.slane %v416, 4
      %v423 = vshrl.u32 %v358, 16
      %v425 = vrot.slane %v423, 7
      %v426 = vshll.u32 %v358, 16
      %v428 = vor.u32 %v425, %v426
      %v429 = vrot.slane %v425, 4
      %v431 = vshrl.u32 %v359, 16
      %v433 = vrot.slane %v431, 7
      %v434 = vshll.u32 %v359, 16
      %v436 = vor.u32 %v433, %v434
      %v437 = vsel %vm370, %v429, %v436
      %v438 = vrot.slane %v433, 4
      %v440 = vshrl.u32 %v360, 16
      %v442 = vrot.slane %v440, 7
      %v443 = vshll.u32 %v360, 16
      %v445 = vor.u32 %v442, %v443
      %v446 = vrot.slane %v442, 4
      %v448 = vshrl.u32 %v361, 16
      %v450 = vrot.slane %v448, 7
      %v451 = vshll.u32 %v361, 16
      %v453 = vor.u32 %v450, %v451
      %v454 = vsel %vm370, %v446, %v453
      %v455 = vrot.slane %v450, 4
      %v457 = vshrl.u32 %v362, 16
      %v459 = vrot.slane %v457, 7
      %v460 = vshll.u32 %v362, 16
      %v462 = vor.u32 %v459, %v460
      %v463 = vrot.slane %v459, 4
      %v465 = vshrl.u32 %v363, 16
      %v467 = vrot.slane %v465, 7
      %v468 = vshll.u32 %v363, 16
      %v470 = vor.u32 %v467, %v468
      %v471 = vsel %vm370, %v463, %v470
      %v472 = vrot.slane %v467, 4
      %v474 = vshrl.u32 %v364, 16
      %v476 = vrot.slane %v474, 7
      %v477 = vshll.u32 %v364, 16
      %v479 = vor.u32 %v476, %v477
      %v480 = vrot.slane %v476, 4
      %v482 = vshrl.u32 %v365, 16
      %v484 = vrot.slane %v482, 7
      %v485 = vshll.u32 %v365, 16
      %v487 = vor.u32 %v484, %v485
      %v488 = vsel %vm370, %v480, %v487
      %v489 = vrot.slane %v484, 4
      %v491 = vshrl.u32 %v366, 16
      %v493 = vrot.slane %v491, 7
      %v494 = vshll.u32 %v366, 16
      %v496 = vor.u32 %v493, %v494
      %v497 = vrot.slane %v493, 4
      %v499 = vshrl.u32 %v367, 16
      %v501 = vrot.slane %v499, 7
      %v502 = vshll.u32 %v367, 16
      %v504 = vor.u32 %v501, %v502
      %v505 = vsel %vm370, %v497, %v504
      %v506 = vrot.slane %v501, 4
      %s531 = scalar_lea.vmem [#allocation2], 12
      %vm532 = vcmask 27648
      %vm533 = vsmask.f32 7938
      %vm534 = vmand %vm532, %vm533
      %v535 = vld [vmem:[%s531] sm:$0xf]
      %v536 = vsel %vm534, %v377, %v535
      %537 = vst [vmem:[%s531] sm:$0xf] %v536
      %vm538 = vcmask 27648
      %539 = vst.msk [vmem:[%s531 + $0x4] sm:$0xf] %vm538, %v386
      %vm540 = vcmask 24576
      %vm541 = vmand %vm540, %vm368
      %v542 = vld [vmem:[%s531 + $0x8] sm:$0x1]
      %v543 = vsel %vm541, %v387, %v542
      %544 = vst [vmem:[%s531 + $0x8] sm:$0x1] %v543
      %v545 = vld [vmem:[%s531 + $0xc] sm:$0xf]
      %v546 = vsel %vm534, %v394, %v545
      %547 = vst [vmem:[%s531 + $0xc] sm:$0xf] %v546
      %548 = vst.msk [vmem:[%s531 + $0x10] sm:$0xf] %vm538, %v403
      %v549 = vld [vmem:[%s531 + $0x14] sm:$0x1]
      %v550 = vsel %vm541, %v404, %v549
      %551 = vst [vmem:[%s531 + $0x14] sm:$0x1] %v550
      %v552 = vld [vmem:[%s531 + $0x18] sm:$0xf]
      %v553 = vsel %vm534, %v411, %v552
      %554 = vst [vmem:[%s531 + $0x18] sm:$0xf] %v553
      %555 = vst.msk [vmem:[%s531 + $0x1c] sm:$0xf] %vm538, %v420
      %v556 = vld [vmem:[%s531 + $0x20] sm:$0x1]
      %v557 = vsel %vm541, %v421, %v556
      %558 = vst [vmem:[%s531 + $0x20] sm:$0x1] %v557
      %v559 = vld [vmem:[%s531 + $0x24] sm:$0xf]
      %v560 = vsel %vm534, %v428, %v559
      %561 = vst [vmem:[%s531 + $0x24] sm:$0xf] %v560
      %562 = vst.msk [vmem:[%s531 + $0x28] sm:$0xf] %vm538, %v437
      %v563 = vld [vmem:[%s531 + $0x2c] sm:$0x1]
      %v564 = vsel %vm541, %v438, %v563
      %565 = vst [vmem:[%s531 + $0x2c] sm:$0x1] %v564
      %v566 = vld [vmem:[%s531 + $0x30] sm:$0xf]
      %v567 = vsel %vm534, %v445, %v566
      %568 = vst [vmem:[%s531 + $0x30] sm:$0xf] %v567
      %569 = vst.msk [vmem:[%s531 + $0x34] sm:$0xf] %vm538, %v454
      %v570 = vld [vmem:[%s531 + $0x38] sm:$0x1]
      %v571 = vsel %vm541, %v455, %v570
      %572 = vst [vmem:[%s531 + $0x38] sm:$0x1] %v571
      %v573 = vld [vmem:[%s531 + $0x3c] sm:$0xf]
      %v574 = vsel %vm534, %v462, %v573
      %575 = vst [vmem:[%s531 + $0x3c] sm:$0xf] %v574
      %576 = vst.msk [vmem:[%s531 + $0x40] sm:$0xf] %vm538, %v471
      %v577 = vld [vmem:[%s531 + $0x44] sm:$0x1]
      %v578 = vsel %vm541, %v472, %v577
      %579 = vst [vmem:[%s531 + $0x44] sm:$0x1] %v578
      %v580 = vld [vmem:[%s531 + $0x48] sm:$0xf]
      %v581 = vsel %vm534, %v479, %v580
      %582 = vst [vmem:[%s531 + $0x48] sm:$0xf] %v581
      %583 = vst.msk [vmem:[%s531 + $0x4c] sm:$0xf] %vm538, %v488
      %v584 = vld [vmem:[%s531 + $0x50] sm:$0x1]
      %v585 = vsel %vm541, %v489, %v584
      %586 = vst [vmem:[%s531 + $0x50] sm:$0x1] %v585
      %v587 = vld [vmem:[%s531 + $0x54] sm:$0xf]
      %v588 = vsel %vm534, %v496, %v587
      %589 = vst [vmem:[%s531 + $0x54] sm:$0xf] %v588
      %590 = vst.msk [vmem:[%s531 + $0x58] sm:$0xf] %vm538, %v505
      %v591 = vld [vmem:[%s531 + $0x5c] sm:$0x1]
      %v592 = vsel %vm541, %v506, %v591
      %593 = vst [vmem:[%s531 + $0x5c] sm:$0x1] %v592
      %p594 = scmp.gt.s32.totalorder %s20, 0
      %s595 = scalar_select %p594, 1, 0
      %s596 = scvt.s32.f32 %s595
      %p598 = scmp.ne.f32.partialorder %s596, %s596
      %s599 = sshrl.u32 %s596, 16
      %s600 = sand.u32 %s599, 1
      %s601 = sadd.s32 32767, %s600
      %s602 = sadd.s32 %s596, %s601
      %s603 = sand.u32 %s602, 4294901760
      %s604 = scalar_select %p598, 2143289344, %s603
      %s606 = sshrl.u32 %s604, 16
      %p607 = scmp.lt.s32.totalorder %s20, 1
      %s608 = scalar_select %p607, 1, 0
      %s609 = scvt.s32.f32 %s608
      %p611 = scmp.ne.f32.partialorder %s609, %s609
      %s612 = sshrl.u32 %s609, 16
      %s613 = sand.u32 %s612, 1
      %s614 = sadd.s32 32767, %s613
      %s615 = sadd.s32 %s609, %s614
      %s616 = sand.u32 %s615, 4294901760
      %s617 = scalar_select %p611, 2143289344, %s616
      %s619 = sshrl.u32 %s617, 16
      %v620 = vld [vmem:[%s325] sm:$0xf]
      %v621 = vld [vmem:[%s325 + $0x4] sm:$0xf]
      %s622 = sshll.u32 %s606, 16
      %s623 = sor.u32 %s606, %s622
      %v624 = vstv %s623
      %v626 = vmul.bf16 %v620, %v624
      %v627 = vmul.bf16 %v621, %v624
      %v629 = vshrl.u32 %v626, 16
      %v631 = vrot.slane %v629, 7
      %v632 = vshll.u32 %v626, 16
      %v634 = vor.u32 %v631, %v632
      %v635 = vrot.slane %v631, 4
      %v637 = vshrl.u32 %v627, 16
      %v639 = vrot.slane %v637, 7
      %v640 = vshll.u32 %v627, 16
      %v642 = vor.u32 %v639, %v640
      %v643 = vsel %vm370, %v635, %v642
      %v644 = vrot.slane %v639, 4
      %v648 = vld [vmem:[#allocation2] sm:$0xf]
      %v649 = vsel %vm534, %v634, %v648
      %650 = vst [vmem:[#allocation2] sm:$0xf] %v649
      %651 = vst.msk [vmem:[#allocation2 + $0x4] sm:$0xf] %vm538, %v643
      %v652 = vld [vmem:[#allocation2 + $0x8] sm:$0x1]
      %v653 = vsel %vm541, %v644, %v652
      %654 = vst [vmem:[#allocation2 + $0x8] sm:$0x1] %v653
      %v655 = vld [vmem:[%s342] sm:$0xf]
      %v656 = vld [vmem:[%s342 + $0x4] sm:$0xf]
      %s657 = sshll.u32 %s619, 16
      %s658 = sor.u32 %s619, %s657
      %v659 = vstv %s658
      %v661 = vmul.bf16 %v655, %v659
      %v662 = vmul.bf16 %v656, %v659
      %v664 = vshrl.u32 %v661, 16
      %v666 = vrot.slane %v664, 7
      %v667 = vshll.u32 %v661, 16
      %v669 = vor.u32 %v666, %v667
      %v670 = vrot.slane %v666, 4
      %v672 = vshrl.u32 %v662, 16
      %v674 = vrot.slane %v672, 7
      %v675 = vshll.u32 %v662, 16
      %v677 = vor.u32 %v674, %v675
      %v678 = vsel %vm370, %v670, %v677
      %v679 = vrot.slane %v674, 4
      %s683 = scalar_lea.vmem [#allocation2], 108
      %v684 = vld [vmem:[%s683] sm:$0xf]
      %v685 = vsel %vm534, %v669, %v684
      %686 = vst [vmem:[%s683] sm:$0xf] %v685
      %687 = vst.msk [vmem:[%s683 + $0x4] sm:$0xf] %vm538, %v678
      %v688 = vld [vmem:[%s683 + $0x8] sm:$0x1]
      %v689 = vsel %vm541, %v679, %v688
      %690 = vst [vmem:[%s683 + $0x8] sm:$0x1] %v689
      %v691 = vld [vmem:[#allocation2] sm:$0x1]
      %v692 = vsel %vm541, 0, %v691
      %693 = vst [vmem:[#allocation2] sm:$0x1] %v692
      %v694 = vld [vmem:[#allocation2 + $0xc] sm:$0x1]
      %v695 = vsel %vm541, 0, %v694
      %696 = vst [vmem:[#allocation2 + $0xc] sm:$0x1] %v695
      %v697 = vld [vmem:[#allocation2 + $0x18] sm:$0x1]
      %v698 = vsel %vm541, 0, %v697
      %699 = vst [vmem:[#allocation2 + $0x18] sm:$0x1] %v698
      %v700 = vld [vmem:[#allocation2 + $0x24] sm:$0x1]
      %v701 = vsel %vm541, 0, %v700
      %702 = vst [vmem:[#allocation2 + $0x24] sm:$0x1] %v701
      %v703 = vld [vmem:[#allocation2 + $0x30] sm:$0x1]
      %v704 = vsel %vm541, 0, %v703
      %705 = vst [vmem:[#allocation2 + $0x30] sm:$0x1] %v704
      %v706 = vld [vmem:[#allocation2 + $0x3c] sm:$0x1]
      %v707 = vsel %vm541, 0, %v706
      %708 = vst [vmem:[#allocation2 + $0x3c] sm:$0x1] %v707
      %v709 = vld [vmem:[#allocation2 + $0x48] sm:$0x1]
      %v710 = vsel %vm541, 0, %v709
      %711 = vst [vmem:[#allocation2 + $0x48] sm:$0x1] %v710
      %v712 = vld [vmem:[#allocation2 + $0x54] sm:$0x1]
      %v713 = vsel %vm541, 0, %v712
      %714 = vst [vmem:[#allocation2 + $0x54] sm:$0x1] %v713
      %v715 = vld [vmem:[#allocation2 + $0x60] sm:$0x1]
      %v716 = vsel %vm541, 0, %v715
      %717 = vst [vmem:[#allocation2 + $0x60] sm:$0x1] %v716
      %v718 = vld [vmem:[#allocation2 + $0x6c] sm:$0x1]
      %v719 = vsel %vm541, 0, %v718
      %720 = vst [vmem:[#allocation2 + $0x6c] sm:$0x1] %v719
      %vm721 = vmand %vm540, %vm533
      %v722 = vld [vmem:[#allocation2 + $0x8] sm:$0x1]
      %v723 = vsel %vm721, 0, %v722
      %724 = vst [vmem:[#allocation2 + $0x8] sm:$0x1] %v723
      %v725 = vld [vmem:[#allocation2 + $0x14] sm:$0x1]
      %v726 = vsel %vm721, 0, %v725
      %727 = vst [vmem:[#allocation2 + $0x14] sm:$0x1] %v726
      %v728 = vld [vmem:[#allocation2 + $0x20] sm:$0x1]
      %v729 = vsel %vm721, 0, %v728
      %730 = vst [vmem:[#allocation2 + $0x20] sm:$0x1] %v729
      %v731 = vld [vmem:[#allocation2 + $0x2c] sm:$0x1]
      %v732 = vsel %vm721, 0, %v731
      %733 = vst [vmem:[#allocation2 + $0x2c] sm:$0x1] %v732
      %v734 = vld [vmem:[#allocation2 + $0x38] sm:$0x1]
      %v735 = vsel %vm721, 0, %v734
      %736 = vst [vmem:[#allocation2 + $0x38] sm:$0x1] %v735
      %v737 = vld [vmem:[#allocation2 + $0x44] sm:$0x1]
      %v738 = vsel %vm721, 0, %v737
      %739 = vst [vmem:[#allocation2 + $0x44] sm:$0x1] %v738
      %v740 = vld [vmem:[#allocation2 + $0x50] sm:$0x1]
      %v741 = vsel %vm721, 0, %v740
      %742 = vst [vmem:[#allocation2 + $0x50] sm:$0x1] %v741
      %v743 = vld [vmem:[#allocation2 + $0x5c] sm:$0x1]
      %v744 = vsel %vm721, 0, %v743
      %745 = vst [vmem:[#allocation2 + $0x5c] sm:$0x1] %v744
      %v746 = vld [vmem:[#allocation2 + $0x68] sm:$0x1]
      %v747 = vsel %vm721, 0, %v746
      %748 = vst [vmem:[#allocation2 + $0x68] sm:$0x1] %v747
      %v749 = vld [vmem:[#allocation2 + $0x74] sm:$0x1]
      %v750 = vsel %vm721, 0, %v749
      %751 = vst [vmem:[#allocation2 + $0x74] sm:$0x1] %v750
      %v752 = vld [vmem:[#allocation2] sm:$0xf]
      %v753 = vld [vmem:[#allocation2 + $0x4] sm:$0xf]
      %v754 = vld [vmem:[#allocation2 + $0xc] sm:$0xf]
      %v755 = vld [vmem:[#allocation2 + $0x10] sm:$0xf]
      %v756 = vld [vmem:[#allocation2 + $0x18] sm:$0xf]
      %v757 = vld [vmem:[#allocation2 + $0x1c] sm:$0xf]
      %v758 = vld [vmem:[#allocation2 + $0x24] sm:$0xf]
      %v759 = vld [vmem:[#allocation2 + $0x28] sm:$0xf]
      %v760 = vld [vmem:[#allocation2 + $0x30] sm:$0xf]
      %v761 = vld [vmem:[#allocation2 + $0x34] sm:$0xf]
      %v762 = vld [vmem:[#allocation2 + $0x3c] sm:$0xf]
      %v763 = vld [vmem:[#allocation2 + $0x40] sm:$0xf]
      %v764 = vld [vmem:[#allocation2 + $0x48] sm:$0xf]
      %v765 = vld [vmem:[#allocation2 + $0x4c] sm:$0xf]
      %v766 = vld [vmem:[#allocation2 + $0x54] sm:$0xf]
      %v767 = vld [vmem:[#allocation2 + $0x58] sm:$0xf]
      %v768 = vld [vmem:[%s3] sm:$0x3]
      %v769 = vld [vmem:[#allocation2 + $0x8] sm:$0x1]
      %v770 = vld [vmem:[#allocation2 + $0x14] sm:$0x1]
      %v771 = vld [vmem:[#allocation2 + $0x20] sm:$0x1]
      %v772 = vld [vmem:[#allocation2 + $0x2c] sm:$0x1]
      %v773 = vld [vmem:[#allocation2 + $0x38] sm:$0x1]
      %v774 = vld [vmem:[#allocation2 + $0x44] sm:$0x1]
      %v775 = vld [vmem:[#allocation2 + $0x50] sm:$0x1]
      %v776 = vld [vmem:[#allocation2 + $0x5c] sm:$0x1]
      %vm777 = vsmask.f32 3328
      %vm778 = vsmask.f32 7440
      %vm779 = vmor %vm777, %vm778
      %v781 = vshrl.u32 %v752, 16
      %v783 = vrot.slane %v781, 4
      %v784 = vshll.u32 %v752, 16
      %v786 = vrot.slane %v784, 5
      %v787 = vor.u32 %v783, %v786
      %v788 = vrot.slane %v787, 4
      %v790 = vshll.u32 %v753, 16
      %v792 = vrot.slane %v790, 5
      %v793 = vsel %vm779, %v788, %v792
      %v794 = vshrl.u32 %v753, 16
      %v796 = vrot.slane %v794, 4
      %v797 = vor.u32 %v796, %v792
      %v798 = vrot.slane %v797, 4
      %v800 = vshll.u32 %v769, 16
      %v802 = vrot.slane %v800, 5
      %v803 = vsel %vm779, %v798, %v802
      %v805 = vshrl.u32 %v754, 16
      %v807 = vrot.slane %v805, 4
      %v808 = vshll.u32 %v754, 16
      %v810 = vrot.slane %v808, 5
      %v811 = vor.u32 %v807, %v810
      %v812 = vrot.slane %v811, 4
      %v814 = vshll.u32 %v755, 16
      %v816 = vrot.slane %v814, 5
      %v817 = vsel %vm779, %v812, %v816
      %v818 = vshrl.u32 %v755, 16
      %v820 = vrot.slane %v818, 4
      %v821 = vor.u32 %v820, %v816
      %v822 = vrot.slane %v821, 4
      %v824 = vshll.u32 %v770, 16
      %v826 = vrot.slane %v824, 5
      %v827 = vsel %vm779, %v822, %v826
      %v829 = vshrl.u32 %v756, 16
      %v831 = vrot.slane %v829, 4
      %v832 = vshll.u32 %v756, 16
      %v834 = vrot.slane %v832, 5
      %v835 = vor.u32 %v831, %v834
      %v836 = vrot.slane %v835, 4
      %v838 = vshll.u32 %v757, 16
      %v840 = vrot.slane %v838, 5
      %v841 = vsel %vm779, %v836, %v840
      %v842 = vshrl.u32 %v757, 16
      %v844 = vrot.slane %v842, 4
      %v845 = vor.u32 %v844, %v840
      %v846 = vrot.slane %v845, 4
      %v848 = vshll.u32 %v771, 16
      %v850 = vrot.slane %v848, 5
      %v851 = vsel %vm779, %v846, %v850
      %v853 = vshrl.u32 %v758, 16
      %v855 = vrot.slane %v853, 4
      %v856 = vshll.u32 %v758, 16
      %v858 = vrot.slane %v856, 5
      %v859 = vor.u32 %v855, %v858
      %v860 = vrot.slane %v859, 4
      %v862 = vshll.u32 %v759, 16
      %v864 = vrot.slane %v862, 5
      %v865 = vsel %vm779, %v860, %v864
      %v866 = vshrl.u32 %v759, 16
      %v868 = vrot.slane %v866, 4
      %v869 = vor.u32 %v868, %v864
      %v870 = vrot.slane %v869, 4
      %v872 = vshll.u32 %v772, 16
      %v874 = vrot.slane %v872, 5
      %v875 = vsel %vm779, %v870, %v874
      %v877 = vshrl.u32 %v760, 16
      %v879 = vrot.slane %v877, 4
      %v880 = vshll.u32 %v760, 16
      %v882 = vrot.slane %v880, 5
      %v883 = vor.u32 %v879, %v882
      %v884 = vrot.slane %v883, 4
      %v886 = vshll.u32 %v761, 16
      %v888 = vrot.slane %v886, 5
      %v889 = vsel %vm779, %v884, %v888
      %v890 = vshrl.u32 %v761, 16
      %v892 = vrot.slane %v890, 4
      %v893 = vor.u32 %v892, %v888
      %v894 = vrot.slane %v893, 4
      %v896 = vshll.u32 %v773, 16
      %v898 = vrot.slane %v896, 5
      %v899 = vsel %vm779, %v894, %v898
      %v901 = vshrl.u32 %v762, 16
      %v903 = vrot.slane %v901, 4
      %v904 = vshll.u32 %v762, 16
      %v906 = vrot.slane %v904, 5
      %v907 = vor.u32 %v903, %v906
      %v908 = vrot.slane %v907, 4
      %v910 = vshll.u32 %v763, 16
      %v912 = vrot.slane %v910, 5
      %v913 = vsel %vm779, %v908, %v912
      %v914 = vshrl.u32 %v763, 16
      %v916 = vrot.slane %v914, 4
      %v917 = vor.u32 %v916, %v912
      %v918 = vrot.slane %v917, 4
      %v920 = vshll.u32 %v774, 16
      %v922 = vrot.slane %v920, 5
      %v923 = vsel %vm779, %v918, %v922
      %v925 = vshrl.u32 %v764, 16
      %v927 = vrot.slane %v925, 4
      %v928 = vshll.u32 %v764, 16
      %v930 = vrot.slane %v928, 5
      %v931 = vor.u32 %v927, %v930
      %v932 = vrot.slane %v931, 4
      %v934 = vshll.u32 %v765, 16
      %v936 = vrot.slane %v934, 5
      %v937 = vsel %vm779, %v932, %v936
      %v938 = vshrl.u32 %v765, 16
      %v940 = vrot.slane %v938, 4
      %v941 = vor.u32 %v940, %v936
      %v942 = vrot.slane %v941, 4
      %v944 = vshll.u32 %v775, 16
      %v946 = vrot.slane %v944, 5
      %v947 = vsel %vm779, %v942, %v946
      %v949 = vshrl.u32 %v766, 16
      %v951 = vrot.slane %v949, 4
      %v952 = vshll.u32 %v766, 16
      %v954 = vrot.slane %v952, 5
      %v955 = vor.u32 %v951, %v954
      %v956 = vrot.slane %v955, 4
      %v958 = vshll.u32 %v767, 16
      %v960 = vrot.slane %v958, 5
      %v961 = vsel %vm779, %v956, %v960
      %v962 = vshrl.u32 %v767, 16
      %v964 = vrot.slane %v962, 4
      %v965 = vor.u32 %v964, %v960
      %v966 = vrot.slane %v965, 4
      %v968 = vshll.u32 %v776, 16
      %v970 = vrot.slane %v968, 5
      %v971 = vsel %vm779, %v966, %v970
      %s972 = scalar_lea.vmem %s3, 2
      %v973 = vld [vmem:[%s972] sm:$0x3]
      %v974 = vunpack.c.l.b16 %v793
      %v975 = vunpack.c.l.b16 %v803
      %v976 = vunpack.c.l.b16 %v817
      %v977 = vunpack.c.l.b16 %v827
      %v978 = vunpack.c.l.b16 %v841
      %v979 = vunpack.c.l.b16 %v851
      %v980 = vunpack.c.l.b16 %v865
      %v981 = vunpack.c.l.b16 %v875
      %v982 = vunpack.c.l.b16 %v889
      %v983 = vunpack.c.l.b16 %v899
      %v984 = vunpack.c.l.b16 %v913
      %v985 = vunpack.c.l.b16 %v923
      %v986 = vunpack.c.l.b16 %v937
      %v987 = vunpack.c.l.b16 %v947
      %v988 = vunpack.c.l.b16 %v961
      %v989 = vunpack.c.l.b16 %v971
      %v990 = vpack.c.b16 %v975, %v974
      %v991 = vpack.c.b16 %v977, %v976
      %v992 = vpack.c.b16 %v979, %v978
      %v993 = vpack.c.b16 %v981, %v980
      %v994 = vpack.c.b16 %v983, %v982
      %v995 = vpack.c.b16 %v985, %v984
      %v996 = vpack.c.b16 %v987, %v986
      %v997 = vpack.c.b16 %v989, %v988
      %vm998 = vcmask 31744
      %v1000 = vsel %vm998, %v990, 0
      %v1003 = vsel %vm998, %v991, 0
      %v1006 = vsel %vm998, %v992, 0
      %v1009 = vsel %vm998, %v993, 0
      %v1012 = vsel %vm998, %v994, 0
      %v1015 = vsel %vm998, %v995, 0
      %v1018 = vsel %vm998, %v996, 0
      %v1021 = vsel %vm998, %v997, 0
      %vm1023 = vcmask 1041408
      %v1025 = vsel %vm1023, %v973, 0
      %1027 = vmatprep.subr.bf16.mxu0 0
      %1028 = vmatpush1.bf16.msra.mxu0 0
      %1029 = vmatprep.subr.bf16.mxu0 0
      %1030 = vmatpush1.bf16.msra.mxu0 0
      %1031 = vmatprep.subr.bf16.mxu0 0
      %1032 = vmatpush1.bf16.msra.mxu0 0
      %1033 = vmatprep.subr.bf16.mxu0 0
      %1034 = vmatpush1.bf16.msra.mxu0 0
      %1035 = vmatprep.subr.bf16.mxu0 0
      %1036 = vmatpush1.bf16.msra.mxu0 0
      %1037 = vmatprep.subr.bf16.mxu0 0
      %1038 = vmatpush1.bf16.msra.mxu0 0
      %1039 = vmatprep.subr.bf16.mxu0 0
      %1040 = vmatpush1.bf16.msra.mxu0 0
      %1041 = vmatprep.subr.bf16.mxu0 0
      %1042 = vmatpush1.bf16.msra.mxu0 %v1025
      %1043 = vmatprep.subr.bf16.mxu0 0
      %1044 = vmatpush2.bf16.msra.mxu0 0
      %1045 = vmatprep.subr.bf16.mxu0 0
      %1046 = vmatpush2.bf16.msra.mxu0 0
      %1047 = vmatprep.subr.bf16.mxu0 0
      %1048 = vmatpush2.bf16.msra.mxu0 0
      %1049 = vmatprep.subr.bf16.mxu0 0
      %1050 = vmatpush2.bf16.msra.mxu0 0
      %1051 = vmatprep.subr.bf16.mxu0 0
      %1052 = vmatpush2.bf16.msra.mxu0 0
      %1053 = vmatprep.subr.bf16.mxu0 0
      %1054 = vmatpush2.bf16.msra.mxu0 0
      %1055 = vmatprep.subr.bf16.mxu0 0
      %1056 = vmatpush2.bf16.msra.mxu0 0
      %1057 = vmatprep.subr.bf16.mxu0 0
      %1058 = vmatpush2.bf16.msra.mxu0 0
      %1059 = vmatprep.mubr.bf16.mxu0 0
      %1060 = vmatmul.mubr.bf16.gmra.mxu0 %v1000
      %v1061 = vpop.f32.mrf.mxu0
      %v1062 = vadd.f32 0.0, %v1061
      %v1063 = vpop.f32.mrf.mxu0
      %v1064 = vpop.f32.mrf.mxu0
      %v1065 = vadd.f32 0.0, %v1064
      %v1066 = vpop.f32.mrf.mxu0
      %1067 = vmatprep.mubr.bf16.mxu0 0
      %1068 = vmatmul.mubr.bf16.gmra.mxu0 %v1003
      %v1069 = vpop.f32.mrf.mxu0
      %v1070 = vadd.f32 0.0, %v1069
      %v1071 = vpop.f32.mrf.mxu0
      %v1072 = vpop.f32.mrf.mxu0
      %v1073 = vadd.f32 0.0, %v1072
      %v1074 = vpop.f32.mrf.mxu0
      %1075 = vmatprep.mubr.bf16.mxu0 0
      %1076 = vmatmul.mubr.bf16.gmra.mxu0 %v1006
      %v1077 = vpop.f32.mrf.mxu0
      %v1078 = vadd.f32 0.0, %v1077
      %v1079 = vpop.f32.mrf.mxu0
      %v1080 = vpop.f32.mrf.mxu0
      %v1081 = vadd.f32 0.0, %v1080
      %v1082 = vpop.f32.mrf.mxu0
      %1083 = vmatprep.mubr.bf16.mxu0 0
      %1084 = vmatmul.mubr.bf16.gmra.mxu0 %v1009
      %v1085 = vpop.f32.mrf.mxu0
      %v1086 = vadd.f32 0.0, %v1085
      %v1087 = vpop.f32.mrf.mxu0
      %v1088 = vpop.f32.mrf.mxu0
      %v1089 = vadd.f32 0.0, %v1088
      %v1090 = vpop.f32.mrf.mxu0
      %1091 = vmatprep.mubr.bf16.mxu0 0
      %1092 = vmatmul.mubr.bf16.gmra.mxu0 %v1012
      %v1093 = vpop.f32.mrf.mxu0
      %v1094 = vadd.f32 0.0, %v1093
      %v1095 = vpop.f32.mrf.mxu0
      %v1096 = vpop.f32.mrf.mxu0
      %v1097 = vadd.f32 0.0, %v1096
      %v1098 = vpop.f32.mrf.mxu0
      %1099 = vmatprep.mubr.bf16.mxu0 0
      %1100 = vmatmul.mubr.bf16.gmra.mxu0 %v1015
      %v1101 = vpop.f32.mrf.mxu0
      %v1102 = vadd.f32 0.0, %v1101
      %v1103 = vpop.f32.mrf.mxu0
      %v1104 = vpop.f32.mrf.mxu0
      %v1105 = vadd.f32 0.0, %v1104
      %v1106 = vpop.f32.mrf.mxu0
      %1107 = vmatprep.mubr.bf16.mxu0 0
      %1108 = vmatmul.mubr.bf16.gmra.mxu0 %v1018
      %v1109 = vpop.f32.mrf.mxu0
      %v1110 = vadd.f32 0.0, %v1109
      %v1111 = vpop.f32.mrf.mxu0
      %v1112 = vpop.f32.mrf.mxu0
      %v1113 = vadd.f32 0.0, %v1112
      %v1114 = vpop.f32.mrf.mxu0
      %1115 = vmatprep.mubr.bf16.mxu0 0
      %1116 = vmatmul.mubr.bf16.gmra.mxu0 %v1021
      %v1117 = vpop.f32.mrf.mxu0
      %v1118 = vadd.f32 0.0, %v1117
      %v1119 = vpop.f32.mrf.mxu0
      %v1120 = vpop.f32.mrf.mxu0
      %v1121 = vadd.f32 0.0, %v1120
      %v1122 = vpop.f32.mrf.mxu0
      %1123 = vdwg.mxu0
      %v1140 = vunpack.c.l.b16 %v752
      %v1141 = vunpack.c.l.b16 %v753
      %v1142 = vunpack.c.l.b16 %v754
      %v1143 = vunpack.c.l.b16 %v755
      %v1144 = vunpack.c.l.b16 %v756
      %v1145 = vunpack.c.l.b16 %v757
      %v1146 = vunpack.c.l.b16 %v758
      %v1147 = vunpack.c.l.b16 %v759
      %v1148 = vunpack.c.l.b16 %v760
      %v1149 = vunpack.c.l.b16 %v761
      %v1150 = vunpack.c.l.b16 %v762
      %v1151 = vunpack.c.l.b16 %v763
      %v1152 = vunpack.c.l.b16 %v764
      %v1153 = vunpack.c.l.b16 %v765
      %v1154 = vunpack.c.l.b16 %v766
      %v1155 = vunpack.c.l.b16 %v767
      %v1156 = vpack.c.b16 %v1141, %v1140
      %v1157 = vpack.c.b16 %v1143, %v1142
      %v1158 = vpack.c.b16 %v1145, %v1144
      %v1159 = vpack.c.b16 %v1147, %v1146
      %v1160 = vpack.c.b16 %v1149, %v1148
      %v1161 = vpack.c.b16 %v1151, %v1150
      %v1162 = vpack.c.b16 %v1153, %v1152
      %v1163 = vpack.c.b16 %v1155, %v1154
      %v1165 = vsel %vm998, %v1156, 0
      %v1168 = vsel %vm998, %v1157, 0
      %v1171 = vsel %vm998, %v1158, 0
      %v1174 = vsel %vm998, %v1159, 0
      %v1177 = vsel %vm998, %v1160, 0
      %v1180 = vsel %vm998, %v1161, 0
      %v1183 = vsel %vm998, %v1162, 0
      %v1186 = vsel %vm998, %v1163, 0
      %v1189 = vsel %vm1023, %v768, 0
      %1191 = vmatprep.subr.bf16.mxu0 0
      %1192 = vmatpush1.bf16.msra.mxu0 0
      %1193 = vmatprep.subr.bf16.mxu0 0
      %1194 = vmatpush1.bf16.msra.mxu0 0
      %1195 = vmatprep.subr.bf16.mxu0 0
      %1196 = vmatpush1.bf16.msra.mxu0 0
      %1197 = vmatprep.subr.bf16.mxu0 0
      %1198 = vmatpush1.bf16.msra.mxu0 0
      %1199 = vmatprep.subr.bf16.mxu0 0
      %1200 = vmatpush1.bf16.msra.mxu0 0
      %1201 = vmatprep.subr.bf16.mxu0 0
      %1202 = vmatpush1.bf16.msra.mxu0 0
      %1203 = vmatprep.subr.bf16.mxu0 0
      %1204 = vmatpush1.bf16.msra.mxu0 0
      %1205 = vmatprep.subr.bf16.mxu0 0
      %1206 = vmatpush1.bf16.msra.mxu0 %v1189
      %1207 = vmatprep.subr.bf16.mxu0 0
      %1208 = vmatpush2.bf16.msra.mxu0 0
      %1209 = vmatprep.subr.bf16.mxu0 0
      %1210 = vmatpush2.bf16.msra.mxu0 0
      %1211 = vmatprep.subr.bf16.mxu0 0
      %1212 = vmatpush2.bf16.msra.mxu0 0
      %1213 = vmatprep.subr.bf16.mxu0 0
      %1214 = vmatpush2.bf16.msra.mxu0 0
      %1215 = vmatprep.subr.bf16.mxu0 0
      %1216 = vmatpush2.bf16.msra.mxu0 0
      %1217 = vmatprep.subr.bf16.mxu0 0
      %1218 = vmatpush2.bf16.msra.mxu0 0
      %1219 = vmatprep.subr.bf16.mxu0 0
      %1220 = vmatpush2.bf16.msra.mxu0 0
      %1221 = vmatprep.subr.bf16.mxu0 0
      %1222 = vmatpush2.bf16.msra.mxu0 0
      %1223 = vmatprep.mubr.bf16.mxu0 0
      %1224 = vmatmul.mubr.bf16.gmra.mxu0 %v1165
      %v1225 = vpop.f32.mrf.mxu0
      %v1226 = vadd.f32 %v1062, %v1225
      %v1227 = vpop.f32.mrf.mxu0
      %v1228 = vpop.f32.mrf.mxu0
      %v1229 = vadd.f32 %v1065, %v1228
      %v1230 = vpop.f32.mrf.mxu0
      %1231 = vmatprep.mubr.bf16.mxu0 0
      %1232 = vmatmul.mubr.bf16.gmra.mxu0 %v1168
      %v1233 = vpop.f32.mrf.mxu0
      %v1234 = vadd.f32 %v1070, %v1233
      %v1235 = vpop.f32.mrf.mxu0
      %v1236 = vpop.f32.mrf.mxu0
      %v1237 = vadd.f32 %v1073, %v1236
      %v1238 = vpop.f32.mrf.mxu0
      %1239 = vmatprep.mubr.bf16.mxu0 0
      %1240 = vmatmul.mubr.bf16.gmra.mxu0 %v1171
      %v1241 = vpop.f32.mrf.mxu0
      %v1242 = vadd.f32 %v1078, %v1241
      %v1243 = vpop.f32.mrf.mxu0
      %v1244 = vpop.f32.mrf.mxu0
      %v1245 = vadd.f32 %v1081, %v1244
      %v1246 = vpop.f32.mrf.mxu0
      %1247 = vmatprep.mubr.bf16.mxu0 0
      %1248 = vmatmul.mubr.bf16.gmra.mxu0 %v1174
      %v1249 = vpop.f32.mrf.mxu0
      %v1250 = vadd.f32 %v1086, %v1249
      %v1251 = vpop.f32.mrf.mxu0
      %v1252 = vpop.f32.mrf.mxu0
      %v1253 = vadd.f32 %v1089, %v1252
      %v1254 = vpop.f32.mrf.mxu0
      %1255 = vmatprep.mubr.bf16.mxu0 0
      %1256 = vmatmul.mubr.bf16.gmra.mxu0 %v1177
      %v1257 = vpop.f32.mrf.mxu0
      %v1258 = vadd.f32 %v1094, %v1257
      %v1259 = vpop.f32.mrf.mxu0
      %v1260 = vpop.f32.mrf.mxu0
      %v1261 = vadd.f32 %v1097, %v1260
      %v1262 = vpop.f32.mrf.mxu0
      %1263 = vmatprep.mubr.bf16.mxu0 0
      %1264 = vmatmul.mubr.bf16.gmra.mxu0 %v1180
      %v1265 = vpop.f32.mrf.mxu0
      %v1266 = vadd.f32 %v1102, %v1265
      %v1267 = vpop.f32.mrf.mxu0
      %v1268 = vpop.f32.mrf.mxu0
      %v1269 = vadd.f32 %v1105, %v1268
      %v1270 = vpop.f32.mrf.mxu0
      %1271 = vmatprep.mubr.bf16.mxu0 0
      %1272 = vmatmul.mubr.bf16.gmra.mxu0 %v1183
      %v1273 = vpop.f32.mrf.mxu0
      %v1274 = vadd.f32 %v1110, %v1273
      %v1275 = vpop.f32.mrf.mxu0
      %v1276 = vpop.f32.mrf.mxu0
      %v1277 = vadd.f32 %v1113, %v1276
      %v1278 = vpop.f32.mrf.mxu0
      %1279 = vmatprep.mubr.bf16.mxu0 0
      %1280 = vmatmul.mubr.bf16.gmra.mxu0 %v1186
      %v1281 = vpop.f32.mrf.mxu0
      %v1282 = vadd.f32 %v1118, %v1281
      %v1283 = vpop.f32.mrf.mxu0
      %v1284 = vpop.f32.mrf.mxu0
      %v1285 = vadd.f32 %v1121, %v1284
      %v1286 = vpop.f32.mrf.mxu0
      %1287 = vdwg.mxu0
      %v1288 = vld [vmem:[#allocation2] sm:$0xe]
      %v1289 = vld [vmem:[#allocation2 + $0xc] sm:$0xe]
      %v1290 = vld [vmem:[#allocation2 + $0x18] sm:$0xe]
      %v1291 = vld [vmem:[#allocation2 + $0x24] sm:$0xe]
      %v1292 = vld [vmem:[#allocation2 + $0x30] sm:$0xe]
      %v1293 = vld [vmem:[#allocation2 + $0x3c] sm:$0xe]
      %v1294 = vld [vmem:[#allocation2 + $0x48] sm:$0xe]
      %v1295 = vld [vmem:[#allocation2 + $0x54] sm:$0xe]
      %vm1312 = vcmask 1042432
      %vm1313 = vcmask 1046532
      %vm1314 = vmor %vm1312, %vm1313
      %v1315 = vrot.slane %v1288, 5
      %v1316 = vrot.slane %v1315, 4
      %v1317 = vrot.slane %v753, 5
      %v1318 = vsel %vm1314, %v1316, %v1317
      %v1319 = vrot.slane %v1317, 4
      %v1320 = vrot.slane %v769, 5
      %v1321 = vsel %vm1314, %v1319, %v1320
      %v1322 = vrot.slane %v1289, 5
      %v1323 = vrot.slane %v1322, 4
      %v1324 = vrot.slane %v755, 5
      %v1325 = vsel %vm1314, %v1323, %v1324
      %v1326 = vrot.slane %v1324, 4
      %v1327 = vrot.slane %v770, 5
      %v1328 = vsel %vm1314, %v1326, %v1327
      %v1329 = vrot.slane %v1290, 5
      %v1330 = vrot.slane %v1329, 4
      %v1331 = vrot.slane %v757, 5
      %v1332 = vsel %vm1314, %v1330, %v1331
      %v1333 = vrot.slane %v1331, 4
      %v1334 = vrot.slane %v771, 5
      %v1335 = vsel %vm1314, %v1333, %v1334
      %v1336 = vrot.slane %v1291, 5
      %v1337 = vrot.slane %v1336, 4
      %v1338 = vrot.slane %v759, 5
      %v1339 = vsel %vm1314, %v1337, %v1338
      %v1340 = vrot.slane %v1338, 4
      %v1341 = vrot.slane %v772, 5
      %v1342 = vsel %vm1314, %v1340, %v1341
      %v1343 = vrot.slane %v1292, 5
      %v1344 = vrot.slane %v1343, 4
      %v1345 = vrot.slane %v761, 5
      %v1346 = vsel %vm1314, %v1344, %v1345
      %v1347 = vrot.slane %v1345, 4
      %v1348 = vrot.slane %v773, 5
      %v1349 = vsel %vm1314, %v1347, %v1348
      %v1350 = vrot.slane %v1293, 5
      %v1351 = vrot.slane %v1350, 4
      %v1352 = vrot.slane %v763, 5
      %v1353 = vsel %vm1314, %v1351, %v1352
      %v1354 = vrot.slane %v1352, 4
      %v1355 = vrot.slane %v774, 5
      %v1356 = vsel %vm1314, %v1354, %v1355
      %v1357 = vrot.slane %v1294, 5
      %v1358 = vrot.slane %v1357, 4
      %v1359 = vrot.slane %v765, 5
      %v1360 = vsel %vm1314, %v1358, %v1359
      %v1361 = vrot.slane %v1359, 4
      %v1362 = vrot.slane %v775, 5
      %v1363 = vsel %vm1314, %v1361, %v1362
      %v1364 = vrot.slane %v1295, 5
      %v1365 = vrot.slane %v1364, 4
      %v1366 = vrot.slane %v767, 5
      %v1367 = vsel %vm1314, %v1365, %v1366
      %v1368 = vrot.slane %v1366, 4
      %v1369 = vrot.slane %v776, 5
      %v1370 = vsel %vm1314, %v1368, %v1369
      %s1371 = scalar_lea.vmem %s3, 4
      %v1372 = vld [vmem:[%s1371] sm:$0x3]
      %v1373 = vunpack.c.l.b16 %v1318
      %v1374 = vunpack.c.l.b16 %v1321
      %v1375 = vunpack.c.l.b16 %v1325
      %v1376 = vunpack.c.l.b16 %v1328
      %v1377 = vunpack.c.l.b16 %v1332
      %v1378 = vunpack.c.l.b16 %v1335
      %v1379 = vunpack.c.l.b16 %v1339
      %v1380 = vunpack.c.l.b16 %v1342
      %v1381 = vunpack.c.l.b16 %v1346
      %v1382 = vunpack.c.l.b16 %v1349
      %v1383 = vunpack.c.l.b16 %v1353
      %v1384 = vunpack.c.l.b16 %v1356
      %v1385 = vunpack.c.l.b16 %v1360
      %v1386 = vunpack.c.l.b16 %v1363
      %v1387 = vunpack.c.l.b16 %v1367
      %v1388 = vunpack.c.l.b16 %v1370
      %v1389 = vpack.c.b16 %v1374, %v1373
      %v1390 = vpack.c.b16 %v1376, %v1375
      %v1391 = vpack.c.b16 %v1378, %v1377
      %v1392 = vpack.c.b16 %v1380, %v1379
      %v1393 = vpack.c.b16 %v1382, %v1381
      %v1394 = vpack.c.b16 %v1384, %v1383
      %v1395 = vpack.c.b16 %v1386, %v1385
      %v1396 = vpack.c.b16 %v1388, %v1387
      %v1398 = vsel %vm998, %v1389, 0
      %v1401 = vsel %vm998, %v1390, 0
      %v1404 = vsel %vm998, %v1391, 0
      %v1407 = vsel %vm998, %v1392, 0
      %v1410 = vsel %vm998, %v1393, 0
      %v1413 = vsel %vm998, %v1394, 0
      %v1416 = vsel %vm998, %v1395, 0
      %v1419 = vsel %vm998, %v1396, 0
      %v1422 = vsel %vm1023, %v1372, 0
      %1424 = vmatprep.subr.bf16.mxu0 0
      %1425 = vmatpush1.bf16.msra.mxu0 0
      %1426 = vmatprep.subr.bf16.mxu0 0
      %1427 = vmatpush1.bf16.msra.mxu0 0
      %1428 = vmatprep.subr.bf16.mxu0 0
      %1429 = vmatpush1.bf16.msra.mxu0 0
      %1430 = vmatprep.subr.bf16.mxu0 0
      %1431 = vmatpush1.bf16.msra.mxu0 0
      %1432 = vmatprep.subr.bf16.mxu0 0
      %1433 = vmatpush1.bf16.msra.mxu0 0
      %1434 = vmatprep.subr.bf16.mxu0 0
      %1435 = vmatpush1.bf16.msra.mxu0 0
      %1436 = vmatprep.subr.bf16.mxu0 0
      %1437 = vmatpush1.bf16.msra.mxu0 0
      %1438 = vmatprep.subr.bf16.mxu0 0
      %1439 = vmatpush1.bf16.msra.mxu0 %v1422
      %1440 = vmatprep.subr.bf16.mxu0 0
      %1441 = vmatpush2.bf16.msra.mxu0 0
      %1442 = vmatprep.subr.bf16.mxu0 0
      %1443 = vmatpush2.bf16.msra.mxu0 0
      %1444 = vmatprep.subr.bf16.mxu0 0
      %1445 = vmatpush2.bf16.msra.mxu0 0
      %1446 = vmatprep.subr.bf16.mxu0 0
      %1447 = vmatpush2.bf16.msra.mxu0 0
      %1448 = vmatprep.subr.bf16.mxu0 0
      %1449 = vmatpush2.bf16.msra.mxu0 0
      %1450 = vmatprep.subr.bf16.mxu0 0
      %1451 = vmatpush2.bf16.msra.mxu0 0
      %1452 = vmatprep.subr.bf16.mxu0 0
      %1453 = vmatpush2.bf16.msra.mxu0 0
      %1454 = vmatprep.subr.bf16.mxu0 0
      %1455 = vmatpush2.bf16.msra.mxu0 0
      %1456 = vmatprep.mubr.bf16.mxu0 0
      %1457 = vmatmul.mubr.bf16.gmra.mxu0 %v1398
      %v1458 = vpop.f32.mrf.mxu0
      %v1459 = vadd.f32 0.0, %v1458
      %v1460 = vpop.f32.mrf.mxu0
      %v1461 = vpop.f32.mrf.mxu0
      %v1462 = vadd.f32 0.0, %v1461
      %v1463 = vpop.f32.mrf.mxu0
      %1464 = vmatprep.mubr.bf16.mxu0 0
      %1465 = vmatmul.mubr.bf16.gmra.mxu0 %v1401
      %v1466 = vpop.f32.mrf.mxu0
      %v1467 = vadd.f32 0.0, %v1466
      %v1468 = vpop.f32.mrf.mxu0
      %v1469 = vpop.f32.mrf.mxu0
      %v1470 = vadd.f32 0.0, %v1469
      %v1471 = vpop.f32.mrf.mxu0
      %1472 = vmatprep.mubr.bf16.mxu0 0
      %1473 = vmatmul.mubr.bf16.gmra.mxu0 %v1404
      %v1474 = vpop.f32.mrf.mxu0
      %v1475 = vadd.f32 0.0, %v1474
      %v1476 = vpop.f32.mrf.mxu0
      %v1477 = vpop.f32.mrf.mxu0
      %v1478 = vadd.f32 0.0, %v1477
      %v1479 = vpop.f32.mrf.mxu0
      %1480 = vmatprep.mubr.bf16.mxu0 0
      %1481 = vmatmul.mubr.bf16.gmra.mxu0 %v1407
      %v1482 = vpop.f32.mrf.mxu0
      %v1483 = vadd.f32 0.0, %v1482
      %v1484 = vpop.f32.mrf.mxu0
      %v1485 = vpop.f32.mrf.mxu0
      %v1486 = vadd.f32 0.0, %v1485
      %v1487 = vpop.f32.mrf.mxu0
      %1488 = vmatprep.mubr.bf16.mxu0 0
      %1489 = vmatmul.mubr.bf16.gmra.mxu0 %v1410
      %v1490 = vpop.f32.mrf.mxu0
      %v1491 = vadd.f32 0.0, %v1490
      %v1492 = vpop.f32.mrf.mxu0
      %v1493 = vpop.f32.mrf.mxu0
      %v1494 = vadd.f32 0.0, %v1493
      %v1495 = vpop.f32.mrf.mxu0
      %1496 = vmatprep.mubr.bf16.mxu0 0
      %1497 = vmatmul.mubr.bf16.gmra.mxu0 %v1413
      %v1498 = vpop.f32.mrf.mxu0
      %v1499 = vadd.f32 0.0, %v1498
      %v1500 = vpop.f32.mrf.mxu0
      %v1501 = vpop.f32.mrf.mxu0
      %v1502 = vadd.f32 0.0, %v1501
      %v1503 = vpop.f32.mrf.mxu0
      %1504 = vmatprep.mubr.bf16.mxu0 0
      %1505 = vmatmul.mubr.bf16.gmra.mxu0 %v1416
      %v1506 = vpop.f32.mrf.mxu0
      %v1507 = vadd.f32 0.0, %v1506
      %v1508 = vpop.f32.mrf.mxu0
      %v1509 = vpop.f32.mrf.mxu0
      %v1510 = vadd.f32 0.0, %v1509
      %v1511 = vpop.f32.mrf.mxu0
      %1512 = vmatprep.mubr.bf16.mxu0 0
      %1513 = vmatmul.mubr.bf16.gmra.mxu0 %v1419
      %v1514 = vpop.f32.mrf.mxu0
      %v1515 = vadd.f32 0.0, %v1514
      %v1516 = vpop.f32.mrf.mxu0
      %v1517 = vpop.f32.mrf.mxu0
      %v1518 = vadd.f32 0.0, %v1517
      %v1519 = vpop.f32.mrf.mxu0
      %1520 = vdwg.mxu0
      %v1521 = vadd.f32 %v1226, %v1459
      %v1522 = vadd.f32 %v1229, %v1462
      %v1523 = vadd.f32 %v1234, %v1467
      %v1524 = vadd.f32 %v1237, %v1470
      %v1525 = vadd.f32 %v1242, %v1475
      %v1526 = vadd.f32 %v1245, %v1478
      %v1527 = vadd.f32 %v1250, %v1483
      %v1528 = vadd.f32 %v1253, %v1486
      %v1529 = vadd.f32 %v1258, %v1491
      %v1530 = vadd.f32 %v1261, %v1494
      %v1531 = vadd.f32 %v1266, %v1499
      %v1532 = vadd.f32 %v1269, %v1502
      %v1533 = vadd.f32 %v1274, %v1507
      %v1534 = vadd.f32 %v1277, %v1510
      %v1535 = vadd.f32 %v1282, %v1515
      %v1536 = vadd.f32 %v1285, %v1518
      %v1537 = vld [vmem:[%s531] sm:$0xf]
      %v1538 = vld [vmem:[%s531 + $0x4] sm:$0xf]
      %v1539 = vld [vmem:[%s531 + $0xc] sm:$0xf]
      %v1540 = vld [vmem:[%s531 + $0x10] sm:$0xf]
      %v1541 = vld [vmem:[%s531 + $0x18] sm:$0xf]
      %v1542 = vld [vmem:[%s531 + $0x1c] sm:$0xf]
      %v1543 = vld [vmem:[%s531 + $0x24] sm:$0xf]
      %v1544 = vld [vmem:[%s531 + $0x28] sm:$0xf]
      %v1545 = vld [vmem:[%s531 + $0x30] sm:$0xf]
      %v1546 = vld [vmem:[%s531 + $0x34] sm:$0xf]
      %v1547 = vld [vmem:[%s531 + $0x3c] sm:$0xf]
      %v1548 = vld [vmem:[%s531 + $0x40] sm:$0xf]
      %v1549 = vld [vmem:[%s531 + $0x48] sm:$0xf]
      %v1550 = vld [vmem:[%s531 + $0x4c] sm:$0xf]
      %v1551 = vld [vmem:[%s531 + $0x54] sm:$0xf]
      %v1552 = vld [vmem:[%s531 + $0x58] sm:$0xf]
      %s1553 = scalar_lea.vmem %s3, 6
      %v1554 = vld [vmem:[%s1553] sm:$0x3]
      %v1571 = vunpack.c.l.b16 %v1537
      %v1572 = vunpack.c.l.b16 %v1538
      %v1573 = vunpack.c.l.b16 %v1539
      %v1574 = vunpack.c.l.b16 %v1540
      %v1575 = vunpack.c.l.b16 %v1541
      %v1576 = vunpack.c.l.b16 %v1542
      %v1577 = vunpack.c.l.b16 %v1543
      %v1578 = vunpack.c.l.b16 %v1544
      %v1579 = vunpack.c.l.b16 %v1545
      %v1580 = vunpack.c.l.b16 %v1546
      %v1581 = vunpack.c.l.b16 %v1547
      %v1582 = vunpack.c.l.b16 %v1548
      %v1583 = vunpack.c.l.b16 %v1549
      %v1584 = vunpack.c.l.b16 %v1550
      %v1585 = vunpack.c.l.b16 %v1551
      %v1586 = vunpack.c.l.b16 %v1552
      %v1587 = vpack.c.b16 %v1572, %v1571
      %v1588 = vpack.c.b16 %v1574, %v1573
      %v1589 = vpack.c.b16 %v1576, %v1575
      %v1590 = vpack.c.b16 %v1578, %v1577
      %v1591 = vpack.c.b16 %v1580, %v1579
      %v1592 = vpack.c.b16 %v1582, %v1581
      %v1593 = vpack.c.b16 %v1584, %v1583
      %v1594 = vpack.c.b16 %v1586, %v1585
      %v1596 = vsel %vm998, %v1587, 0
      %v1599 = vsel %vm998, %v1588, 0
      %v1602 = vsel %vm998, %v1589, 0
      %v1605 = vsel %vm998, %v1590, 0
      %v1608 = vsel %vm998, %v1591, 0
      %v1611 = vsel %vm998, %v1592, 0
      %v1614 = vsel %vm998, %v1593, 0
      %v1617 = vsel %vm998, %v1594, 0
      %v1620 = vsel %vm1023, %v1554, 0
      %1622 = vmatprep.subr.bf16.mxu0 0
      %1623 = vmatpush1.bf16.msra.mxu0 0
      %1624 = vmatprep.subr.bf16.mxu0 0
      %1625 = vmatpush1.bf16.msra.mxu0 0
      %1626 = vmatprep.subr.bf16.mxu0 0
      %1627 = vmatpush1.bf16.msra.mxu0 0
      %1628 = vmatprep.subr.bf16.mxu0 0
      %1629 = vmatpush1.bf16.msra.mxu0 0
      %1630 = vmatprep.subr.bf16.mxu0 0
      %1631 = vmatpush1.bf16.msra.mxu0 0
      %1632 = vmatprep.subr.bf16.mxu0 0
      %1633 = vmatpush1.bf16.msra.mxu0 0
      %1634 = vmatprep.subr.bf16.mxu0 0
      %1635 = vmatpush1.bf16.msra.mxu0 0
      %1636 = vmatprep.subr.bf16.mxu0 0
      %1637 = vmatpush1.bf16.msra.mxu0 %v1620
      %1638 = vmatprep.subr.bf16.mxu0 0
      %1639 = vmatpush2.bf16.msra.mxu0 0
      %1640 = vmatprep.subr.bf16.mxu0 0
      %1641 = vmatpush2.bf16.msra.mxu0 0
      %1642 = vmatprep.subr.bf16.mxu0 0
      %1643 = vmatpush2.bf16.msra.mxu0 0
      %1644 = vmatprep.subr.bf16.mxu0 0
      %1645 = vmatpush2.bf16.msra.mxu0 0
      %1646 = vmatprep.subr.bf16.mxu0 0
      %1647 = vmatpush2.bf16.msra.mxu0 0
      %1648 = vmatprep.subr.bf16.mxu0 0
      %1649 = vmatpush2.bf16.msra.mxu0 0
      %1650 = vmatprep.subr.bf16.mxu0 0
      %1651 = vmatpush2.bf16.msra.mxu0 0
      %1652 = vmatprep.subr.bf16.mxu0 0
      %1653 = vmatpush2.bf16.msra.mxu0 0
      %1654 = vmatprep.mubr.bf16.mxu0 0
      %1655 = vmatmul.mubr.bf16.gmra.mxu0 %v1596
      %v1656 = vpop.f32.mrf.mxu0
      %v1657 = vadd.f32 0.0, %v1656
      %v1658 = vpop.f32.mrf.mxu0
      %v1659 = vpop.f32.mrf.mxu0
      %v1660 = vadd.f32 0.0, %v1659
      %v1661 = vpop.f32.mrf.mxu0
      %1662 = vmatprep.mubr.bf16.mxu0 0
      %1663 = vmatmul.mubr.bf16.gmra.mxu0 %v1599
      %v1664 = vpop.f32.mrf.mxu0
      %v1665 = vadd.f32 0.0, %v1664
      %v1666 = vpop.f32.mrf.mxu0
      %v1667 = vpop.f32.mrf.mxu0
      %v1668 = vadd.f32 0.0, %v1667
      %v1669 = vpop.f32.mrf.mxu0
      %1670 = vmatprep.mubr.bf16.mxu0 0
      %1671 = vmatmul.mubr.bf16.gmra.mxu0 %v1602
      %v1672 = vpop.f32.mrf.mxu0
      %v1673 = vadd.f32 0.0, %v1672
      %v1674 = vpop.f32.mrf.mxu0
      %v1675 = vpop.f32.mrf.mxu0
      %v1676 = vadd.f32 0.0, %v1675
      %v1677 = vpop.f32.mrf.mxu0
      %1678 = vmatprep.mubr.bf16.mxu0 0
      %1679 = vmatmul.mubr.bf16.gmra.mxu0 %v1605
      %v1680 = vpop.f32.mrf.mxu0
      %v1681 = vadd.f32 0.0, %v1680
      %v1682 = vpop.f32.mrf.mxu0
      %v1683 = vpop.f32.mrf.mxu0
      %v1684 = vadd.f32 0.0, %v1683
      %v1685 = vpop.f32.mrf.mxu0
      %1686 = vmatprep.mubr.bf16.mxu0 0
      %1687 = vmatmul.mubr.bf16.gmra.mxu0 %v1608
      %v1688 = vpop.f32.mrf.mxu0
      %v1689 = vadd.f32 0.0, %v1688
      %v1690 = vpop.f32.mrf.mxu0
      %v1691 = vpop.f32.mrf.mxu0
      %v1692 = vadd.f32 0.0, %v1691
      %v1693 = vpop.f32.mrf.mxu0
      %1694 = vmatprep.mubr.bf16.mxu0 0
      %1695 = vmatmul.mubr.bf16.gmra.mxu0 %v1611
      %v1696 = vpop.f32.mrf.mxu0
      %v1697 = vadd.f32 0.0, %v1696
      %v1698 = vpop.f32.mrf.mxu0
      %v1699 = vpop.f32.mrf.mxu0
      %v1700 = vadd.f32 0.0, %v1699
      %v1701 = vpop.f32.mrf.mxu0
      %1702 = vmatprep.mubr.bf16.mxu0 0
      %1703 = vmatmul.mubr.bf16.gmra.mxu0 %v1614
      %v1704 = vpop.f32.mrf.mxu0
      %v1705 = vadd.f32 0.0, %v1704
      %v1706 = vpop.f32.mrf.mxu0
      %v1707 = vpop.f32.mrf.mxu0
      %v1708 = vadd.f32 0.0, %v1707
      %v1709 = vpop.f32.mrf.mxu0
      %1710 = vmatprep.mubr.bf16.mxu0 0
      %1711 = vmatmul.mubr.bf16.gmra.mxu0 %v1617
      %v1712 = vpop.f32.mrf.mxu0
      %v1713 = vadd.f32 0.0, %v1712
      %v1714 = vpop.f32.mrf.mxu0
      %v1715 = vpop.f32.mrf.mxu0
      %v1716 = vadd.f32 0.0, %v1715
      %v1717 = vpop.f32.mrf.mxu0
      %1718 = vdwg.mxu0
      %v1719 = vadd.f32 %v1521, %v1657
      %v1720 = vadd.f32 %v1522, %v1660
      %v1721 = vadd.f32 %v1523, %v1665
      %v1722 = vadd.f32 %v1524, %v1668
      %v1723 = vadd.f32 %v1525, %v1673
      %v1724 = vadd.f32 %v1526, %v1676
      %v1725 = vadd.f32 %v1527, %v1681
      %v1726 = vadd.f32 %v1528, %v1684
      %v1727 = vadd.f32 %v1529, %v1689
      %v1728 = vadd.f32 %v1530, %v1692
      %v1729 = vadd.f32 %v1531, %v1697
      %v1730 = vadd.f32 %v1532, %v1700
      %v1731 = vadd.f32 %v1533, %v1705
      %v1732 = vadd.f32 %v1534, %v1708
      %v1733 = vadd.f32 %v1535, %v1713
      %v1734 = vadd.f32 %v1536, %v1716
      %v1735 = vld [vmem:[%s531] sm:$0xf]
      %v1736 = vld [vmem:[%s531 + $0x4] sm:$0xf]
      %v1737 = vld [vmem:[%s531 + $0x8] sm:$0x1]
      %v1738 = vld [vmem:[%s531 + $0xc] sm:$0xf]
      %v1739 = vld [vmem:[%s531 + $0x10] sm:$0xf]
      %v1740 = vld [vmem:[%s531 + $0x14] sm:$0x1]
      %v1741 = vld [vmem:[%s531 + $0x18] sm:$0xf]
      %v1742 = vld [vmem:[%s531 + $0x1c] sm:$0xf]
      %v1743 = vld [vmem:[%s531 + $0x20] sm:$0x1]
      %v1744 = vld [vmem:[%s531 + $0x24] sm:$0xf]
      %v1745 = vld [vmem:[%s531 + $0x28] sm:$0xf]
      %v1746 = vld [vmem:[%s531 + $0x2c] sm:$0x1]
      %v1747 = vld [vmem:[%s531 + $0x30] sm:$0xf]
      %v1748 = vld [vmem:[%s531 + $0x34] sm:$0xf]
      %v1749 = vld [vmem:[%s531 + $0x38] sm:$0x1]
      %v1750 = vld [vmem:[%s531 + $0x3c] sm:$0xf]
      %v1751 = vld [vmem:[%s531 + $0x40] sm:$0xf]
      %v1752 = vld [vmem:[%s531 + $0x44] sm:$0x1]
      %v1753 = vld [vmem:[%s531 + $0x48] sm:$0xf]
      %v1754 = vld [vmem:[%s531 + $0x4c] sm:$0xf]
      %v1755 = vld [vmem:[%s531 + $0x50] sm:$0x1]
      %v1756 = vld [vmem:[%s531 + $0x54] sm:$0xf]
      %v1757 = vld [vmem:[%s531 + $0x58] sm:$0xf]
      %v1758 = vld [vmem:[%s531 + $0x5c] sm:$0x1]
      %v1760 = vshrl.u32 %v1735, 16
      %v1762 = vrot.slane %v1760, 4
      %v1763 = vshll.u32 %v1735, 16
      %v1765 = vrot.slane %v1763, 5
      %v1766 = vor.u32 %v1762, %v1765
      %v1767 = vrot.slane %v1766, 4
      %v1769 = vshll.u32 %v1736, 16
      %v1771 = vrot.slane %v1769, 5
      %v1772 = vsel %vm779, %v1767, %v1771
      %v1773 = vshrl.u32 %v1736, 16
      %v1775 = vrot.slane %v1773, 4
      %v1776 = vor.u32 %v1775, %v1771
      %v1777 = vrot.slane %v1776, 4
      %v1779 = vshll.u32 %v1737, 16
      %v1781 = vrot.slane %v1779, 5
      %v1782 = vsel %vm779, %v1777, %v1781
      %v1784 = vshrl.u32 %v1738, 16
      %v1786 = vrot.slane %v1784, 4
      %v1787 = vshll.u32 %v1738, 16
      %v1789 = vrot.slane %v1787, 5
      %v1790 = vor.u32 %v1786, %v1789
      %v1791 = vrot.slane %v1790, 4
      %v1793 = vshll.u32 %v1739, 16
      %v1795 = vrot.slane %v1793, 5
      %v1796 = vsel %vm779, %v1791, %v1795
      %v1797 = vshrl.u32 %v1739, 16
      %v1799 = vrot.slane %v1797, 4
      %v1800 = vor.u32 %v1799, %v1795
      %v1801 = vrot.slane %v1800, 4
      %v1803 = vshll.u32 %v1740, 16
      %v1805 = vrot.slane %v1803, 5
      %v1806 = vsel %vm779, %v1801, %v1805
      %v1808 = vshrl.u32 %v1741, 16
      %v1810 = vrot.slane %v1808, 4
      %v1811 = vshll.u32 %v1741, 16
      %v1813 = vrot.slane %v1811, 5
      %v1814 = vor.u32 %v1810, %v1813
      %v1815 = vrot.slane %v1814, 4
      %v1817 = vshll.u32 %v1742, 16
      %v1819 = vrot.slane %v1817, 5
      %v1820 = vsel %vm779, %v1815, %v1819
      %v1821 = vshrl.u32 %v1742, 16
      %v1823 = vrot.slane %v1821, 4
      %v1824 = vor.u32 %v1823, %v1819
      %v1825 = vrot.slane %v1824, 4
      %v1827 = vshll.u32 %v1743, 16
      %v1829 = vrot.slane %v1827, 5
      %v1830 = vsel %vm779, %v1825, %v1829
      %v1832 = vshrl.u32 %v1744, 16
      %v1834 = vrot.slane %v1832, 4
      %v1835 = vshll.u32 %v1744, 16
      %v1837 = vrot.slane %v1835, 5
      %v1838 = vor.u32 %v1834, %v1837
      %v1839 = vrot.slane %v1838, 4
      %v1841 = vshll.u32 %v1745, 16
      %v1843 = vrot.slane %v1841, 5
      %v1844 = vsel %vm779, %v1839, %v1843
      %v1845 = vshrl.u32 %v1745, 16
      %v1847 = vrot.slane %v1845, 4
      %v1848 = vor.u32 %v1847, %v1843
      %v1849 = vrot.slane %v1848, 4
      %v1851 = vshll.u32 %v1746, 16
      %v1853 = vrot.slane %v1851, 5
      %v1854 = vsel %vm779, %v1849, %v1853
      %v1856 = vshrl.u32 %v1747, 16
      %v1858 = vrot.slane %v1856, 4
      %v1859 = vshll.u32 %v1747, 16
      %v1861 = vrot.slane %v1859, 5
      %v1862 = vor.u32 %v1858, %v1861
      %v1863 = vrot.slane %v1862, 4
      %v1865 = vshll.u32 %v1748, 16
      %v1867 = vrot.slane %v1865, 5
      %v1868 = vsel %vm779, %v1863, %v1867
      %v1869 = vshrl.u32 %v1748, 16
      %v1871 = vrot.slane %v1869, 4
      %v1872 = vor.u32 %v1871, %v1867
      %v1873 = vrot.slane %v1872, 4
      %v1875 = vshll.u32 %v1749, 16
      %v1877 = vrot.slane %v1875, 5
      %v1878 = vsel %vm779, %v1873, %v1877
      %v1880 = vshrl.u32 %v1750, 16
      %v1882 = vrot.slane %v1880, 4
      %v1883 = vshll.u32 %v1750, 16
      %v1885 = vrot.slane %v1883, 5
      %v1886 = vor.u32 %v1882, %v1885
      %v1887 = vrot.slane %v1886, 4
      %v1889 = vshll.u32 %v1751, 16
      %v1891 = vrot.slane %v1889, 5
      %v1892 = vsel %vm779, %v1887, %v1891
      %v1893 = vshrl.u32 %v1751, 16
      %v1895 = vrot.slane %v1893, 4
      %v1896 = vor.u32 %v1895, %v1891
      %v1897 = vrot.slane %v1896, 4
      %v1899 = vshll.u32 %v1752, 16
      %v1901 = vrot.slane %v1899, 5
      %v1902 = vsel %vm779, %v1897, %v1901
      %v1904 = vshrl.u32 %v1753, 16
      %v1906 = vrot.slane %v1904, 4
      %v1907 = vshll.u32 %v1753, 16
      %v1909 = vrot.slane %v1907, 5
      %v1910 = vor.u32 %v1906, %v1909
      %v1911 = vrot.slane %v1910, 4
      %v1913 = vshll.u32 %v1754, 16
      %v1915 = vrot.slane %v1913, 5
      %v1916 = vsel %vm779, %v1911, %v1915
      %v1917 = vshrl.u32 %v1754, 16
      %v1919 = vrot.slane %v1917, 4
      %v1920 = vor.u32 %v1919, %v1915
      %v1921 = vrot.slane %v1920, 4
      %v1923 = vshll.u32 %v1755, 16
      %v1925 = vrot.slane %v1923, 5
      %v1926 = vsel %vm779, %v1921, %v1925
      %v1928 = vshrl.u32 %v1756, 16
      %v1930 = vrot.slane %v1928, 4
      %v1931 = vshll.u32 %v1756, 16
      %v1933 = vrot.slane %v1931, 5
      %v1934 = vor.u32 %v1930, %v1933
      %v1935 = vrot.slane %v1934, 4
      %v1937 = vshll.u32 %v1757, 16
      %v1939 = vrot.slane %v1937, 5
      %v1940 = vsel %vm779, %v1935, %v1939
      %v1941 = vshrl.u32 %v1757, 16
      %v1943 = vrot.slane %v1941, 4
      %v1944 = vor.u32 %v1943, %v1939
      %v1945 = vrot.slane %v1944, 4
      %v1947 = vshll.u32 %v1758, 16
      %v1949 = vrot.slane %v1947, 5
      %v1950 = vsel %vm779, %v1945, %v1949
      %s1951 = scalar_lea.vmem %s3, 8
      %v1952 = vld [vmem:[%s1951] sm:$0x3]
      %v1953 = vunpack.c.l.b16 %v1772
      %v1954 = vunpack.c.l.b16 %v1782
      %v1955 = vunpack.c.l.b16 %v1796
      %v1956 = vunpack.c.l.b16 %v1806
      %v1957 = vunpack.c.l.b16 %v1820
      %v1958 = vunpack.c.l.b16 %v1830
      %v1959 = vunpack.c.l.b16 %v1844
      %v1960 = vunpack.c.l.b16 %v1854
      %v1961 = vunpack.c.l.b16 %v1868
      %v1962 = vunpack.c.l.b16 %v1878
      %v1963 = vunpack.c.l.b16 %v1892
      %v1964 = vunpack.c.l.b16 %v1902
      %v1965 = vunpack.c.l.b16 %v1916
      %v1966 = vunpack.c.l.b16 %v1926
      %v1967 = vunpack.c.l.b16 %v1940
      %v1968 = vunpack.c.l.b16 %v1950
      %v1969 = vpack.c.b16 %v1954, %v1953
      %v1970 = vpack.c.b16 %v1956, %v1955
      %v1971 = vpack.c.b16 %v1958, %v1957
      %v1972 = vpack.c.b16 %v1960, %v1959
      %v1973 = vpack.c.b16 %v1962, %v1961
      %v1974 = vpack.c.b16 %v1964, %v1963
      %v1975 = vpack.c.b16 %v1966, %v1965
      %v1976 = vpack.c.b16 %v1968, %v1967
      %v1978 = vsel %vm998, %v1969, 0
      %v1981 = vsel %vm998, %v1970, 0
      %v1984 = vsel %vm998, %v1971, 0
      %v1987 = vsel %vm998, %v1972, 0
      %v1990 = vsel %vm998, %v1973, 0
      %v1993 = vsel %vm998, %v1974, 0
      %v1996 = vsel %vm998, %v1975, 0
      %v1999 = vsel %vm998, %v1976, 0
      %v2002 = vsel %vm1023, %v1952, 0
      %2004 = vmatprep.subr.bf16.mxu0 0
      %2005 = vmatpush1.bf16.msra.mxu0 0
      %2006 = vmatprep.subr.bf16.mxu0 0
      %2007 = vmatpush1.bf16.msra.mxu0 0
      %2008 = vmatprep.subr.bf16.mxu0 0
      %2009 = vmatpush1.bf16.msra.mxu0 0
      %2010 = vmatprep.subr.bf16.mxu0 0
      %2011 = vmatpush1.bf16.msra.mxu0 0
      %2012 = vmatprep.subr.bf16.mxu0 0
      %2013 = vmatpush1.bf16.msra.mxu0 0
      %2014 = vmatprep.subr.bf16.mxu0 0
      %2015 = vmatpush1.bf16.msra.mxu0 0
      %2016 = vmatprep.subr.bf16.mxu0 0
      %2017 = vmatpush1.bf16.msra.mxu0 0
      %2018 = vmatprep.subr.bf16.mxu0 0
      %2019 = vmatpush1.bf16.msra.mxu0 %v2002
      %2020 = vmatprep.subr.bf16.mxu0 0
      %2021 = vmatpush2.bf16.msra.mxu0 0
      %2022 = vmatprep.subr.bf16.mxu0 0
      %2023 = vmatpush2.bf16.msra.mxu0 0
      %2024 = vmatprep.subr.bf16.mxu0 0
      %2025 = vmatpush2.bf16.msra.mxu0 0
      %2026 = vmatprep.subr.bf16.mxu0 0
      %2027 = vmatpush2.bf16.msra.mxu0 0
      %2028 = vmatprep.subr.bf16.mxu0 0
      %2029 = vmatpush2.bf16.msra.mxu0 0
      %2030 = vmatprep.subr.bf16.mxu0 0
      %2031 = vmatpush2.bf16.msra.mxu0 0
      %2032 = vmatprep.subr.bf16.mxu0 0
      %2033 = vmatpush2.bf16.msra.mxu0 0
      %2034 = vmatprep.subr.bf16.mxu0 0
      %2035 = vmatpush2.bf16.msra.mxu0 0
      %2036 = vmatprep.mubr.bf16.mxu0 0
      %2037 = vmatmul.mubr.bf16.gmra.mxu0 %v1978
      %v2038 = vpop.f32.mrf.mxu0
      %v2039 = vadd.f32 0.0, %v2038
      %v2040 = vpop.f32.mrf.mxu0
      %v2041 = vpop.f32.mrf.mxu0
      %v2042 = vadd.f32 0.0, %v2041
      %v2043 = vpop.f32.mrf.mxu0
      %2044 = vmatprep.mubr.bf16.mxu0 0
      %2045 = vmatmul.mubr.bf16.gmra.mxu0 %v1981
      %v2046 = vpop.f32.mrf.mxu0
      %v2047 = vadd.f32 0.0, %v2046
      %v2048 = vpop.f32.mrf.mxu0
      %v2049 = vpop.f32.mrf.mxu0
      %v2050 = vadd.f32 0.0, %v2049
      %v2051 = vpop.f32.mrf.mxu0
      %2052 = vmatprep.mubr.bf16.mxu0 0
      %2053 = vmatmul.mubr.bf16.gmra.mxu0 %v1984
      %v2054 = vpop.f32.mrf.mxu0
      %v2055 = vadd.f32 0.0, %v2054
      %v2056 = vpop.f32.mrf.mxu0
      %v2057 = vpop.f32.mrf.mxu0
      %v2058 = vadd.f32 0.0, %v2057
      %v2059 = vpop.f32.mrf.mxu0
      %2060 = vmatprep.mubr.bf16.mxu0 0
      %2061 = vmatmul.mubr.bf16.gmra.mxu0 %v1987
      %v2062 = vpop.f32.mrf.mxu0
      %v2063 = vadd.f32 0.0, %v2062
      %v2064 = vpop.f32.mrf.mxu0
      %v2065 = vpop.f32.mrf.mxu0
      %v2066 = vadd.f32 0.0, %v2065
      %v2067 = vpop.f32.mrf.mxu0
      %2068 = vmatprep.mubr.bf16.mxu0 0
      %2069 = vmatmul.mubr.bf16.gmra.mxu0 %v1990
      %v2070 = vpop.f32.mrf.mxu0
      %v2071 = vadd.f32 0.0, %v2070
      %v2072 = vpop.f32.mrf.mxu0
      %v2073 = vpop.f32.mrf.mxu0
      %v2074 = vadd.f32 0.0, %v2073
      %v2075 = vpop.f32.mrf.mxu0
      %2076 = vmatprep.mubr.bf16.mxu0 0
      %2077 = vmatmul.mubr.bf16.gmra.mxu0 %v1993
      %v2078 = vpop.f32.mrf.mxu0
      %v2079 = vadd.f32 0.0, %v2078
      %v2080 = vpop.f32.mrf.mxu0
      %v2081 = vpop.f32.mrf.mxu0
      %v2082 = vadd.f32 0.0, %v2081
      %v2083 = vpop.f32.mrf.mxu0
      %2084 = vmatprep.mubr.bf16.mxu0 0
      %2085 = vmatmul.mubr.bf16.gmra.mxu0 %v1996
      %v2086 = vpop.f32.mrf.mxu0
      %v2087 = vadd.f32 0.0, %v2086
      %v2088 = vpop.f32.mrf.mxu0
      %v2089 = vpop.f32.mrf.mxu0
      %v2090 = vadd.f32 0.0, %v2089
      %v2091 = vpop.f32.mrf.mxu0
      %2092 = vmatprep.mubr.bf16.mxu0 0
      %2093 = vmatmul.mubr.bf16.gmra.mxu0 %v1999
      %v2094 = vpop.f32.mrf.mxu0
      %v2095 = vadd.f32 0.0, %v2094
      %v2096 = vpop.f32.mrf.mxu0
      %v2097 = vpop.f32.mrf.mxu0
      %v2098 = vadd.f32 0.0, %v2097
      %v2099 = vpop.f32.mrf.mxu0
      %2100 = vdwg.mxu0
      %v2101 = vadd.f32 %v1719, %v2039
      %v2102 = vadd.f32 %v1720, %v2042
      %v2103 = vadd.f32 %v1721, %v2047
      %v2104 = vadd.f32 %v1722, %v2050
      %v2105 = vadd.f32 %v1723, %v2055
      %v2106 = vadd.f32 %v1724, %v2058
      %v2107 = vadd.f32 %v1725, %v2063
      %v2108 = vadd.f32 %v1726, %v2066
      %v2109 = vadd.f32 %v1727, %v2071
      %v2110 = vadd.f32 %v1728, %v2074
      %v2111 = vadd.f32 %v1729, %v2079
      %v2112 = vadd.f32 %v1730, %v2082
      %v2113 = vadd.f32 %v1731, %v2087
      %v2114 = vadd.f32 %v1732, %v2090
      %v2115 = vadd.f32 %v1733, %v2095
      %v2116 = vadd.f32 %v1734, %v2098
      %v2117 = vld [vmem:[%s531] sm:$0xe]
      %v2118 = vld [vmem:[%s531 + $0xc] sm:$0xe]
      %v2119 = vld [vmem:[%s531 + $0x18] sm:$0xe]
      %v2120 = vld [vmem:[%s531 + $0x24] sm:$0xe]
      %v2121 = vld [vmem:[%s531 + $0x30] sm:$0xe]
      %v2122 = vld [vmem:[%s531 + $0x3c] sm:$0xe]
      %v2123 = vld [vmem:[%s531 + $0x48] sm:$0xe]
      %v2124 = vld [vmem:[%s531 + $0x54] sm:$0xe]
      %v2149 = vrot.slane %v2117, 5
      %v2150 = vrot.slane %v2149, 4
      %v2151 = vrot.slane %v1736, 5
      %v2152 = vsel %vm1314, %v2150, %v2151
      %v2153 = vrot.slane %v2151, 4
      %v2154 = vrot.slane %v1737, 5
      %v2155 = vsel %vm1314, %v2153, %v2154
      %v2156 = vrot.slane %v2118, 5
      %v2157 = vrot.slane %v2156, 4
      %v2158 = vrot.slane %v1739, 5
      %v2159 = vsel %vm1314, %v2157, %v2158
      %v2160 = vrot.slane %v2158, 4
      %v2161 = vrot.slane %v1740, 5
      %v2162 = vsel %vm1314, %v2160, %v2161
      %v2163 = vrot.slane %v2119, 5
      %v2164 = vrot.slane %v2163, 4
      %v2165 = vrot.slane %v1742, 5
      %v2166 = vsel %vm1314, %v2164, %v2165
      %v2167 = vrot.slane %v2165, 4
      %v2168 = vrot.slane %v1743, 5
      %v2169 = vsel %vm1314, %v2167, %v2168
      %v2170 = vrot.slane %v2120, 5
      %v2171 = vrot.slane %v2170, 4
      %v2172 = vrot.slane %v1745, 5
      %v2173 = vsel %vm1314, %v2171, %v2172
      %v2174 = vrot.slane %v2172, 4
      %v2175 = vrot.slane %v1746, 5
      %v2176 = vsel %vm1314, %v2174, %v2175
      %v2177 = vrot.slane %v2121, 5
      %v2178 = vrot.slane %v2177, 4
      %v2179 = vrot.slane %v1748, 5
      %v2180 = vsel %vm1314, %v2178, %v2179
      %v2181 = vrot.slane %v2179, 4
      %v2182 = vrot.slane %v1749, 5
      %v2183 = vsel %vm1314, %v2181, %v2182
      %v2184 = vrot.slane %v2122, 5
      %v2185 = vrot.slane %v2184, 4
      %v2186 = vrot.slane %v1751, 5
      %v2187 = vsel %vm1314, %v2185, %v2186
      %v2188 = vrot.slane %v2186, 4
      %v2189 = vrot.slane %v1752, 5
      %v2190 = vsel %vm1314, %v2188, %v2189
      %v2191 = vrot.slane %v2123, 5
      %v2192 = vrot.slane %v2191, 4
      %v2193 = vrot.slane %v1754, 5
      %v2194 = vsel %vm1314, %v2192, %v2193
      %v2195 = vrot.slane %v2193, 4
      %v2196 = vrot.slane %v1755, 5
      %v2197 = vsel %vm1314, %v2195, %v2196
      %v2198 = vrot.slane %v2124, 5
      %v2199 = vrot.slane %v2198, 4
      %v2200 = vrot.slane %v1757, 5
      %v2201 = vsel %vm1314, %v2199, %v2200
      %v2202 = vrot.slane %v2200, 4
      %v2203 = vrot.slane %v1758, 5
      %v2204 = vsel %vm1314, %v2202, %v2203
      %s2205 = scalar_lea.vmem %s3, 10
      %v2206 = vld [vmem:[%s2205] sm:$0x3]
      %v2207 = vunpack.c.l.b16 %v2152
      %v2208 = vunpack.c.l.b16 %v2155
      %v2209 = vunpack.c.l.b16 %v2159
      %v2210 = vunpack.c.l.b16 %v2162
      %v2211 = vunpack.c.l.b16 %v2166
      %v2212 = vunpack.c.l.b16 %v2169
      %v2213 = vunpack.c.l.b16 %v2173
      %v2214 = vunpack.c.l.b16 %v2176
      %v2215 = vunpack.c.l.b16 %v2180
      %v2216 = vunpack.c.l.b16 %v2183
      %v2217 = vunpack.c.l.b16 %v2187
      %v2218 = vunpack.c.l.b16 %v2190
      %v2219 = vunpack.c.l.b16 %v2194
      %v2220 = vunpack.c.l.b16 %v2197
      %v2221 = vunpack.c.l.b16 %v2201
      %v2222 = vunpack.c.l.b16 %v2204
      %v2223 = vpack.c.b16 %v2208, %v2207
      %v2224 = vpack.c.b16 %v2210, %v2209
      %v2225 = vpack.c.b16 %v2212, %v2211
      %v2226 = vpack.c.b16 %v2214, %v2213
      %v2227 = vpack.c.b16 %v2216, %v2215
      %v2228 = vpack.c.b16 %v2218, %v2217
      %v2229 = vpack.c.b16 %v2220, %v2219
      %v2230 = vpack.c.b16 %v2222, %v2221
      %v2232 = vsel %vm998, %v2223, 0
      %v2235 = vsel %vm998, %v2224, 0
      %v2238 = vsel %vm998, %v2225, 0
      %v2241 = vsel %vm998, %v2226, 0
      %v2244 = vsel %vm998, %v2227, 0
      %v2247 = vsel %vm998, %v2228, 0
      %v2250 = vsel %vm998, %v2229, 0
      %v2253 = vsel %vm998, %v2230, 0
      %v2256 = vsel %vm1023, %v2206, 0
      %2258 = vmatprep.subr.bf16.mxu0 0
      %2259 = vmatpush1.bf16.msra.mxu0 0
      %2260 = vmatprep.subr.bf16.mxu0 0
      %2261 = vmatpush1.bf16.msra.mxu0 0
      %2262 = vmatprep.subr.bf16.mxu0 0
      %2263 = vmatpush1.bf16.msra.mxu0 0
      %2264 = vmatprep.subr.bf16.mxu0 0
      %2265 = vmatpush1.bf16.msra.mxu0 0
      %2266 = vmatprep.subr.bf16.mxu0 0
      %2267 = vmatpush1.bf16.msra.mxu0 0
      %2268 = vmatprep.subr.bf16.mxu0 0
      %2269 = vmatpush1.bf16.msra.mxu0 0
      %2270 = vmatprep.subr.bf16.mxu0 0
      %2271 = vmatpush1.bf16.msra.mxu0 0
      %2272 = vmatprep.subr.bf16.mxu0 0
      %2273 = vmatpush1.bf16.msra.mxu0 %v2256
      %2274 = vmatprep.subr.bf16.mxu0 0
      %2275 = vmatpush2.bf16.msra.mxu0 0
      %2276 = vmatprep.subr.bf16.mxu0 0
      %2277 = vmatpush2.bf16.msra.mxu0 0
      %2278 = vmatprep.subr.bf16.mxu0 0
      %2279 = vmatpush2.bf16.msra.mxu0 0
      %2280 = vmatprep.subr.bf16.mxu0 0
      %2281 = vmatpush2.bf16.msra.mxu0 0
      %2282 = vmatprep.subr.bf16.mxu0 0
      %2283 = vmatpush2.bf16.msra.mxu0 0
      %2284 = vmatprep.subr.bf16.mxu0 0
      %2285 = vmatpush2.bf16.msra.mxu0 0
      %2286 = vmatprep.subr.bf16.mxu0 0
      %2287 = vmatpush2.bf16.msra.mxu0 0
      %2288 = vmatprep.subr.bf16.mxu0 0
      %2289 = vmatpush2.bf16.msra.mxu0 0
      %2290 = vmatprep.mubr.bf16.mxu0 0
      %2291 = vmatmul.mubr.bf16.gmra.mxu0 %v2232
      %v2292 = vpop.f32.mrf.mxu0
      %v2293 = vadd.f32 0.0, %v2292
      %v2294 = vpop.f32.mrf.mxu0
      %v2295 = vpop.f32.mrf.mxu0
      %v2296 = vadd.f32 0.0, %v2295
      %v2297 = vpop.f32.mrf.mxu0
      %2298 = vmatprep.mubr.bf16.mxu0 0
      %2299 = vmatmul.mubr.bf16.gmra.mxu0 %v2235
      %v2300 = vpop.f32.mrf.mxu0
      %v2301 = vadd.f32 0.0, %v2300
      %v2302 = vpop.f32.mrf.mxu0
      %v2303 = vpop.f32.mrf.mxu0
      %v2304 = vadd.f32 0.0, %v2303
      %v2305 = vpop.f32.mrf.mxu0
      %2306 = vmatprep.mubr.bf16.mxu0 0
      %2307 = vmatmul.mubr.bf16.gmra.mxu0 %v2238
      %v2308 = vpop.f32.mrf.mxu0
      %v2309 = vadd.f32 0.0, %v2308
      %v2310 = vpop.f32.mrf.mxu0
      %v2311 = vpop.f32.mrf.mxu0
      %v2312 = vadd.f32 0.0, %v2311
      %v2313 = vpop.f32.mrf.mxu0
      %2314 = vmatprep.mubr.bf16.mxu0 0
      %2315 = vmatmul.mubr.bf16.gmra.mxu0 %v2241
      %v2316 = vpop.f32.mrf.mxu0
      %v2317 = vadd.f32 0.0, %v2316
      %v2318 = vpop.f32.mrf.mxu0
      %v2319 = vpop.f32.mrf.mxu0
      %v2320 = vadd.f32 0.0, %v2319
      %v2321 = vpop.f32.mrf.mxu0
      %2322 = vmatprep.mubr.bf16.mxu0 0
      %2323 = vmatmul.mubr.bf16.gmra.mxu0 %v2244
      %v2324 = vpop.f32.mrf.mxu0
      %v2325 = vadd.f32 0.0, %v2324
      %v2326 = vpop.f32.mrf.mxu0
      %v2327 = vpop.f32.mrf.mxu0
      %v2328 = vadd.f32 0.0, %v2327
      %v2329 = vpop.f32.mrf.mxu0
      %2330 = vmatprep.mubr.bf16.mxu0 0
      %2331 = vmatmul.mubr.bf16.gmra.mxu0 %v2247
      %v2332 = vpop.f32.mrf.mxu0
      %v2333 = vadd.f32 0.0, %v2332
      %v2334 = vpop.f32.mrf.mxu0
      %v2335 = vpop.f32.mrf.mxu0
      %v2336 = vadd.f32 0.0, %v2335
      %v2337 = vpop.f32.mrf.mxu0
      %2338 = vmatprep.mubr.bf16.mxu0 0
      %2339 = vmatmul.mubr.bf16.gmra.mxu0 %v2250
      %v2340 = vpop.f32.mrf.mxu0
      %v2341 = vadd.f32 0.0, %v2340
      %v2342 = vpop.f32.mrf.mxu0
      %v2343 = vpop.f32.mrf.mxu0
      %v2344 = vadd.f32 0.0, %v2343
      %v2345 = vpop.f32.mrf.mxu0
      %2346 = vmatprep.mubr.bf16.mxu0 0
      %2347 = vmatmul.mubr.bf16.gmra.mxu0 %v2253
      %v2348 = vpop.f32.mrf.mxu0
      %v2349 = vadd.f32 0.0, %v2348
      %v2350 = vpop.f32.mrf.mxu0
      %v2351 = vpop.f32.mrf.mxu0
      %v2352 = vadd.f32 0.0, %v2351
      %v2353 = vpop.f32.mrf.mxu0
      %2354 = vdwg.mxu0
      %v2355 = vadd.f32 %v2101, %v2293
      %v2356 = vadd.f32 %v2102, %v2296
      %v2357 = vadd.f32 %v2103, %v2301
      %v2358 = vadd.f32 %v2104, %v2304
      %v2359 = vadd.f32 %v2105, %v2309
      %v2360 = vadd.f32 %v2106, %v2312
      %v2361 = vadd.f32 %v2107, %v2317
      %v2362 = vadd.f32 %v2108, %v2320
      %v2363 = vadd.f32 %v2109, %v2325
      %v2364 = vadd.f32 %v2110, %v2328
      %v2365 = vadd.f32 %v2111, %v2333
      %v2366 = vadd.f32 %v2112, %v2336
      %v2367 = vadd.f32 %v2113, %v2341
      %v2368 = vadd.f32 %v2114, %v2344
      %v2369 = vadd.f32 %v2115, %v2349
      %v2370 = vadd.f32 %v2116, %v2352
      %s2371 = scalar_lea.vmem [#allocation2], 24
      %v2372 = vld [vmem:[%s2371] sm:$0xf]
      %v2373 = vld [vmem:[%s2371 + $0x4] sm:$0xf]
      %v2374 = vld [vmem:[%s2371 + $0xc] sm:$0xf]
      %v2375 = vld [vmem:[%s2371 + $0x10] sm:$0xf]
      %v2376 = vld [vmem:[%s2371 + $0x18] sm:$0xf]
      %v2377 = vld [vmem:[%s2371 + $0x1c] sm:$0xf]
      %v2378 = vld [vmem:[%s2371 + $0x24] sm:$0xf]
      %v2379 = vld [vmem:[%s2371 + $0x28] sm:$0xf]
      %v2380 = vld [vmem:[%s2371 + $0x30] sm:$0xf]
      %v2381 = vld [vmem:[%s2371 + $0x34] sm:$0xf]
      %v2382 = vld [vmem:[%s2371 + $0x3c] sm:$0xf]
      %v2383 = vld [vmem:[%s2371 + $0x40] sm:$0xf]
      %v2384 = vld [vmem:[%s2371 + $0x48] sm:$0xf]
      %v2385 = vld [vmem:[%s2371 + $0x4c] sm:$0xf]
      %v2386 = vld [vmem:[%s2371 + $0x54] sm:$0xf]
      %v2387 = vld [vmem:[%s2371 + $0x58] sm:$0xf]
      %s2388 = scalar_lea.vmem %s3, 12
      %v2389 = vld [vmem:[%s2388] sm:$0x3]
      %v2406 = vunpack.c.l.b16 %v2372
      %v2407 = vunpack.c.l.b16 %v2373
      %v2408 = vunpack.c.l.b16 %v2374
      %v2409 = vunpack.c.l.b16 %v2375
      %v2410 = vunpack.c.l.b16 %v2376
      %v2411 = vunpack.c.l.b16 %v2377
      %v2412 = vunpack.c.l.b16 %v2378
      %v2413 = vunpack.c.l.b16 %v2379
      %v2414 = vunpack.c.l.b16 %v2380
      %v2415 = vunpack.c.l.b16 %v2381
      %v2416 = vunpack.c.l.b16 %v2382
      %v2417 = vunpack.c.l.b16 %v2383
      %v2418 = vunpack.c.l.b16 %v2384
      %v2419 = vunpack.c.l.b16 %v2385
      %v2420 = vunpack.c.l.b16 %v2386
      %v2421 = vunpack.c.l.b16 %v2387
      %v2422 = vpack.c.b16 %v2407, %v2406
      %v2423 = vpack.c.b16 %v2409, %v2408
      %v2424 = vpack.c.b16 %v2411, %v2410
      %v2425 = vpack.c.b16 %v2413, %v2412
      %v2426 = vpack.c.b16 %v2415, %v2414
      %v2427 = vpack.c.b16 %v2417, %v2416
      %v2428 = vpack.c.b16 %v2419, %v2418
      %v2429 = vpack.c.b16 %v2421, %v2420
      %v2431 = vsel %vm998, %v2422, 0
      %v2434 = vsel %vm998, %v2423, 0
      %v2437 = vsel %vm998, %v2424, 0
      %v2440 = vsel %vm998, %v2425, 0
      %v2443 = vsel %vm998, %v2426, 0
      %v2446 = vsel %vm998, %v2427, 0
      %v2449 = vsel %vm998, %v2428, 0
      %v2452 = vsel %vm998, %v2429, 0
      %v2455 = vsel %vm1023, %v2389, 0
      %2457 = vmatprep.subr.bf16.mxu0 0
      %2458 = vmatpush1.bf16.msra.mxu0 0
      %2459 = vmatprep.subr.bf16.mxu0 0
      %2460 = vmatpush1.bf16.msra.mxu0 0
      %2461 = vmatprep.subr.bf16.mxu0 0
      %2462 = vmatpush1.bf16.msra.mxu0 0
      %2463 = vmatprep.subr.bf16.mxu0 0
      %2464 = vmatpush1.bf16.msra.mxu0 0
      %2465 = vmatprep.subr.bf16.mxu0 0
      %2466 = vmatpush1.bf16.msra.mxu0 0
      %2467 = vmatprep.subr.bf16.mxu0 0
      %2468 = vmatpush1.bf16.msra.mxu0 0
      %2469 = vmatprep.subr.bf16.mxu0 0
      %2470 = vmatpush1.bf16.msra.mxu0 0
      %2471 = vmatprep.subr.bf16.mxu0 0
      %2472 = vmatpush1.bf16.msra.mxu0 %v2455
      %2473 = vmatprep.subr.bf16.mxu0 0
      %2474 = vmatpush2.bf16.msra.mxu0 0
      %2475 = vmatprep.subr.bf16.mxu0 0
      %2476 = vmatpush2.bf16.msra.mxu0 0
      %2477 = vmatprep.subr.bf16.mxu0 0
      %2478 = vmatpush2.bf16.msra.mxu0 0
      %2479 = vmatprep.subr.bf16.mxu0 0
      %2480 = vmatpush2.bf16.msra.mxu0 0
      %2481 = vmatprep.subr.bf16.mxu0 0
      %2482 = vmatpush2.bf16.msra.mxu0 0
      %2483 = vmatprep.subr.bf16.mxu0 0
      %2484 = vmatpush2.bf16.msra.mxu0 0
      %2485 = vmatprep.subr.bf16.mxu0 0
      %2486 = vmatpush2.bf16.msra.mxu0 0
      %2487 = vmatprep.subr.bf16.mxu0 0
      %2488 = vmatpush2.bf16.msra.mxu0 0
      %2489 = vmatprep.mubr.bf16.mxu0 0
      %2490 = vmatmul.mubr.bf16.gmra.mxu0 %v2431
      %v2491 = vpop.f32.mrf.mxu0
      %v2492 = vadd.f32 0.0, %v2491
      %v2493 = vpop.f32.mrf.mxu0
      %v2494 = vpop.f32.mrf.mxu0
      %v2495 = vadd.f32 0.0, %v2494
      %v2496 = vpop.f32.mrf.mxu0
      %2497 = vmatprep.mubr.bf16.mxu0 0
      %2498 = vmatmul.mubr.bf16.gmra.mxu0 %v2434
      %v2499 = vpop.f32.mrf.mxu0
      %v2500 = vadd.f32 0.0, %v2499
      %v2501 = vpop.f32.mrf.mxu0
      %v2502 = vpop.f32.mrf.mxu0
      %v2503 = vadd.f32 0.0, %v2502
      %v2504 = vpop.f32.mrf.mxu0
      %2505 = vmatprep.mubr.bf16.mxu0 0
      %2506 = vmatmul.mubr.bf16.gmra.mxu0 %v2437
      %v2507 = vpop.f32.mrf.mxu0
      %v2508 = vadd.f32 0.0, %v2507
      %v2509 = vpop.f32.mrf.mxu0
      %v2510 = vpop.f32.mrf.mxu0
      %v2511 = vadd.f32 0.0, %v2510
      %v2512 = vpop.f32.mrf.mxu0
      %2513 = vmatprep.mubr.bf16.mxu0 0
      %2514 = vmatmul.mubr.bf16.gmra.mxu0 %v2440
      %v2515 = vpop.f32.mrf.mxu0
      %v2516 = vadd.f32 0.0, %v2515
      %v2517 = vpop.f32.mrf.mxu0
      %v2518 = vpop.f32.mrf.mxu0
      %v2519 = vadd.f32 0.0, %v2518
      %v2520 = vpop.f32.mrf.mxu0
      %2521 = vmatprep.mubr.bf16.mxu0 0
      %2522 = vmatmul.mubr.bf16.gmra.mxu0 %v2443
      %v2523 = vpop.f32.mrf.mxu0
      %v2524 = vadd.f32 0.0, %v2523
      %v2525 = vpop.f32.mrf.mxu0
      %v2526 = vpop.f32.mrf.mxu0
      %v2527 = vadd.f32 0.0, %v2526
      %v2528 = vpop.f32.mrf.mxu0
      %2529 = vmatprep.mubr.bf16.mxu0 0
      %2530 = vmatmul.mubr.bf16.gmra.mxu0 %v2446
      %v2531 = vpop.f32.mrf.mxu0
      %v2532 = vadd.f32 0.0, %v2531
      %v2533 = vpop.f32.mrf.mxu0
      %v2534 = vpop.f32.mrf.mxu0
      %v2535 = vadd.f32 0.0, %v2534
      %v2536 = vpop.f32.mrf.mxu0
      %2537 = vmatprep.mubr.bf16.mxu0 0
      %2538 = vmatmul.mubr.bf16.gmra.mxu0 %v2449
      %v2539 = vpop.f32.mrf.mxu0
      %v2540 = vadd.f32 0.0, %v2539
      %v2541 = vpop.f32.mrf.mxu0
      %v2542 = vpop.f32.mrf.mxu0
      %v2543 = vadd.f32 0.0, %v2542
      %v2544 = vpop.f32.mrf.mxu0
      %2545 = vmatprep.mubr.bf16.mxu0 0
      %2546 = vmatmul.mubr.bf16.gmra.mxu0 %v2452
      %v2547 = vpop.f32.mrf.mxu0
      %v2548 = vadd.f32 0.0, %v2547
      %v2549 = vpop.f32.mrf.mxu0
      %v2550 = vpop.f32.mrf.mxu0
      %v2551 = vadd.f32 0.0, %v2550
      %v2552 = vpop.f32.mrf.mxu0
      %2553 = vdwg.mxu0
      %v2554 = vadd.f32 %v2355, %v2492
      %v2555 = vadd.f32 %v2356, %v2495
      %v2556 = vadd.f32 %v2357, %v2500
      %v2557 = vadd.f32 %v2358, %v2503
      %v2558 = vadd.f32 %v2359, %v2508
      %v2559 = vadd.f32 %v2360, %v2511
      %v2560 = vadd.f32 %v2361, %v2516
      %v2561 = vadd.f32 %v2362, %v2519
      %v2562 = vadd.f32 %v2363, %v2524
      %v2563 = vadd.f32 %v2364, %v2527
      %v2564 = vadd.f32 %v2365, %v2532
      %v2565 = vadd.f32 %v2366, %v2535
      %v2566 = vadd.f32 %v2367, %v2540
      %v2567 = vadd.f32 %v2368, %v2543
      %v2568 = vadd.f32 %v2369, %v2548
      %v2569 = vadd.f32 %v2370, %v2551
      %v2570 = vld [vmem:[%s2371] sm:$0xf]
      %v2571 = vld [vmem:[%s2371 + $0x4] sm:$0xf]
      %v2572 = vld [vmem:[%s2371 + $0x8] sm:$0x1]
      %v2573 = vld [vmem:[%s2371 + $0xc] sm:$0xf]
      %v2574 = vld [vmem:[%s2371 + $0x10] sm:$0xf]
      %v2575 = vld [vmem:[%s2371 + $0x14] sm:$0x1]
      %v2576 = vld [vmem:[%s2371 + $0x18] sm:$0xf]
      %v2577 = vld [vmem:[%s2371 + $0x1c] sm:$0xf]
      %v2578 = vld [vmem:[%s2371 + $0x20] sm:$0x1]
      %v2579 = vld [vmem:[%s2371 + $0x24] sm:$0xf]
      %v2580 = vld [vmem:[%s2371 + $0x28] sm:$0xf]
      %v2581 = vld [vmem:[%s2371 + $0x2c] sm:$0x1]
      %v2582 = vld [vmem:[%s2371 + $0x30] sm:$0xf]
      %v2583 = vld [vmem:[%s2371 + $0x34] sm:$0xf]
      %v2584 = vld [vmem:[%s2371 + $0x38] sm:$0x1]
      %v2585 = vld [vmem:[%s2371 + $0x3c] sm:$0xf]
      %v2586 = vld [vmem:[%s2371 + $0x40] sm:$0xf]
      %v2587 = vld [vmem:[%s2371 + $0x44] sm:$0x1]
      %v2588 = vld [vmem:[%s2371 + $0x48] sm:$0xf]
      %v2589 = vld [vmem:[%s2371 + $0x4c] sm:$0xf]
      %v2590 = vld [vmem:[%s2371 + $0x50] sm:$0x1]
      %v2591 = vld [vmem:[%s2371 + $0x54] sm:$0xf]
      %v2592 = vld [vmem:[%s2371 + $0x58] sm:$0xf]
      %v2593 = vld [vmem:[%s2371 + $0x5c] sm:$0x1]
      %v2595 = vshrl.u32 %v2570, 16
      %v2597 = vrot.slane %v2595, 4
      %v2598 = vshll.u32 %v2570, 16
      %v2600 = vrot.slane %v2598, 5
      %v2601 = vor.u32 %v2597, %v2600
      %v2602 = vrot.slane %v2601, 4
      %v2604 = vshll.u32 %v2571, 16
      %v2606 = vrot.slane %v2604, 5
      %v2607 = vsel %vm779, %v2602, %v2606
      %v2608 = vshrl.u32 %v2571, 16
      %v2610 = vrot.slane %v2608, 4
      %v2611 = vor.u32 %v2610, %v2606
      %v2612 = vrot.slane %v2611, 4
      %v2614 = vshll.u32 %v2572, 16
      %v2616 = vrot.slane %v2614, 5
      %v2617 = vsel %vm779, %v2612, %v2616
      %v2619 = vshrl.u32 %v2573, 16
      %v2621 = vrot.slane %v2619, 4
      %v2622 = vshll.u32 %v2573, 16
      %v2624 = vrot.slane %v2622, 5
      %v2625 = vor.u32 %v2621, %v2624
      %v2626 = vrot.slane %v2625, 4
      %v2628 = vshll.u32 %v2574, 16
      %v2630 = vrot.slane %v2628, 5
      %v2631 = vsel %vm779, %v2626, %v2630
      %v2632 = vshrl.u32 %v2574, 16
      %v2634 = vrot.slane %v2632, 4
      %v2635 = vor.u32 %v2634, %v2630
      %v2636 = vrot.slane %v2635, 4
      %v2638 = vshll.u32 %v2575, 16
      %v2640 = vrot.slane %v2638, 5
      %v2641 = vsel %vm779, %v2636, %v2640
      %v2643 = vshrl.u32 %v2576, 16
      %v2645 = vrot.slane %v2643, 4
      %v2646 = vshll.u32 %v2576, 16
      %v2648 = vrot.slane %v2646, 5
      %v2649 = vor.u32 %v2645, %v2648
      %v2650 = vrot.slane %v2649, 4
      %v2652 = vshll.u32 %v2577, 16
      %v2654 = vrot.slane %v2652, 5
      %v2655 = vsel %vm779, %v2650, %v2654
      %v2656 = vshrl.u32 %v2577, 16
      %v2658 = vrot.slane %v2656, 4
      %v2659 = vor.u32 %v2658, %v2654
      %v2660 = vrot.slane %v2659, 4
      %v2662 = vshll.u32 %v2578, 16
      %v2664 = vrot.slane %v2662, 5
      %v2665 = vsel %vm779, %v2660, %v2664
      %v2667 = vshrl.u32 %v2579, 16
      %v2669 = vrot.slane %v2667, 4
      %v2670 = vshll.u32 %v2579, 16
      %v2672 = vrot.slane %v2670, 5
      %v2673 = vor.u32 %v2669, %v2672
      %v2674 = vrot.slane %v2673, 4
      %v2676 = vshll.u32 %v2580, 16
      %v2678 = vrot.slane %v2676, 5
      %v2679 = vsel %vm779, %v2674, %v2678
      %v2680 = vshrl.u32 %v2580, 16
      %v2682 = vrot.slane %v2680, 4
      %v2683 = vor.u32 %v2682, %v2678
      %v2684 = vrot.slane %v2683, 4
      %v2686 = vshll.u32 %v2581, 16
      %v2688 = vrot.slane %v2686, 5
      %v2689 = vsel %vm779, %v2684, %v2688
      %v2691 = vshrl.u32 %v2582, 16
      %v2693 = vrot.slane %v2691, 4
      %v2694 = vshll.u32 %v2582, 16
      %v2696 = vrot.slane %v2694, 5
      %v2697 = vor.u32 %v2693, %v2696
      %v2698 = vrot.slane %v2697, 4
      %v2700 = vshll.u32 %v2583, 16
      %v2702 = vrot.slane %v2700, 5
      %v2703 = vsel %vm779, %v2698, %v2702
      %v2704 = vshrl.u32 %v2583, 16
      %v2706 = vrot.slane %v2704, 4
      %v2707 = vor.u32 %v2706, %v2702
      %v2708 = vrot.slane %v2707, 4
      %v2710 = vshll.u32 %v2584, 16
      %v2712 = vrot.slane %v2710, 5
      %v2713 = vsel %vm779, %v2708, %v2712
      %v2715 = vshrl.u32 %v2585, 16
      %v2717 = vrot.slane %v2715, 4
      %v2718 = vshll.u32 %v2585, 16
      %v2720 = vrot.slane %v2718, 5
      %v2721 = vor.u32 %v2717, %v2720
      %v2722 = vrot.slane %v2721, 4
      %v2724 = vshll.u32 %v2586, 16
      %v2726 = vrot.slane %v2724, 5
      %v2727 = vsel %vm779, %v2722, %v2726
      %v2728 = vshrl.u32 %v2586, 16
      %v2730 = vrot.slane %v2728, 4
      %v2731 = vor.u32 %v2730, %v2726
      %v2732 = vrot.slane %v2731, 4
      %v2734 = vshll.u32 %v2587, 16
      %v2736 = vrot.slane %v2734, 5
      %v2737 = vsel %vm779, %v2732, %v2736
      %v2739 = vshrl.u32 %v2588, 16
      %v2741 = vrot.slane %v2739, 4
      %v2742 = vshll.u32 %v2588, 16
      %v2744 = vrot.slane %v2742, 5
      %v2745 = vor.u32 %v2741, %v2744
      %v2746 = vrot.slane %v2745, 4
      %v2748 = vshll.u32 %v2589, 16
      %v2750 = vrot.slane %v2748, 5
      %v2751 = vsel %vm779, %v2746, %v2750
      %v2752 = vshrl.u32 %v2589, 16
      %v2754 = vrot.slane %v2752, 4
      %v2755 = vor.u32 %v2754, %v2750
      %v2756 = vrot.slane %v2755, 4
      %v2758 = vshll.u32 %v2590, 16
      %v2760 = vrot.slane %v2758, 5
      %v2761 = vsel %vm779, %v2756, %v2760
      %v2763 = vshrl.u32 %v2591, 16
      %v2765 = vrot.slane %v2763, 4
      %v2766 = vshll.u32 %v2591, 16
      %v2768 = vrot.slane %v2766, 5
      %v2769 = vor.u32 %v2765, %v2768
      %v2770 = vrot.slane %v2769, 4
      %v2772 = vshll.u32 %v2592, 16
      %v2774 = vrot.slane %v2772, 5
      %v2775 = vsel %vm779, %v2770, %v2774
      %v2776 = vshrl.u32 %v2592, 16
      %v2778 = vrot.slane %v2776, 4
      %v2779 = vor.u32 %v2778, %v2774
      %v2780 = vrot.slane %v2779, 4
      %v2782 = vshll.u32 %v2593, 16
      %v2784 = vrot.slane %v2782, 5
      %v2785 = vsel %vm779, %v2780, %v2784
      %s2786 = scalar_lea.vmem %s3, 14
      %v2787 = vld [vmem:[%s2786] sm:$0x3]
      %v2788 = vunpack.c.l.b16 %v2607
      %v2789 = vunpack.c.l.b16 %v2617
      %v2790 = vunpack.c.l.b16 %v2631
      %v2791 = vunpack.c.l.b16 %v2641
      %v2792 = vunpack.c.l.b16 %v2655
      %v2793 = vunpack.c.l.b16 %v2665
      %v2794 = vunpack.c.l.b16 %v2679
      %v2795 = vunpack.c.l.b16 %v2689
      %v2796 = vunpack.c.l.b16 %v2703
      %v2797 = vunpack.c.l.b16 %v2713
      %v2798 = vunpack.c.l.b16 %v2727
      %v2799 = vunpack.c.l.b16 %v2737
      %v2800 = vunpack.c.l.b16 %v2751
      %v2801 = vunpack.c.l.b16 %v2761
      %v2802 = vunpack.c.l.b16 %v2775
      %v2803 = vunpack.c.l.b16 %v2785
      %v2804 = vpack.c.b16 %v2789, %v2788
      %v2805 = vpack.c.b16 %v2791, %v2790
      %v2806 = vpack.c.b16 %v2793, %v2792
      %v2807 = vpack.c.b16 %v2795, %v2794
      %v2808 = vpack.c.b16 %v2797, %v2796
      %v2809 = vpack.c.b16 %v2799, %v2798
      %v2810 = vpack.c.b16 %v2801, %v2800
      %v2811 = vpack.c.b16 %v2803, %v2802
      %v2813 = vsel %vm998, %v2804, 0
      %v2816 = vsel %vm998, %v2805, 0
      %v2819 = vsel %vm998, %v2806, 0
      %v2822 = vsel %vm998, %v2807, 0
      %v2825 = vsel %vm998, %v2808, 0
      %v2828 = vsel %vm998, %v2809, 0
      %v2831 = vsel %vm998, %v2810, 0
      %v2834 = vsel %vm998, %v2811, 0
      %v2837 = vsel %vm1023, %v2787, 0
      %2839 = vmatprep.subr.bf16.mxu0 0
      %2840 = vmatpush1.bf16.msra.mxu0 0
      %2841 = vmatprep.subr.bf16.mxu0 0
      %2842 = vmatpush1.bf16.msra.mxu0 0
      %2843 = vmatprep.subr.bf16.mxu0 0
      %2844 = vmatpush1.bf16.msra.mxu0 0
      %2845 = vmatprep.subr.bf16.mxu0 0
      %2846 = vmatpush1.bf16.msra.mxu0 0
      %2847 = vmatprep.subr.bf16.mxu0 0
      %2848 = vmatpush1.bf16.msra.mxu0 0
      %2849 = vmatprep.subr.bf16.mxu0 0
      %2850 = vmatpush1.bf16.msra.mxu0 0
      %2851 = vmatprep.subr.bf16.mxu0 0
      %2852 = vmatpush1.bf16.msra.mxu0 0
      %2853 = vmatprep.subr.bf16.mxu0 0
      %2854 = vmatpush1.bf16.msra.mxu0 %v2837
      %2855 = vmatprep.subr.bf16.mxu0 0
      %2856 = vmatpush2.bf16.msra.mxu0 0
      %2857 = vmatprep.subr.bf16.mxu0 0
      %2858 = vmatpush2.bf16.msra.mxu0 0
      %2859 = vmatprep.subr.bf16.mxu0 0
      %2860 = vmatpush2.bf16.msra.mxu0 0
      %2861 = vmatprep.subr.bf16.mxu0 0
      %2862 = vmatpush2.bf16.msra.mxu0 0
      %2863 = vmatprep.subr.bf16.mxu0 0
      %2864 = vmatpush2.bf16.msra.mxu0 0
      %2865 = vmatprep.subr.bf16.mxu0 0
      %2866 = vmatpush2.bf16.msra.mxu0 0
      %2867 = vmatprep.subr.bf16.mxu0 0
      %2868 = vmatpush2.bf16.msra.mxu0 0
      %2869 = vmatprep.subr.bf16.mxu0 0
      %2870 = vmatpush2.bf16.msra.mxu0 0
      %2871 = vmatprep.mubr.bf16.mxu0 0
      %2872 = vmatmul.mubr.bf16.gmra.mxu0 %v2813
      %v2873 = vpop.f32.mrf.mxu0
      %v2874 = vadd.f32 0.0, %v2873
      %v2875 = vpop.f32.mrf.mxu0
      %v2876 = vpop.f32.mrf.mxu0
      %v2877 = vadd.f32 0.0, %v2876
      %v2878 = vpop.f32.mrf.mxu0
      %2879 = vmatprep.mubr.bf16.mxu0 0
      %2880 = vmatmul.mubr.bf16.gmra.mxu0 %v2816
      %v2881 = vpop.f32.mrf.mxu0
      %v2882 = vadd.f32 0.0, %v2881
      %v2883 = vpop.f32.mrf.mxu0
      %v2884 = vpop.f32.mrf.mxu0
      %v2885 = vadd.f32 0.0, %v2884
      %v2886 = vpop.f32.mrf.mxu0
      %2887 = vmatprep.mubr.bf16.mxu0 0
      %2888 = vmatmul.mubr.bf16.gmra.mxu0 %v2819
      %v2889 = vpop.f32.mrf.mxu0
      %v2890 = vadd.f32 0.0, %v2889
      %v2891 = vpop.f32.mrf.mxu0
      %v2892 = vpop.f32.mrf.mxu0
      %v2893 = vadd.f32 0.0, %v2892
      %v2894 = vpop.f32.mrf.mxu0
      %2895 = vmatprep.mubr.bf16.mxu0 0
      %2896 = vmatmul.mubr.bf16.gmra.mxu0 %v2822
      %v2897 = vpop.f32.mrf.mxu0
      %v2898 = vadd.f32 0.0, %v2897
      %v2899 = vpop.f32.mrf.mxu0
      %v2900 = vpop.f32.mrf.mxu0
      %v2901 = vadd.f32 0.0, %v2900
      %v2902 = vpop.f32.mrf.mxu0
      %2903 = vmatprep.mubr.bf16.mxu0 0
      %2904 = vmatmul.mubr.bf16.gmra.mxu0 %v2825
      %v2905 = vpop.f32.mrf.mxu0
      %v2906 = vadd.f32 0.0, %v2905
      %v2907 = vpop.f32.mrf.mxu0
      %v2908 = vpop.f32.mrf.mxu0
      %v2909 = vadd.f32 0.0, %v2908
      %v2910 = vpop.f32.mrf.mxu0
      %2911 = vmatprep.mubr.bf16.mxu0 0
      %2912 = vmatmul.mubr.bf16.gmra.mxu0 %v2828
      %v2913 = vpop.f32.mrf.mxu0
      %v2914 = vadd.f32 0.0, %v2913
      %v2915 = vpop.f32.mrf.mxu0
      %v2916 = vpop.f32.mrf.mxu0
      %v2917 = vadd.f32 0.0, %v2916
      %v2918 = vpop.f32.mrf.mxu0
      %2919 = vmatprep.mubr.bf16.mxu0 0
      %2920 = vmatmul.mubr.bf16.gmra.mxu0 %v2831
      %v2921 = vpop.f32.mrf.mxu0
      %v2922 = vadd.f32 0.0, %v2921
      %v2923 = vpop.f32.mrf.mxu0
      %v2924 = vpop.f32.mrf.mxu0
      %v2925 = vadd.f32 0.0, %v2924
      %v2926 = vpop.f32.mrf.mxu0
      %2927 = vmatprep.mubr.bf16.mxu0 0
      %2928 = vmatmul.mubr.bf16.gmra.mxu0 %v2834
      %v2929 = vpop.f32.mrf.mxu0
      %v2930 = vadd.f32 0.0, %v2929
      %v2931 = vpop.f32.mrf.mxu0
      %v2932 = vpop.f32.mrf.mxu0
      %v2933 = vadd.f32 0.0, %v2932
      %v2934 = vpop.f32.mrf.mxu0
      %2935 = vdwg.mxu0
      %v2936 = vadd.f32 %v2554, %v2874
      %v2937 = vadd.f32 %v2555, %v2877
      %v2938 = vadd.f32 %v2556, %v2882
      %v2939 = vadd.f32 %v2557, %v2885
      %v2940 = vadd.f32 %v2558, %v2890
      %v2941 = vadd.f32 %v2559, %v2893
      %v2942 = vadd.f32 %v2560, %v2898
      %v2943 = vadd.f32 %v2561, %v2901
      %v2944 = vadd.f32 %v2562, %v2906
      %v2945 = vadd.f32 %v2563, %v2909
      %v2946 = vadd.f32 %v2564, %v2914
      %v2947 = vadd.f32 %v2565, %v2917
      %v2948 = vadd.f32 %v2566, %v2922
      %v2949 = vadd.f32 %v2567, %v2925
      %v2950 = vadd.f32 %v2568, %v2930
      %v2951 = vadd.f32 %v2569, %v2933
      %v2952 = vld [vmem:[%s2371] sm:$0xe]
      %v2953 = vld [vmem:[%s2371 + $0xc] sm:$0xe]
      %v2954 = vld [vmem:[%s2371 + $0x18] sm:$0xe]
      %v2955 = vld [vmem:[%s2371 + $0x24] sm:$0xe]
      %v2956 = vld [vmem:[%s2371 + $0x30] sm:$0xe]
      %v2957 = vld [vmem:[%s2371 + $0x3c] sm:$0xe]
      %v2958 = vld [vmem:[%s2371 + $0x48] sm:$0xe]
      %v2959 = vld [vmem:[%s2371 + $0x54] sm:$0xe]
      %v2984 = vrot.slane %v2952, 5
      %v2985 = vrot.slane %v2984, 4
      %v2986 = vrot.slane %v2571, 5
      %v2987 = vsel %vm1314, %v2985, %v2986
      %v2988 = vrot.slane %v2986, 4
      %v2989 = vrot.slane %v2572, 5
      %v2990 = vsel %vm1314, %v2988, %v2989
      %v2991 = vrot.slane %v2953, 5
      %v2992 = vrot.slane %v2991, 4
      %v2993 = vrot.slane %v2574, 5
      %v2994 = vsel %vm1314, %v2992, %v2993
      %v2995 = vrot.slane %v2993, 4
      %v2996 = vrot.slane %v2575, 5
      %v2997 = vsel %vm1314, %v2995, %v2996
      %v2998 = vrot.slane %v2954, 5
      %v2999 = vrot.slane %v2998, 4
      %v3000 = vrot.slane %v2577, 5
      %v3001 = vsel %vm1314, %v2999, %v3000
      %v3002 = vrot.slane %v3000, 4
      %v3003 = vrot.slane %v2578, 5
      %v3004 = vsel %vm1314, %v3002, %v3003
      %v3005 = vrot.slane %v2955, 5
      %v3006 = vrot.slane %v3005, 4
      %v3007 = vrot.slane %v2580, 5
      %v3008 = vsel %vm1314, %v3006, %v3007
      %v3009 = vrot.slane %v3007, 4
      %v3010 = vrot.slane %v2581, 5
      %v3011 = vsel %vm1314, %v3009, %v3010
      %v3012 = vrot.slane %v2956, 5
      %v3013 = vrot.slane %v3012, 4
      %v3014 = vrot.slane %v2583, 5
      %v3015 = vsel %vm1314, %v3013, %v3014
      %v3016 = vrot.slane %v3014, 4
      %v3017 = vrot.slane %v2584, 5
      %v3018 = vsel %vm1314, %v3016, %v3017
      %v3019 = vrot.slane %v2957, 5
      %v3020 = vrot.slane %v3019, 4
      %v3021 = vrot.slane %v2586, 5
      %v3022 = vsel %vm1314, %v3020, %v3021
      %v3023 = vrot.slane %v3021, 4
      %v3024 = vrot.slane %v2587, 5
      %v3025 = vsel %vm1314, %v3023, %v3024
      %v3026 = vrot.slane %v2958, 5
      %v3027 = vrot.slane %v3026, 4
      %v3028 = vrot.slane %v2589, 5
      %v3029 = vsel %vm1314, %v3027, %v3028
      %v3030 = vrot.slane %v3028, 4
      %v3031 = vrot.slane %v2590, 5
      %v3032 = vsel %vm1314, %v3030, %v3031
      %v3033 = vrot.slane %v2959, 5
      %v3034 = vrot.slane %v3033, 4
      %v3035 = vrot.slane %v2592, 5
      %v3036 = vsel %vm1314, %v3034, %v3035
      %v3037 = vrot.slane %v3035, 4
      %v3038 = vrot.slane %v2593, 5
      %v3039 = vsel %vm1314, %v3037, %v3038
      %s3040 = scalar_lea.vmem %s3, 16
      %v3041 = vld [vmem:[%s3040] sm:$0x3]
      %v3042 = vunpack.c.l.b16 %v2987
      %v3043 = vunpack.c.l.b16 %v2990
      %v3044 = vunpack.c.l.b16 %v2994
      %v3045 = vunpack.c.l.b16 %v2997
      %v3046 = vunpack.c.l.b16 %v3001
      %v3047 = vunpack.c.l.b16 %v3004
      %v3048 = vunpack.c.l.b16 %v3008
      %v3049 = vunpack.c.l.b16 %v3011
      %v3050 = vunpack.c.l.b16 %v3015
      %v3051 = vunpack.c.l.b16 %v3018
      %v3052 = vunpack.c.l.b16 %v3022
      %v3053 = vunpack.c.l.b16 %v3025
      %v3054 = vunpack.c.l.b16 %v3029
      %v3055 = vunpack.c.l.b16 %v3032
      %v3056 = vunpack.c.l.b16 %v3036
      %v3057 = vunpack.c.l.b16 %v3039
      %v3058 = vpack.c.b16 %v3043, %v3042
      %v3059 = vpack.c.b16 %v3045, %v3044
      %v3060 = vpack.c.b16 %v3047, %v3046
      %v3061 = vpack.c.b16 %v3049, %v3048
      %v3062 = vpack.c.b16 %v3051, %v3050
      %v3063 = vpack.c.b16 %v3053, %v3052
      %v3064 = vpack.c.b16 %v3055, %v3054
      %v3065 = vpack.c.b16 %v3057, %v3056
      %v3067 = vsel %vm998, %v3058, 0
      %v3070 = vsel %vm998, %v3059, 0
      %v3073 = vsel %vm998, %v3060, 0
      %v3076 = vsel %vm998, %v3061, 0
      %v3079 = vsel %vm998, %v3062, 0
      %v3082 = vsel %vm998, %v3063, 0
      %v3085 = vsel %vm998, %v3064, 0
      %v3088 = vsel %vm998, %v3065, 0
      %v3091 = vsel %vm1023, %v3041, 0
      %3093 = vmatprep.subr.bf16.mxu0 0
      %3094 = vmatpush1.bf16.msra.mxu0 0
      %3095 = vmatprep.subr.bf16.mxu0 0
      %3096 = vmatpush1.bf16.msra.mxu0 0
      %3097 = vmatprep.subr.bf16.mxu0 0
      %3098 = vmatpush1.bf16.msra.mxu0 0
      %3099 = vmatprep.subr.bf16.mxu0 0
      %3100 = vmatpush1.bf16.msra.mxu0 0
      %3101 = vmatprep.subr.bf16.mxu0 0
      %3102 = vmatpush1.bf16.msra.mxu0 0
      %3103 = vmatprep.subr.bf16.mxu0 0
      %3104 = vmatpush1.bf16.msra.mxu0 0
      %3105 = vmatprep.subr.bf16.mxu0 0
      %3106 = vmatpush1.bf16.msra.mxu0 0
      %3107 = vmatprep.subr.bf16.mxu0 0
      %3108 = vmatpush1.bf16.msra.mxu0 %v3091
      %3109 = vmatprep.subr.bf16.mxu0 0
      %3110 = vmatpush2.bf16.msra.mxu0 0
      %3111 = vmatprep.subr.bf16.mxu0 0
      %3112 = vmatpush2.bf16.msra.mxu0 0
      %3113 = vmatprep.subr.bf16.mxu0 0
      %3114 = vmatpush2.bf16.msra.mxu0 0
      %3115 = vmatprep.subr.bf16.mxu0 0
      %3116 = vmatpush2.bf16.msra.mxu0 0
      %3117 = vmatprep.subr.bf16.mxu0 0
      %3118 = vmatpush2.bf16.msra.mxu0 0
      %3119 = vmatprep.subr.bf16.mxu0 0
      %3120 = vmatpush2.bf16.msra.mxu0 0
      %3121 = vmatprep.subr.bf16.mxu0 0
      %3122 = vmatpush2.bf16.msra.mxu0 0
      %3123 = vmatprep.subr.bf16.mxu0 0
      %3124 = vmatpush2.bf16.msra.mxu0 0
      %3125 = vmatprep.mubr.bf16.mxu0 0
      %3126 = vmatmul.mubr.bf16.gmra.mxu0 %v3067
      %v3127 = vpop.f32.mrf.mxu0
      %v3128 = vadd.f32 0.0, %v3127
      %v3129 = vpop.f32.mrf.mxu0
      %v3130 = vpop.f32.mrf.mxu0
      %v3131 = vadd.f32 0.0, %v3130
      %v3132 = vpop.f32.mrf.mxu0
      %3133 = vmatprep.mubr.bf16.mxu0 0
      %3134 = vmatmul.mubr.bf16.gmra.mxu0 %v3070
      %v3135 = vpop.f32.mrf.mxu0
      %v3136 = vadd.f32 0.0, %v3135
      %v3137 = vpop.f32.mrf.mxu0
      %v3138 = vpop.f32.mrf.mxu0
      %v3139 = vadd.f32 0.0, %v3138
      %v3140 = vpop.f32.mrf.mxu0
      %3141 = vmatprep.mubr.bf16.mxu0 0
      %3142 = vmatmul.mubr.bf16.gmra.mxu0 %v3073
      %v3143 = vpop.f32.mrf.mxu0
      %v3144 = vadd.f32 0.0, %v3143
      %v3145 = vpop.f32.mrf.mxu0
      %v3146 = vpop.f32.mrf.mxu0
      %v3147 = vadd.f32 0.0, %v3146
      %v3148 = vpop.f32.mrf.mxu0
      %3149 = vmatprep.mubr.bf16.mxu0 0
      %3150 = vmatmul.mubr.bf16.gmra.mxu0 %v3076
      %v3151 = vpop.f32.mrf.mxu0
      %v3152 = vadd.f32 0.0, %v3151
      %v3153 = vpop.f32.mrf.mxu0
      %v3154 = vpop.f32.mrf.mxu0
      %v3155 = vadd.f32 0.0, %v3154
      %v3156 = vpop.f32.mrf.mxu0
      %3157 = vmatprep.mubr.bf16.mxu0 0
      %3158 = vmatmul.mubr.bf16.gmra.mxu0 %v3079
      %v3159 = vpop.f32.mrf.mxu0
      %v3160 = vadd.f32 0.0, %v3159
      %v3161 = vpop.f32.mrf.mxu0
      %v3162 = vpop.f32.mrf.mxu0
      %v3163 = vadd.f32 0.0, %v3162
      %v3164 = vpop.f32.mrf.mxu0
      %3165 = vmatprep.mubr.bf16.mxu0 0
      %3166 = vmatmul.mubr.bf16.gmra.mxu0 %v3082
      %v3167 = vpop.f32.mrf.mxu0
      %v3168 = vadd.f32 0.0, %v3167
      %v3169 = vpop.f32.mrf.mxu0
      %v3170 = vpop.f32.mrf.mxu0
      %v3171 = vadd.f32 0.0, %v3170
      %v3172 = vpop.f32.mrf.mxu0
      %3173 = vmatprep.mubr.bf16.mxu0 0
      %3174 = vmatmul.mubr.bf16.gmra.mxu0 %v3085
      %v3175 = vpop.f32.mrf.mxu0
      %v3176 = vadd.f32 0.0, %v3175
      %v3177 = vpop.f32.mrf.mxu0
      %v3178 = vpop.f32.mrf.mxu0
      %v3179 = vadd.f32 0.0, %v3178
      %v3180 = vpop.f32.mrf.mxu0
      %3181 = vmatprep.mubr.bf16.mxu0 0
      %3182 = vmatmul.mubr.bf16.gmra.mxu0 %v3088
      %v3183 = vpop.f32.mrf.mxu0
      %v3184 = vadd.f32 0.0, %v3183
      %v3185 = vpop.f32.mrf.mxu0
      %v3186 = vpop.f32.mrf.mxu0
      %v3187 = vadd.f32 0.0, %v3186
      %v3188 = vpop.f32.mrf.mxu0
      %3189 = vdwg.mxu0
      %v3190 = vadd.f32 %v2936, %v3128
      %v3191 = vadd.f32 %v2937, %v3131
      %v3192 = vadd.f32 %v2938, %v3136
      %v3193 = vadd.f32 %v2939, %v3139
      %v3194 = vadd.f32 %v2940, %v3144
      %v3195 = vadd.f32 %v2941, %v3147
      %v3196 = vadd.f32 %v2942, %v3152
      %v3197 = vadd.f32 %v2943, %v3155
      %v3198 = vadd.f32 %v2944, %v3160
      %v3199 = vadd.f32 %v2945, %v3163
      %v3200 = vadd.f32 %v2946, %v3168
      %v3201 = vadd.f32 %v2947, %v3171
      %v3202 = vadd.f32 %v2948, %v3176
      %v3203 = vadd.f32 %v2949, %v3179
      %v3204 = vadd.f32 %v2950, %v3184
      %v3205 = vadd.f32 %v2951, %v3187
      %v3206 = vadd.f32 %v3190, %v3191
      %v3207 = vadd.f32 %v3206, %v3192
      %v3208 = vadd.f32 %v3207, %v3193
      %v3209 = vadd.f32 %v3208, %v3194
      %v3210 = vadd.f32 %v3209, %v3195
      %v3211 = vadd.f32 %v3210, %v3196
      %v3212 = vadd.f32 %v3211, %v3197
      %v3213 = vadd.f32 %v3212, %v3198
      %v3214 = vadd.f32 %v3213, %v3199
      %v3215 = vadd.f32 %v3214, %v3200
      %v3216 = vadd.f32 %v3215, %v3201
      %v3217 = vadd.f32 %v3216, %v3202
      %v3218 = vadd.f32 %v3217, %v3203
      %v3219 = vadd.f32 %v3218, %v3204
      %v3220 = vadd.f32 %v3219, %v3205
      %v3221 = vrot.slane %v3220, 4
      %v3222 = vadd.f32 %v3220, %v3221
      %v3223 = vrot.slane %v3222, 2
      %v3224 = vadd.f32 %v3222, %v3223
      %v3225 = vrot.slane %v3224, 1
      %v3226 = vadd.f32 %v3224, %v3225
      %v3227 = vmul.f32 %v3190, %v3190
      %v3228 = vmul.f32 %v3191, %v3191
      %v3229 = vmul.f32 %v3192, %v3192
      %v3230 = vmul.f32 %v3193, %v3193
      %v3231 = vmul.f32 %v3194, %v3194
      %v3232 = vmul.f32 %v3195, %v3195
      %v3233 = vmul.f32 %v3196, %v3196
      %v3234 = vmul.f32 %v3197, %v3197
      %v3235 = vmul.f32 %v3198, %v3198
      %v3236 = vmul.f32 %v3199, %v3199
      %v3237 = vmul.f32 %v3200, %v3200
      %v3238 = vmul.f32 %v3201, %v3201
      %v3239 = vmul.f32 %v3202, %v3202
      %v3240 = vmul.f32 %v3203, %v3203
      %v3241 = vmul.f32 %v3204, %v3204
      %v3242 = vmul.f32 %v3205, %v3205
      %v3243 = vadd.f32 %v3227, %v3228
      %v3244 = vadd.f32 %v3243, %v3229
      %v3245 = vadd.f32 %v3244, %v3230
      %v3246 = vadd.f32 %v3245, %v3231
      %v3247 = vadd.f32 %v3246, %v3232
      %v3248 = vadd.f32 %v3247, %v3233
      %v3249 = vadd.f32 %v3248, %v3234
      %v3250 = vadd.f32 %v3249, %v3235
      %v3251 = vadd.f32 %v3250, %v3236
      %v3252 = vadd.f32 %v3251, %v3237
      %v3253 = vadd.f32 %v3252, %v3238
      %v3254 = vadd.f32 %v3253, %v3239
      %v3255 = vadd.f32 %v3254, %v3240
      %v3256 = vadd.f32 %v3255, %v3241
      %v3257 = vadd.f32 %v3256, %v3242
      %v3258 = vrot.slane %v3257, 4
      %v3259 = vadd.f32 %v3257, %v3258
      %v3260 = vrot.slane %v3259, 2
      %v3261 = vadd.f32 %v3259, %v3260
      %v3262 = vrot.slane %v3261, 1
      %v3263 = vadd.f32 %v3261, %v3262
      %p3264 = scmp.eq.s32.totalorder %s20, 0
      // Predicated region
      $region37: #{conv3x3_bn_relu.2} parent=35 // pred_check
        %p3265 = pneg %p3264
      $region38: #{conv3x3_bn_relu.2} parent=35 // pred_check_branch
        %3267 = sbr.rel (%p3265) target = $region40
      $region39: #{conv3x3_bn_relu.2} parent=35 // pred_region
        %3268 = vst [vmem:[%s350] sm:$0x3] 0.0
      $region40: #{conv3x3_bn_relu.2} parent=35 // pred_fallthru
        _
      %v3269 = vld [vmem:[%s350] sm:$0x1]
      %v3270 = vadd.f32 %v3269, %v3226
      %3271 = vst [vmem:[%s350] sm:$0x1] %v3270
      %v3272 = vld [vmem:[%s350 + $0x1] sm:$0x1]
      %v3273 = vadd.f32 %v3272, %v3263
      %3274 = vst [vmem:[%s350 + $0x1] sm:$0x1] %v3273
      %p3275 = scmp.lt.s32.totalorder %s19, 1
      %s3276 = scalar_select %p3275, %s19, 1
      %s3277 = smul.addr %s3276, 2
      %s3278 = scalar_lea.vmem %s4, %s3277
      // Predicated region
      $region41: #{conv3x3_bn_relu.2} parent=35 // pred_check
        %p3279 = pneg %p166
      $region42: #{conv3x3_bn_relu.2} parent=35 // pred_check_branch
        %3281 = sbr.rel (%p3279) target = $region44
      $region43: #{conv3x3_bn_relu.2} parent=35 // pred_region
        _
      $region44: #{conv3x3_bn_relu.2} parent=35 // pred_fallthru
        _
    $region36: #{conv3x3_bn_relu.2} parent=5 // pred_fallthru
      _
    %p3282 = scmp.le.s32.totalorder 2, %s10
    // Predicated region
    $region45: #{conv3x3_bn_relu.2} parent=5 // pred_check
      %p3283 = pneg %p3282
    $region46: #{conv3x3_bn_relu.2} parent=5 // pred_check_branch
      %3285 = sbr.rel (%p3283) target = $region48
    $region47: #{conv3x3_bn_relu.2} parent=5 // pred_region
      %s3286 = ssub.s32 %s10, 2
      // Predicated region
      $region49: #{conv3x3_bn_relu.2} parent=47 // pred_check
        %p3287 = pneg %p172
      $region50: #{conv3x3_bn_relu.2} parent=47 // pred_check_branch
        %3289 = sbr.rel (%p3287) target = $region52
      $region51: #{conv3x3_bn_relu.2} parent=47 // pred_region
        %p3290 = scmp.lt.s32.totalorder %s21, 1
        %s3291 = scalar_select %p3290, %s21, 1
        %s3292 = smul.addr %s3291, 2
        %s3293 = scalar_lea.vmem %s4, %s3292
      $region52: #{conv3x3_bn_relu.2} parent=47 // pred_fallthru
        _
    $region48: #{conv3x3_bn_relu.2} parent=5 // pred_fallthru
      _
  $region6: #{conv3x3_bn_relu.2} parent=0 // loop_footer
    %s14 = sadd.s32 1, %s10
  $region7: #{conv3x3_bn_relu.2} parent=0 // loop_footer_branch
    %9 = sbr.rel target = $region3
  $region8: #{conv3x3_bn_relu.2} parent=0 // loop_exit
    _

</llo_original>
